<compile_context>
chip_gen: v5e
topology: v5e:2x2
jax: 0.10.0
libtpu: 0.0.40
codegen_flags: <defaults>
</compile_context>

<pallas_src>
import functools

import jax
import jax.numpy as jnp
from jax import lax
from jax.experimental import pallas as pl
from jax.experimental.pallas import tpu as pltpu


TN = 512  # Dh tile width; w1 is pre-tiled at this granularity in prepare_params.


def _default_num_splits():
    """2-way Dh split across v7x's two TensorCores; 1 on single-TC chips."""
    try:
        kind = jax.devices()[0].device_kind.lower()
    except Exception:
        return 1
    return 2 if "v7" in kind else 1


# ----------------------------- Pallas kernel ----------------------------------

def _projection_head_kernel(y_ref, w1_ref, g_ref, beta_ref, w2_ref, z_ref, *,
                            tn, tiles_per_split):
    """One Dh tile of: Linear(2048->1024, no bias) -> BN1d(train) -> ReLU ->
    Linear(1024->256, partial accumulation; bias added in the wrapper).

    y_ref   : (B, 2048)   bf16  (resident across the grid)
    w1_ref  : (2048, tn)  bf16  (pre-tiled, contiguous Dh tile; leading dim squeezed)
    g_ref   : (1, 1024)   f32   BN gamma, fully resident (sliced in-kernel)
    beta_ref: (1, 1024)   f32   BN beta, fully resident (sliced in-kernel)
    w2_ref  : (tn, 256)   bf16  (matching Dh row-tile of the second linear)
    z_ref   : (B, 256)    f32   per-split partial output; accumulated in place
    """
    c = pl.program_id(0)              # split (TensorCore) index
    i = pl.program_id(1)              # Dh-tile index within this split
    t = c * tiles_per_split + i       # global Dh-tile index

    @pl.when(i == 0)
    def _():
        z_ref[...] = jnp.zeros_like(z_ref)

    # First linear, f32 accumulation on the MXU.
    h = jnp.dot(y_ref[...], w1_ref[...], preferred_element_type=jnp.float32)  # (B, tn)

    # BatchNorm1d (training mode, biased variance, eps=1e-5); per-column stats over
    # the full batch (the whole batch lives in this block, so stats are exact).
    inv_b = 1.0 / y_ref.shape[0]
    mean = jnp.sum(h, axis=0, keepdims=True) * inv_b
    mean_sq = jnp.sum(h * h, axis=0, keepdims=True) * inv_b
    var = jnp.maximum(mean_sq - mean * mean, 0.0)   # clamp f32 cancellation

    start = pl.multiple_of(t * tn, tn)
    g = g_ref[:, pl.ds(start, tn)]
    beta = beta_ref[:, pl.ds(start, tn)]
    scale = g * lax.rsqrt(var + 1e-5)               # fused gamma * rsqrt
    shift = beta - mean * scale
    a = jnp.maximum(h * scale + shift, 0.0)         # BN affine + ReLU, f32

    # Second linear: accumulate this Dh tile's contribution into the output block.
    z_ref[...] += jnp.dot(a.astype(w2_ref.dtype), w2_ref[...],
                          preferred_element_type=jnp.float32)


# ------------------------------- wrappers --------------------------------------

def projection_head_pallas(y, w1_tiled, gamma, beta, w2, b2, *, num_splits=None):
    B, Din = y.shape
    n_tiles, Din2, tn = w1_tiled.shape
    Dh, Dout = w2.shape
    assert Din == Din2 and n_tiles * tn == Dh and gamma.shape == (1, Dh)

    if num_splits is None:
        num_splits = _default_num_splits()
    if num_splits < 1 or n_tiles % num_splits != 0:
        num_splits = 1
    tiles_per_split = n_tiles // num_splits

    bytes_accessed = (
        y.size * y.dtype.itemsize
        + w1_tiled.size * w1_tiled.dtype.itemsize
        + w2.size * w2.dtype.itemsize
        + (gamma.size + beta.size) * 4
        + num_splits * B * Dout * 4
    )
    cost = pl.CostEstimate(
        flops=2 * B * Din * Dh + 2 * B * Dh * Dout,
        transcendentals=Dh,                # one rsqrt per hidden column
        bytes_accessed=bytes_accessed,
    )

    kernel = functools.partial(_projection_head_kernel,
                               tn=tn, tiles_per_split=tiles_per_split)

    partials = pl.pallas_call(
        kernel,
        out_shape=jax.ShapeDtypeStruct((num_splits, B, Dout), jnp.float32),
        grid=(num_splits, tiles_per_split),
        in_specs=[
            pl.BlockSpec((B, Din), lambda c, i: (0, 0)),       # y: resident
            pl.BlockSpec((None, Din, tn),                      # w1: contiguous tile
                         lambda c, i: (c * tiles_per_split + i, 0, 0)),
            pl.BlockSpec((1, Dh), lambda c, i: (0, 0)),        # gamma: resident
            pl.BlockSpec((1, Dh), lambda c, i: (0, 0)),        # beta: resident
            pl.BlockSpec((tn, Dout),                           # w2 row-tile (contiguous)
                         lambda c, i: (c * tiles_per_split + i, 0)),
        ],
        out_specs=pl.BlockSpec((None, B, Dout), lambda c, i: (c, 0, 0)),
        compiler_params=pltpu.CompilerParams(
            # split axis is independent ("parallel", shards across v7x TCs);
            # Dh axis is a reduction into the per-split accumulator -> "arbitrary".
            dimension_semantics=("parallel", "arbitrary"),
        ),
        cost_estimate=cost,
    )(y, w1_tiled, gamma, beta, w2)

    # Sum the per-split partials and add the second-linear bias in XLA glue.
    return jnp.sum(partials, axis=0) + b2


def im2col_3x3_s2_p1(x, Hc, Wc):
    # x: (B, Cin, H, W) -> patches (B*Hc*Wc, Cin*9), column order (Cin, kh, kw)
    B, Cin, H, W = x.shape
    xp = jnp.pad(x, ((0, 0), (0, 0), (1, 1), (1, 1)))
    cols = []
    for kh in range(3):
        for kw in range(3):
            cols.append(xp[:, :, kh:kh + 2 * Hc:2, kw:kw + 2 * Wc:2])  # (B,Cin,Hc,Wc)
    p = jnp.stack(cols, axis=2)                      # (B, Cin, 9, Hc, Wc)
    p = jnp.transpose(p, (0, 3, 4, 1, 2))            # (B, Hc, Wc, Cin, 9)
    return p.reshape(B * Hc * Wc, Cin * 9)


def backbone_flatten_xla(x, conv_w_mat, conv_b):
    """Synthetic backbone (3x3 s2 p1 conv + ReLU) + flatten(start_dim=1) in plain XLA.

    ~0.3 MFLOP / ~20 KB: a dedicated Pallas launch here is pure overhead; XLA fuses
    the im2col, matmul, ReLU and relayout.
    """
    B, Cin, H, W = x.shape
    Hc, Wc = H // 2, W // 2
    Cout = conv_w_mat.shape[1]
    patches = im2col_3x3_s2_p1(x, Hc, Wc)                          # (B*Hc*Wc, Cin*9)
    feat = jnp.maximum(patches @ conv_w_mat + conv_b, 0.0)         # (B*Hc*Wc, Cout)
    # flatten(start_dim=1) of the NCHW feature map -> (B, Cout*Hc*Wc) = (B, 2048)
    return feat.reshape(B, Hc, Wc, Cout).transpose(0, 3, 1, 2).reshape(B, Cout * Hc * Wc)


def byol_forward(x, params):
    """Equivalent of BYOL.forward: z = projection_head(backbone(x).flatten(1))."""
    y = backbone_flatten_xla(x, params["conv_w_mat"], params["conv_b"])
    y = y.astype(jnp.bfloat16)            # bf16 activations into the MXU, f32 accum
    z = projection_head_pallas(
        y,
        params["proj_w1_tiled"],
        params["bn_gamma"],
        params["bn_beta"],
        params["proj_w2"],
        params["proj_b2"],
    )
    return z                              # z.detach() is a forward no-op


def init_params(key, Cin=4, Cout=32):
    ks = jax.random.split(key, 7)
    s = 0.05
    return {
        # backbone conv: (Cout, Cin, 3, 3) + bias
        "conv_w": s * jax.random.normal(ks[0], (Cout, Cin, 3, 3), jnp.float32),
        "conv_b": s * jax.random.normal(ks[1], (Cout,), jnp.float32),
        # projection head: Linear(2048->1024, bias=False) because BN follows
        "proj_w1": s * jax.random.normal(ks[2], (2048, 1024), jnp.float32),
        # BatchNorm1d(1024) affine params
        "bn_gamma": 1.0 + s * jax.random.normal(ks[3], (1, 1024), jnp.float32),
        "bn_beta": s * jax.random.normal(ks[4], (1, 1024), jnp.float32),
        # Linear(1024->256) with bias
        "proj_w2": s * jax.random.normal(ks[5], (1024, 256), jnp.float32),
        "proj_b2": s * jax.random.normal(ks[6], (1, 256), jnp.float32),
    }


def prepare_params(params, *, tn=TN):
    """One-time device-ready param prep (hoisted out of the per-forward path):
    conv weight reshaped/transposed for im2col; w1 pre-tiled to (Dh//tn, Din, tn)
    so each streamed tile is one contiguous HBM burst; matmul weights cast to bf16."""
    Cout, Cin = params["conv_w"].shape[:2]
    Din, Dh = params["proj_w1"].shape
    assert Dh % tn == 0
    n_tiles = Dh // tn
    w1_tiled = (params["proj_w1"]
                .reshape(Din, n_tiles, tn)
                .transpose(1, 0, 2)                                # (n_tiles, Din, tn)
                .astype(jnp.bfloat16))
    return {
        "conv_w_mat": params["conv_w"].reshape(Cout, Cin * 9).T,   # (Cin*9, Cout) f32
        "conv_b": params["conv_b"],                                # (Cout,) f32
        "proj_w1_tiled": w1_tiled,                                 # (n_tiles, 2048, tn) bf16
        "bn_gamma": params["bn_gamma"],                            # (1, 1024) f32
        "bn_beta": params["bn_beta"],                              # (1, 1024) f32
        "proj_w2": params["proj_w2"].astype(jnp.bfloat16),         # (1024, 256) bf16
        "proj_b2": params["proj_b2"],                              # (1, 256) f32
    }


if __name__ == "__main__":
    key = jax.random.PRNGKey(0)
    kx, kp = jax.random.split(key)

    # x in NCHW, small shapes: B=2, Cin=4, H=W=16 -> backbone features (2, 2048)
    x = jax.random.normal(kx, (2, 4, 16, 16), jnp.float32)
    params = prepare_params(init_params(kp))

    fwd = jax.jit(byol_forward)
    z = fwd(x, params)
    z = jax.block_until_ready(z)
    assert z.shape == (2, 256) and z.dtype == jnp.float32
    assert bool(jnp.all(jnp.isfinite(z)))
    print("KERNEL_OK")
</pallas_src>

<mosaic_0001>
module attributes {stable_mosaic.version = 11 : i64} {
  func.func @_projection_head_kernel(%arg0: i32, %arg1: i32, %arg2: memref<2x2048xbf16, #tpu.memory_space<vmem>>, %arg3: memref<1x2048x512xbf16, #tpu.memory_space<vmem>>, %arg4: memref<1x1024xf32, #tpu.memory_space<vmem>>, %arg5: memref<1x1024xf32, #tpu.memory_space<vmem>>, %arg6: memref<512x256xbf16, #tpu.memory_space<vmem>>, %arg7: memref<1x2x256xf32, #tpu.memory_space<vmem>>) attributes {dimension_semantics = [#tpu.dimension_semantics<parallel>, #tpu.dimension_semantics<arbitrary>], iteration_bounds = array<i64: 1, 2>, scalar_prefetch = 0 : i64, scratch_operands = 0 : i64, tpu.core_type = #tpu.core_type<tc>, window_params = [{pipeline_mode = #tpu.pipeline_mode<synchronous>, transform_indices = @transform_0, window_bounds = array<i64: 2, 2048>}, {transform_indices = @transform_1, window_bounds = array<i64: 1, 2048, 512>}, {pipeline_mode = #tpu.pipeline_mode<synchronous>, transform_indices = @transform_2, window_bounds = array<i64: 1, 1024>}, {pipeline_mode = #tpu.pipeline_mode<synchronous>, transform_indices = @transform_3, window_bounds = array<i64: 1, 1024>}, {transform_indices = @transform_4, window_bounds = array<i64: 512, 256>}, {transform_indices = @transform_5, window_bounds = array<i64: 1, 2, 256>}]} {
    %c2_i32 = arith.constant 2 : i32
    %0 = arith.muli %arg0, %c2_i32 : i32
    %1 = arith.addi %0, %arg1 : i32
    %c0_i32 = arith.constant 0 : i32
    %2 = arith.cmpi eq, %arg1, %c0_i32 : i32
    %3 = arith.extui %2 : i1 to i32
    %c0_i32_0 = arith.constant 0 : i32
    %4 = arith.cmpi ne, %3, %c0_i32_0 : i32
    scf.if %4 {
      %cst_23 = arith.constant 0.000000e+00 : f32
      %49 = vector.broadcast %cst_23 : f32 to vector<2x256xf32>
      %c0_24 = arith.constant 0 : index
      %c0_25 = arith.constant 0 : index
      %c0_26 = arith.constant 0 : index
      %50 = vector.load %arg7[%c0_24, %c0_25, %c0_26] : memref<1x2x256xf32, #tpu.memory_space<vmem>>, vector<1x2x256xf32>
      %51 = vector.shape_cast %50 : vector<1x2x256xf32> to vector<2x256xf32>
      %52 = vector.shape_cast %49 : vector<2x256xf32> to vector<1x2x256xf32>
      tpu.vector_store %arg7[%c0_24, %c0_25, %c0_26], %52 {strides = array<i32>} : memref<1x2x256xf32, #tpu.memory_space<vmem>>, vector<1x2x256xf32>,
    } else {
    }
    %c0 = arith.constant 0 : index
    %c0_1 = arith.constant 0 : index
    %5 = vector.load %arg2[%c0, %c0_1] : memref<2x2048xbf16, #tpu.memory_space<vmem>>, vector<2x2048xbf16>
    %c0_2 = arith.constant 0 : index
    %c0_3 = arith.constant 0 : index
    %c0_4 = arith.constant 0 : index
    %6 = vector.load %arg3[%c0_2, %c0_3, %c0_4] : memref<1x2048x512xbf16, #tpu.memory_space<vmem>>, vector<1x2048x512xbf16>
    %7 = vector.shape_cast %6 : vector<1x2048x512xbf16> to vector<2048x512xbf16>
    %cst = arith.constant dense<0.000000e+00> : vector<2x512xf32>
    %8 = tpu.matmul %5, %7, %cst {dimension_numbers = #tpu.dot_dimension_numbers<[1], [0], [0], [1], [0, 0, 1, 1], [], []>} : vector<2x2048xbf16>, vector<2048x512xbf16>, vector<2x512xf32> -> vector<2x512xf32>
    %cst_5 = arith.constant dense<0.000000e+00> : vector<512xf32>
    %9 = vector.multi_reduction <add>, %8, %cst_5 [0] : vector<2x512xf32> to vector<512xf32>
    %10 = vector.shape_cast %9 : vector<512xf32> to vector<1x512xf32>
    %cst_6 = arith.constant 5.000000e-01 : f32
    %11 = vector.broadcast %cst_6 : f32 to vector<1x512xf32>
    %12 = arith.mulf %10, %11 : vector<1x512xf32>
    %13 = arith.mulf %8, %8 : vector<2x512xf32>
    %cst_7 = arith.constant dense<0.000000e+00> : vector<512xf32>
    %14 = vector.multi_reduction <add>, %13, %cst_7 [0] : vector<2x512xf32> to vector<512xf32>
    %15 = vector.shape_cast %14 : vector<512xf32> to vector<1x512xf32>
    %cst_8 = arith.constant 5.000000e-01 : f32
    %16 = vector.broadcast %cst_8 : f32 to vector<1x512xf32>
    %17 = arith.mulf %15, %16 : vector<1x512xf32>
    %18 = arith.mulf %12, %12 : vector<1x512xf32>
    %19 = arith.subf %17, %18 : vector<1x512xf32>
    %cst_9 = arith.constant 0.000000e+00 : f32
    %20 = vector.broadcast %cst_9 : f32 to vector<1x512xf32>
    %21 = arith.maximumf %19, %20 : vector<1x512xf32>
    %c512_i32 = arith.constant 512 : i32
    %22 = arith.muli %1, %c512_i32 : i32
    %23 = tpu.assume_multiple %22, 512 : i32
    %c0_10 = arith.constant 0 : index
    %24 = arith.index_cast %23 : i32 to index
    %25 = vector.load %arg4[%c0_10, %24] : memref<1x1024xf32, #tpu.memory_space<vmem>>, vector<1x512xf32>
    %c0_11 = arith.constant 0 : index
    %26 = arith.index_cast %23 : i32 to index
    %27 = vector.load %arg5[%c0_11, %26] : memref<1x1024xf32, #tpu.memory_space<vmem>>, vector<1x512xf32>
    %cst_12 = arith.constant 9.99999974E-6 : f32
    %28 = vector.broadcast %cst_12 : f32 to vector<1x512xf32>
    %29 = arith.addf %21, %28 : vector<1x512xf32>
    %30 = math.rsqrt %29 : vector<1x512xf32>
    %31 = arith.mulf %25, %30 : vector<1x512xf32>
    %32 = arith.mulf %12, %31 : vector<1x512xf32>
    %33 = arith.subf %27, %32 : vector<1x512xf32>
    %34 = vector.broadcast %31 : vector<1x512xf32> to vector<2x512xf32>
    %35 = arith.mulf %8, %34 : vector<2x512xf32>
    %36 = vector.broadcast %33 : vector<1x512xf32> to vector<2x512xf32>
    %37 = arith.addf %35, %36 : vector<2x512xf32>
    %cst_13 = arith.constant 0.000000e+00 : f32
    %38 = vector.broadcast %cst_13 : f32 to vector<2x512xf32>
    %39 = arith.maximumf %37, %38 : vector<2x512xf32>
    %c0_14 = arith.constant 0 : index
    %c0_15 = arith.constant 0 : index
    %c0_16 = arith.constant 0 : index
    %40 = vector.load %arg7[%c0_14, %c0_15, %c0_16] : memref<1x2x256xf32, #tpu.memory_space<vmem>>, vector<1x2x256xf32>
    %41 = vector.shape_cast %40 : vector<1x2x256xf32> to vector<2x256xf32>
    %42 = arith.truncf %39 : vector<2x512xf32> to vector<2x512xbf16>
    %c0_17 = arith.constant 0 : index
    %c0_18 = arith.constant 0 : index
    %43 = vector.load %arg6[%c0_17, %c0_18] : memref<512x256xbf16, #tpu.memory_space<vmem>>, vector<512x256xbf16>
    %cst_19 = arith.constant dense<0.000000e+00> : vector<2x256xf32>
    %44 = tpu.matmul %42, %43, %cst_19 {dimension_numbers = #tpu.dot_dimension_numbers<[1], [0], [0], [1], [0, 0, 1, 1], [], []>} : vector<2x512xbf16>, vector<512x256xbf16>, vector<2x256xf32> -> vector<2x256xf32>
    %45 = arith.addf %41, %44 : vector<2x256xf32>
    %c0_20 = arith.constant 0 : index
    %c0_21 = arith.constant 0 : index
    %c0_22 = arith.constant 0 : index
    %46 = vector.load %arg7[%c0_20, %c0_21, %c0_22] : memref<1x2x256xf32, #tpu.memory_space<vmem>>, vector<1x2x256xf32>
    %47 = vector.shape_cast %46 : vector<1x2x256xf32> to vector<2x256xf32>
    %48 = vector.shape_cast %45 : vector<2x256xf32> to vector<1x2x256xf32>
    tpu.vector_store %arg7[%c0_20, %c0_21, %c0_22], %48 {strides = array<i32>} : memref<1x2x256xf32, #tpu.memory_space<vmem>>, vector<1x2x256xf32>,
    return
  }
  func.func @transform_0(%arg0: i32, %arg1: i32) -> (i32, i32) {
    %c0_i32 = arith.constant 0 : i32
    %c0_i32_0 = arith.constant 0 : i32
    %c0_i32_1 = arith.constant 0 : i32
    return %c0_i32, %c0_i32_0 : i32, i32
  }
  func.func @transform_1(%arg0: i32, %arg1: i32) -> (i32, i32, i32) {
    %c2_i32 = arith.constant 2 : i32
    %0 = arith.muli %arg0, %c2_i32 : i32
    %1 = arith.addi %0, %arg1 : i32
    %c0_i32 = arith.constant 0 : i32
    %c0_i32_0 = arith.constant 0 : i32
    %c0_i32_1 = arith.constant 0 : i32
    return %1, %c0_i32, %c0_i32_0 : i32, i32, i32
  }
  func.func @transform_2(%arg0: i32, %arg1: i32) -> (i32, i32) {
    %c0_i32 = arith.constant 0 : i32
    %c0_i32_0 = arith.constant 0 : i32
    %c0_i32_1 = arith.constant 0 : i32
    return %c0_i32, %c0_i32_0 : i32, i32
  }
  func.func @transform_3(%arg0: i32, %arg1: i32) -> (i32, i32) {
    %c0_i32 = arith.constant 0 : i32
    %c0_i32_0 = arith.constant 0 : i32
    %c0_i32_1 = arith.constant 0 : i32
    return %c0_i32, %c0_i32_0 : i32, i32
  }
  func.func @transform_4(%arg0: i32, %arg1: i32) -> (i32, i32) {
    %c2_i32 = arith.constant 2 : i32
    %0 = arith.muli %arg0, %c2_i32 : i32
    %1 = arith.addi %0, %arg1 : i32
    %c0_i32 = arith.constant 0 : i32
    %c0_i32_0 = arith.constant 0 : i32
    return %1, %c0_i32 : i32, i32
  }
  func.func @transform_5(%arg0: i32, %arg1: i32) -> (i32, i32, i32) {
    %c0_i32 = arith.constant 0 : i32
    %c0_i32_0 = arith.constant 0 : i32
    %c0_i32_1 = arith.constant 0 : i32
    return %arg0, %c0_i32, %c0_i32_0 : i32, i32, i32
  }
}

</mosaic_0001>

<llo_original>
// kernel: byol_forward.1
$region0: #{byol_forward.1}
  #allocation0 [shape = 'u32[]', space=smem, size = 0x4, offset = 0x4, fixed_abs, tag = 'smem constant byte address 0x4 - core index']
  #allocation1 [shape = 'u32[72,128]{1,0:T(1,128)}', space=vmem, size = 0x9000, scoped, tag = 'internal scratch']
  %s0 = inlined_call_operand.vmem [shape: bf16[2,2048], index: 0, kind: input, shape index: {}]
  %s1 = inlined_call_operand.hbm [shape: bf16[2,2048,512], index: 1, kind: input, shape index: {}]
  %s2 = inlined_call_operand.hbm [shape: f32[1,1024], index: 2, kind: input, shape index: {}]
  %s3 = inlined_call_operand.hbm [shape: f32[1,1024], index: 3, kind: input, shape index: {}]
  %s4 = inlined_call_operand.hbm [shape: bf16[1024,256], index: 4, kind: input, shape index: {}]
  %s5 = inlined_call_operand.vmem [shape: f32[1,2,256], index: 5, kind: output, shape index: {}]
  %s6 = sld [smem:[#allocation0]]
  $region73: #{byol_forward.1} parent=0
    _
  %s8 = ssub.s32 1, %s6
  %s9 = scalar_select 0, %s8, %s6
  $region1: #{byol_forward.1} parent=0
    #allocation2 [shape = 'u8[4194304]{0}', space=vmem, size = 0x400000, scoped, tag = 'input window, operand 1']
    #allocation3 [shape = 's32[2]{0}', space=sflag, size = 0x8, scoped, tag = 'scoped memory for byol_forward.1']
    #allocation4 [shape = 'u8[4096]{0}', space=vmem, size = 0x1000, scoped, tag = 'input window, operand 2, single buffered']
    #allocation5 [shape = 's32[1]{0}', space=sflag, size = 0x4, scoped, tag = 'scoped memory for byol_forward.1']
    #allocation6 [shape = 'u8[4096]{0}', space=vmem, size = 0x1000, scoped, tag = 'input window, operand 3, single buffered']
    #allocation7 [shape = 'u8[524288]{0}', space=vmem, size = 0x80000, scoped, tag = 'input window, operand 4']
    #allocation8 [shape = 's32[2]{0}', space=sflag, size = 0x8, scoped, tag = 'scoped memory for byol_forward.1']
    %10 = vsyncpa [#allocation3], 0
    %s11 = scalar_lea.sflag [#allocation3], 1
    %12 = vsyncpa %s11, 0
    %13 = vsyncpa [#allocation5], 0
    %14 = vsyncpa [#allocation8], 0
    %s15 = scalar_lea.sflag [#allocation8], 1
    %16 = vsyncpa %s15, 0
    loop: start=0, step=1, limit=4
    $region2: #{byol_forward.1} parent=1 // loop_pre_header
      _
    $region3: #{byol_forward.1} parent=1 // loop_header
      %s18 = sphi 0, %s22
      %p19 = scmp.ge.s32.totalorder %s18, 4
      %s25 = sphi 0, %s37
      %s26 = sphi 0, %s33
      %s27 = sphi 0, %s25
      %s28 = sphi 0, %s26
      %s29 = sphi 0, %s27
      %s30 = sphi 0, %s28
      %s38 = sphi 0, %s38
      %s40 = sphi 0, %s38
      %s41 = sphi 0, %s40
      %s55 = sphi 0, %s41
      %s65 = sphi 0, %s67
      %s68 = sphi 0, %s65
      %s69 = sphi 0, %s68
      %s85 = sphi 0, %s69
      %s89 = sphi 0, %s89
      %s91 = sphi 0, %s89
      %s92 = sphi 0, %s91
      %s106 = sphi 0, %s92
      %s110 = sphi 0, %s110
      %s112 = sphi 0, %s110
      %s113 = sphi 0, %s112
      %s127 = sphi 0, %s113
      %s137 = sphi 0, %s139
      %s140 = sphi 0, %s137
      %s141 = sphi 0, %s140
      %s157 = sphi 0, %s141
      %s163 = sphi 0, %s165
      %s166 = sphi 0, %s163
      %s167 = sphi 0, %s166
      %s183 = sphi 0, %s167
    $region4: #{byol_forward.1} parent=1 // loop_header_branch
      %21 = sbr.rel (%p19) target = $region8
    $region5: #{byol_forward.1} parent=1 // loop_body
      %s23 = ssub.s32 %s18, 1
      %s24 = ssub.s32 %s18, 2
      %s31 = sadd.s32 1, %s26
      %p32 = scmp.ge.s32.totalorder %s31, 2
      %s33 = scalar_select %p32, 0, %s31
      %s34 = sadd.s32 1, %s25
      %s35 = scalar_select %p32, %s34, %s25
      %p36 = scmp.ge.s32.totalorder %s35, 1
      %s37 = scalar_select %p36, 0, %s35
      %s39 = sadd.s32 %s38, 1
      %p42 = scmp.eq.s32.totalorder %s18, 1
      %p43 = scmp.ne.s32.totalorder %s38, %s40
      %p44 = scmp.eq.s32.totalorder %s18, 0
      %p45 = por %p43, %p44
      %p46 = scmp.ne.s32.totalorder %s38, %s40
      %p47 = scmp.eq.s32.totalorder %s23, 1
      %p48 = por %p46, %p47
      %p49 = scmp.ne.s32.totalorder %s40, %s41
      %p50 = scmp.eq.s32.totalorder %s23, 0
      %p51 = por %p49, %p50
      %p52 = scmp.ne.s32.totalorder %s40, %s41
      %p53 = scmp.eq.s32.totalorder %s24, 1
      %p54 = por %p52, %p53
      %p56 = scmp.ne.s32.totalorder %s41, %s55
      %p57 = scmp.eq.s32.totalorder %s24, 0
      %p58 = por %p56, %p57
      %s59 = smul.u32 %s25, 2
      %s60 = sadd.s32 %s59, %s26
      %s61 = smul.u32 %s37, 2
      %s62 = sadd.s32 %s61, %s33
      %s63 = ssub.s32 %s60, %s62
      %p64 = scmp.eq.s32.totalorder %s63, 0
      %s66 = sadd.s32 %s65, 1
      %s67 = scalar_select %p64, %s65, %s66
      %p70 = pneg %p64
      %p71 = scmp.eq.s32.totalorder %s18, 1
      %p72 = por %p70, %p71
      %p73 = scmp.ne.s32.totalorder %s65, %s68
      %p74 = scmp.eq.s32.totalorder %s18, 0
      %p75 = por %p73, %p74
      %p76 = scmp.ne.s32.totalorder %s65, %s68
      %p77 = scmp.eq.s32.totalorder %s23, 1
      %p78 = por %p76, %p77
      %p79 = scmp.ne.s32.totalorder %s68, %s69
      %p80 = scmp.eq.s32.totalorder %s23, 0
      %p81 = por %p79, %p80
      %p82 = scmp.ne.s32.totalorder %s68, %s69
      %p83 = scmp.eq.s32.totalorder %s24, 1
      %p84 = por %p82, %p83
      %p86 = scmp.ne.s32.totalorder %s69, %s85
      %p87 = scmp.eq.s32.totalorder %s24, 0
      %p88 = por %p86, %p87
      %s90 = sadd.s32 %s89, 1
      %p93 = scmp.eq.s32.totalorder %s18, 1
      %p94 = scmp.ne.s32.totalorder %s89, %s91
      %p95 = scmp.eq.s32.totalorder %s18, 0
      %p96 = por %p94, %p95
      %p97 = scmp.ne.s32.totalorder %s89, %s91
      %p98 = scmp.eq.s32.totalorder %s23, 1
      %p99 = por %p97, %p98
      %p100 = scmp.ne.s32.totalorder %s91, %s92
      %p101 = scmp.eq.s32.totalorder %s23, 0
      %p102 = por %p100, %p101
      %p103 = scmp.ne.s32.totalorder %s91, %s92
      %p104 = scmp.eq.s32.totalorder %s24, 1
      %p105 = por %p103, %p104
      %p107 = scmp.ne.s32.totalorder %s92, %s106
      %p108 = scmp.eq.s32.totalorder %s24, 0
      %p109 = por %p107, %p108
      %s111 = sadd.s32 %s110, 1
      %p114 = scmp.eq.s32.totalorder %s18, 1
      %p115 = scmp.ne.s32.totalorder %s110, %s112
      %p116 = scmp.eq.s32.totalorder %s18, 0
      %p117 = por %p115, %p116
      %p118 = scmp.ne.s32.totalorder %s110, %s112
      %p119 = scmp.eq.s32.totalorder %s23, 1
      %p120 = por %p118, %p119
      %p121 = scmp.ne.s32.totalorder %s112, %s113
      %p122 = scmp.eq.s32.totalorder %s23, 0
      %p123 = por %p121, %p122
      %p124 = scmp.ne.s32.totalorder %s112, %s113
      %p125 = scmp.eq.s32.totalorder %s24, 1
      %p126 = por %p124, %p125
      %p128 = scmp.ne.s32.totalorder %s113, %s127
      %p129 = scmp.eq.s32.totalorder %s24, 0
      %p130 = por %p128, %p129
      %s131 = smul.u32 %s25, 2
      %s132 = sadd.s32 %s131, %s26
      %s133 = smul.u32 %s37, 2
      %s134 = sadd.s32 %s133, %s33
      %s135 = ssub.s32 %s132, %s134
      %p136 = scmp.eq.s32.totalorder %s135, 0
      %s138 = sadd.s32 %s137, 1
      %s139 = scalar_select %p136, %s137, %s138
      %p142 = pneg %p136
      %p143 = scmp.eq.s32.totalorder %s18, 1
      %p144 = por %p142, %p143
      %p145 = scmp.ne.s32.totalorder %s137, %s140
      %p146 = scmp.eq.s32.totalorder %s18, 0
      %p147 = por %p145, %p146
      %p148 = scmp.ne.s32.totalorder %s137, %s140
      %p149 = scmp.eq.s32.totalorder %s23, 1
      %p150 = por %p148, %p149
      %p151 = scmp.ne.s32.totalorder %s140, %s141
      %p152 = scmp.eq.s32.totalorder %s23, 0
      %p153 = por %p151, %p152
      %p154 = scmp.ne.s32.totalorder %s140, %s141
      %p155 = scmp.eq.s32.totalorder %s24, 1
      %p156 = por %p154, %p155
      %p158 = scmp.ne.s32.totalorder %s141, %s157
      %p159 = scmp.eq.s32.totalorder %s24, 0
      %p160 = por %p158, %p159
      %s161 = ssub.s32 %s25, %s37
      %p162 = scmp.eq.s32.totalorder %s161, 0
      %s164 = sadd.s32 %s163, 1
      %s165 = scalar_select %p162, %s163, %s164
      %p168 = pneg %p162
      %p169 = scmp.eq.s32.totalorder %s18, 1
      %p170 = por %p168, %p169
      %p171 = scmp.ne.s32.totalorder %s163, %s166
      %p172 = scmp.eq.s32.totalorder %s18, 0
      %p173 = por %p171, %p172
      %p174 = scmp.ne.s32.totalorder %s163, %s166
      %p175 = scmp.eq.s32.totalorder %s23, 1
      %p176 = por %p174, %p175
      %p177 = scmp.ne.s32.totalorder %s166, %s167
      %p178 = scmp.eq.s32.totalorder %s23, 0
      %p179 = por %p177, %p178
      %p180 = scmp.ne.s32.totalorder %s166, %s167
      %p181 = scmp.eq.s32.totalorder %s24, 1
      %p182 = por %p180, %p181
      %p184 = scmp.ne.s32.totalorder %s167, %s183
      %p185 = scmp.eq.s32.totalorder %s24, 0
      %p186 = por %p184, %p185
      %p187 = scmp.le.s32.totalorder 1, %s18
      %p188 = scmp.lt.s32.totalorder %s18, 3
      %p189 = pnand %p187, %p188
      %p190 = pneg %p189
      // Predicated region
      $region9: #{byol_forward.1} parent=5 // pred_check
        _
      $region10: #{byol_forward.1} parent=5 // pred_check_branch
        %192 = sbr.rel (%p189) target = $region12
      $region11: #{byol_forward.1} parent=5 // pred_region
        %s193 = ssub.s32 %s18, 1
        // Predicated region
        $region13: #{byol_forward.1} parent=11 // pred_check
          %p194 = pneg %p51
        $region14: #{byol_forward.1} parent=11 // pred_check_branch
          %196 = sbr.rel (%p194) target = $region16
        $region15: #{byol_forward.1} parent=11 // pred_region
          _
        $region16: #{byol_forward.1} parent=11 // pred_fallthru
          _
        // Predicated region
        $region17: #{byol_forward.1} parent=11 // pred_check
          %p197 = pneg %p102
        $region18: #{byol_forward.1} parent=11 // pred_check_branch
          %199 = sbr.rel (%p197) target = $region20
        $region19: #{byol_forward.1} parent=11 // pred_region
          %201 = vsyncadd [#allocation5], 0
          %s203 = sshll.u32 %s2, 4
          %s204 = int_to_ptr.hbm [resolvable:$true] %s203
          %s205 = sshll.u32 [#allocation4], 4
          %s206 = int_to_ptr.vmem [resolvable:$true] %s205
          %208 = dma.hbm_to_vmem [thread:$0]  %s204, 128, %s206, [#allocation5]
        $region20: #{byol_forward.1} parent=11 // pred_fallthru
          _
        // Predicated region
        $region21: #{byol_forward.1} parent=11 // pred_check
          %p209 = pneg %p123
        $region22: #{byol_forward.1} parent=11 // pred_check_branch
          %211 = sbr.rel (%p209) target = $region24
        $region23: #{byol_forward.1} parent=11 // pred_region
          %213 = vsyncadd [#allocation5], 0
          %s215 = sshll.u32 %s3, 4
          %s216 = int_to_ptr.hbm [resolvable:$true] %s215
          %s217 = sshll.u32 [#allocation6], 4
          %s218 = int_to_ptr.vmem [resolvable:$true] %s217
          %220 = dma.hbm_to_vmem [thread:$0]  %s216, 128, %s218, [#allocation5]
        $region24: #{byol_forward.1} parent=11 // pred_fallthru
          _
      $region12: #{byol_forward.1} parent=5 // pred_fallthru
        _
      %p221 = scmp.lt.s32.totalorder %s18, 2
      // Predicated region
      $region25: #{byol_forward.1} parent=5 // pred_check
        %p222 = pneg %p221
      $region26: #{byol_forward.1} parent=5 // pred_check_branch
        %224 = sbr.rel (%p222) target = $region28
      $region27: #{byol_forward.1} parent=5 // pred_region
        // Predicated region
        $region29: #{byol_forward.1} parent=27 // pred_check
          %p225 = pneg %p75
        $region30: #{byol_forward.1} parent=27 // pred_check_branch
          %227 = sbr.rel (%p225) target = $region32
        $region31: #{byol_forward.1} parent=27 // pred_region
          %s228 = sand.u32 %s65, 1
          %s229 = scalar_lea.sflag [#allocation3], %s228
          %s230 = sand.u32 %s65, 1
          %s231 = smul.addr %s230, 4096
          %s232 = scalar_lea.vmem [#allocation2], %s231
          %s233 = smul.u32 %s25, 2
          %s234 = sadd.s32 %s233, %s26
          %236 = vsyncadd %s229, 0
          %s237 = smul.addr %s234, 1024
          %s238 = smul.addr %s237, 4
          %s239 = scalar_lea.hbm %s1, %s238
          %s240 = sshll.u32 %s239, 4
          %s241 = int_to_ptr.hbm [resolvable:$true] %s240
          %s242 = sshll.u32 %s232, 4
          %s243 = int_to_ptr.vmem [resolvable:$true] %s242
          %248 = dma.hbm_to_vmem [thread:$0]  %s241, 65536, %s243, %s229, 256, 256, 16
        $region32: #{byol_forward.1} parent=27 // pred_fallthru
          _
        // Predicated region
        $region33: #{byol_forward.1} parent=27 // pred_check
          %p249 = pneg %p147
        $region34: #{byol_forward.1} parent=27 // pred_check_branch
          %251 = sbr.rel (%p249) target = $region36
        $region35: #{byol_forward.1} parent=27 // pred_region
          %s252 = sand.u32 %s137, 1
          %s253 = scalar_lea.sflag [#allocation8], %s252
          %s254 = sand.u32 %s137, 1
          %s255 = smul.addr %s254, 512
          %s256 = scalar_lea.vmem [#allocation7], %s255
          %s257 = smul.u32 %s25, 2
          %s258 = sadd.s32 %s257, %s26
          %s259 = smul.u32 64, %s258
          %261 = vsyncadd %s253, 0
          %s262 = smul.addr %s259, 2
          %s263 = smul.addr %s262, 4
          %s264 = scalar_lea.hbm %s4, %s263
          %s265 = sshll.u32 %s264, 4
          %s266 = int_to_ptr.hbm [resolvable:$true] %s265
          %s267 = sshll.u32 %s256, 4
          %s268 = int_to_ptr.vmem [resolvable:$true] %s267
          %273 = dma.hbm_to_vmem [thread:$0]  %s266, 8192, %s268, %s253, 128, 128, 8
        $region36: #{byol_forward.1} parent=27 // pred_fallthru
          _
      $region28: #{byol_forward.1} parent=5 // pred_fallthru
        _
      %p274 = scmp.le.s32.totalorder 1, %s18
      %p275 = scmp.lt.s32.totalorder %s18, 3
      %p276 = pnand %p274, %p275
      %p277 = pneg %p276
      // Predicated region
      $region37: #{byol_forward.1} parent=5 // pred_check
        _
      $region38: #{byol_forward.1} parent=5 // pred_check_branch
        %279 = sbr.rel (%p276) target = $region40
      $region39: #{byol_forward.1} parent=5 // pred_region
        %s280 = ssub.s32 %s18, 1
        %s281 = sand.u32 %s68, 1
        %s282 = scalar_lea.sflag [#allocation3], %s281
        %s283 = sand.u32 %s68, 1
        %s284 = smul.addr %s283, 4096
        %s285 = scalar_lea.vmem [#allocation2], %s284
        // Predicated region
        $region41: #{byol_forward.1} parent=39 // pred_check
          %p286 = pneg %p81
        $region42: #{byol_forward.1} parent=39 // pred_check_branch
          %288 = sbr.rel (%p286) target = $region44
        $region43: #{byol_forward.1} parent=39 // pred_region
          %290 = dma.done %s282, 65536
        $region44: #{byol_forward.1} parent=39 // pred_fallthru
          _
        // Predicated region
        $region45: #{byol_forward.1} parent=39 // pred_check
          %p291 = pneg %p102
        $region46: #{byol_forward.1} parent=39 // pred_check_branch
          %293 = sbr.rel (%p291) target = $region48
        $region47: #{byol_forward.1} parent=39 // pred_region
          %295 = dma.done [#allocation5], 128
        $region48: #{byol_forward.1} parent=39 // pred_fallthru
          _
        // Predicated region
        $region49: #{byol_forward.1} parent=39 // pred_check
          %p296 = pneg %p123
        $region50: #{byol_forward.1} parent=39 // pred_check_branch
          %298 = sbr.rel (%p296) target = $region52
        $region51: #{byol_forward.1} parent=39 // pred_region
          %300 = dma.done [#allocation5], 128
        $region52: #{byol_forward.1} parent=39 // pred_fallthru
          _
        %s301 = sand.u32 %s140, 1
        %s302 = scalar_lea.sflag [#allocation8], %s301
        %s303 = sand.u32 %s140, 1
        %s304 = smul.addr %s303, 512
        %s305 = scalar_lea.vmem [#allocation7], %s304
        // Predicated region
        $region53: #{byol_forward.1} parent=39 // pred_check
          %p306 = pneg %p153
        $region54: #{byol_forward.1} parent=39 // pred_check_branch
          %308 = sbr.rel (%p306) target = $region56
        $region55: #{byol_forward.1} parent=39 // pred_region
          %310 = dma.done %s302, 8192
        $region56: #{byol_forward.1} parent=39 // pred_fallthru
          _
        %p311 = pneg %p51
        %p312 = pneg %p48
        %s313 = sand.u32 %s68, 1
        %s314 = scalar_lea.sflag [#allocation3], %s313
        %s315 = sand.u32 %s68, 1
        %s316 = smul.addr %s315, 4096
        %s317 = scalar_lea.vmem [#allocation2], %s316
        %p318 = pneg %p81
        %p319 = pneg %p78
        %p320 = pneg %p102
        %p321 = pneg %p99
        %p322 = pneg %p123
        %p323 = pneg %p120
        %s324 = sand.u32 %s140, 1
        %s325 = scalar_lea.sflag [#allocation8], %s324
        %s326 = sand.u32 %s140, 1
        %s327 = smul.addr %s326, 512
        %s328 = scalar_lea.vmem [#allocation7], %s327
        %p329 = pneg %p153
        %p330 = pneg %p150
        %p331 = pneg %p179
        %p332 = pneg %p176
        %p333 = scmp.lt.s32.totalorder %s27, 0
        %s334 = scalar_select %p333, %s27, 0
        %s335 = smul.addr %s334, 2
        %s336 = smul.addr %s335, 2
        %s337 = scalar_lea.vmem %s5, %s336
        %s338 = smul.u32 %s27, 2
        %s339 = sadd.s32 %s338, %s28
        %s340 = smul.u32 %s27, 2
        %s341 = sadd.s32 %s340, %s28
        %s342 = smul.u32 64, %s341
        %p343 = scmp.lt.s32.totalorder %s27, 0
        %s344 = scalar_select %p343, %s27, 0
        %s345 = smul.addr %s344, 2
        %s346 = smul.addr %s345, 2
        %s347 = scalar_lea.vmem %s5, %s346
        %s348 = smul.u32 %s27, 2
        %s349 = sadd.s32 %s348, %s28
        %p350 = scmp.eq.s32.totalorder %s28, 0
        // Predicated region
        $region57: #{byol_forward.1} parent=39 // pred_check
          %p351 = pneg %p350
        $region58: #{byol_forward.1} parent=39 // pred_check_branch
          %353 = sbr.rel (%p351) target = $region60
        $region59: #{byol_forward.1} parent=39 // pred_region
          %354 = vst [vmem:[%s347] sm:$0xf] 0.0
        $region60: #{byol_forward.1} parent=39 // pred_fallthru
          _
        %v355 = vld [vmem:[%s0] sm:$0xff]
        %v356 = vld [vmem:[%s0 + $0x8] sm:$0xff]
        %v357 = vld [vmem:[%s285] sm:$0xff]
        %v358 = vld [vmem:[%s285 + $0x8] sm:$0xff]
        %v359 = vld [vmem:[%s285 + $0x10] sm:$0xff]
        %v360 = vld [vmem:[%s285 + $0x18] sm:$0xff]
        %v361 = vld [vmem:[%s285 + $0x20] sm:$0xff]
        %v362 = vld [vmem:[%s285 + $0x28] sm:$0xff]
        %v363 = vld [vmem:[%s285 + $0x30] sm:$0xff]
        %v364 = vld [vmem:[%s285 + $0x38] sm:$0xff]
        %v365 = vld [vmem:[%s285 + $0x40] sm:$0xff]
        %v366 = vld [vmem:[%s285 + $0x48] sm:$0xff]
        %v367 = vld [vmem:[%s285 + $0x50] sm:$0xff]
        %v368 = vld [vmem:[%s285 + $0x58] sm:$0xff]
        %v369 = vld [vmem:[%s285 + $0x60] sm:$0xff]
        %v370 = vld [vmem:[%s285 + $0x68] sm:$0xff]
        %v371 = vld [vmem:[%s285 + $0x70] sm:$0xff]
        %v372 = vld [vmem:[%s285 + $0x78] sm:$0xff]
        %v373 = vld [vmem:[%s285 + $0x80] sm:$0xff]
        %v374 = vld [vmem:[%s285 + $0x88] sm:$0xff]
        %v375 = vld [vmem:[%s285 + $0x90] sm:$0xff]
        %v376 = vld [vmem:[%s285 + $0x98] sm:$0xff]
        %v377 = vld [vmem:[%s285 + $0xa0] sm:$0xff]
        %v378 = vld [vmem:[%s285 + $0xa8] sm:$0xff]
        %v379 = vld [vmem:[%s285 + $0xb0] sm:$0xff]
        %v380 = vld [vmem:[%s285 + $0xb8] sm:$0xff]
        %v381 = vld [vmem:[%s285 + $0xc0] sm:$0xff]
        %v382 = vld [vmem:[%s285 + $0xc8] sm:$0xff]
        %v383 = vld [vmem:[%s285 + $0xd0] sm:$0xff]
        %v384 = vld [vmem:[%s285 + $0xd8] sm:$0xff]
        %v385 = vld [vmem:[%s285 + $0xe0] sm:$0xff]
        %v386 = vld [vmem:[%s285 + $0xe8] sm:$0xff]
        %v387 = vld [vmem:[%s285 + $0xf0] sm:$0xff]
        %v388 = vld [vmem:[%s285 + $0xf8] sm:$0xff]
        %v389 = vld [vmem:[%s285 + $0x100] sm:$0xff]
        %v390 = vld [vmem:[%s285 + $0x108] sm:$0xff]
        %v391 = vld [vmem:[%s285 + $0x110] sm:$0xff]
        %v392 = vld [vmem:[%s285 + $0x118] sm:$0xff]
        %v393 = vld [vmem:[%s285 + $0x120] sm:$0xff]
        %v394 = vld [vmem:[%s285 + $0x128] sm:$0xff]
        %v395 = vld [vmem:[%s285 + $0x130] sm:$0xff]
        %v396 = vld [vmem:[%s285 + $0x138] sm:$0xff]
        %v397 = vld [vmem:[%s285 + $0x140] sm:$0xff]
        %v398 = vld [vmem:[%s285 + $0x148] sm:$0xff]
        %v399 = vld [vmem:[%s285 + $0x150] sm:$0xff]
        %v400 = vld [vmem:[%s285 + $0x158] sm:$0xff]
        %v401 = vld [vmem:[%s285 + $0x160] sm:$0xff]
        %v402 = vld [vmem:[%s285 + $0x168] sm:$0xff]
        %v403 = vld [vmem:[%s285 + $0x170] sm:$0xff]
        %v404 = vld [vmem:[%s285 + $0x178] sm:$0xff]
        %v405 = vld [vmem:[%s285 + $0x180] sm:$0xff]
        %v406 = vld [vmem:[%s285 + $0x188] sm:$0xff]
        %v407 = vld [vmem:[%s285 + $0x190] sm:$0xff]
        %v408 = vld [vmem:[%s285 + $0x198] sm:$0xff]
        %v409 = vld [vmem:[%s285 + $0x1a0] sm:$0xff]
        %v410 = vld [vmem:[%s285 + $0x1a8] sm:$0xff]
        %v411 = vld [vmem:[%s285 + $0x1b0] sm:$0xff]
        %v412 = vld [vmem:[%s285 + $0x1b8] sm:$0xff]
        %v413 = vld [vmem:[%s285 + $0x1c0] sm:$0xff]
        %v414 = vld [vmem:[%s285 + $0x1c8] sm:$0xff]
        %v415 = vld [vmem:[%s285 + $0x1d0] sm:$0xff]
        %v416 = vld [vmem:[%s285 + $0x1d8] sm:$0xff]
        %v417 = vld [vmem:[%s285 + $0x1e0] sm:$0xff]
        %v418 = vld [vmem:[%s285 + $0x1e8] sm:$0xff]
        %v419 = vld [vmem:[%s285 + $0x1f0] sm:$0xff]
        %v420 = vld [vmem:[%s285 + $0x1f8] sm:$0xff]
        %v421 = vld [vmem:[%s285 + $0x200] sm:$0xff]
        %v422 = vld [vmem:[%s285 + $0x208] sm:$0xff]
        %v423 = vld [vmem:[%s285 + $0x210] sm:$0xff]
        %v424 = vld [vmem:[%s285 + $0x218] sm:$0xff]
        %v425 = vld [vmem:[%s285 + $0x220] sm:$0xff]
        %v426 = vld [vmem:[%s285 + $0x228] sm:$0xff]
        %v427 = vld [vmem:[%s285 + $0x230] sm:$0xff]
        %v428 = vld [vmem:[%s285 + $0x238] sm:$0xff]
        %v429 = vld [vmem:[%s285 + $0x240] sm:$0xff]
        %v430 = vld [vmem:[%s285 + $0x248] sm:$0xff]
        %v431 = vld [vmem:[%s285 + $0x250] sm:$0xff]
        %v432 = vld [vmem:[%s285 + $0x258] sm:$0xff]
        %v433 = vld [vmem:[%s285 + $0x260] sm:$0xff]
        %v434 = vld [vmem:[%s285 + $0x268] sm:$0xff]
        %v435 = vld [vmem:[%s285 + $0x270] sm:$0xff]
        %v436 = vld [vmem:[%s285 + $0x278] sm:$0xff]
        %v437 = vld [vmem:[%s285 + $0x280] sm:$0xff]
        %v438 = vld [vmem:[%s285 + $0x288] sm:$0xff]
        %v439 = vld [vmem:[%s285 + $0x290] sm:$0xff]
        %v440 = vld [vmem:[%s285 + $0x298] sm:$0xff]
        %v441 = vld [vmem:[%s285 + $0x2a0] sm:$0xff]
        %v442 = vld [vmem:[%s285 + $0x2a8] sm:$0xff]
        %v443 = vld [vmem:[%s285 + $0x2b0] sm:$0xff]
        %v444 = vld [vmem:[%s285 + $0x2b8] sm:$0xff]
        %v445 = vld [vmem:[%s285 + $0x2c0] sm:$0xff]
        %v446 = vld [vmem:[%s285 + $0x2c8] sm:$0xff]
        %v447 = vld [vmem:[%s285 + $0x2d0] sm:$0xff]
        %v448 = vld [vmem:[%s285 + $0x2d8] sm:$0xff]
        %v449 = vld [vmem:[%s285 + $0x2e0] sm:$0xff]
        %v450 = vld [vmem:[%s285 + $0x2e8] sm:$0xff]
        %v451 = vld [vmem:[%s285 + $0x2f0] sm:$0xff]
        %v452 = vld [vmem:[%s285 + $0x2f8] sm:$0xff]
        %v453 = vld [vmem:[%s285 + $0x300] sm:$0xff]
        %v454 = vld [vmem:[%s285 + $0x308] sm:$0xff]
        %v455 = vld [vmem:[%s285 + $0x310] sm:$0xff]
        %v456 = vld [vmem:[%s285 + $0x318] sm:$0xff]
        %v457 = vld [vmem:[%s285 + $0x320] sm:$0xff]
        %v458 = vld [vmem:[%s285 + $0x328] sm:$0xff]
        %v459 = vld [vmem:[%s285 + $0x330] sm:$0xff]
        %v460 = vld [vmem:[%s285 + $0x338] sm:$0xff]
        %v461 = vld [vmem:[%s285 + $0x340] sm:$0xff]
        %v462 = vld [vmem:[%s285 + $0x348] sm:$0xff]
        %v463 = vld [vmem:[%s285 + $0x350] sm:$0xff]
        %v464 = vld [vmem:[%s285 + $0x358] sm:$0xff]
        %v465 = vld [vmem:[%s285 + $0x360] sm:$0xff]
        %v466 = vld [vmem:[%s285 + $0x368] sm:$0xff]
        %v467 = vld [vmem:[%s285 + $0x370] sm:$0xff]
        %v468 = vld [vmem:[%s285 + $0x378] sm:$0xff]
        %v469 = vld [vmem:[%s285 + $0x380] sm:$0xff]
        %v470 = vld [vmem:[%s285 + $0x388] sm:$0xff]
        %v471 = vld [vmem:[%s285 + $0x390] sm:$0xff]
        %v472 = vld [vmem:[%s285 + $0x398] sm:$0xff]
        %v473 = vld [vmem:[%s285 + $0x3a0] sm:$0xff]
        %v474 = vld [vmem:[%s285 + $0x3a8] sm:$0xff]
        %v475 = vld [vmem:[%s285 + $0x3b0] sm:$0xff]
        %v476 = vld [vmem:[%s285 + $0x3b8] sm:$0xff]
        %v477 = vld [vmem:[%s285 + $0x3c0] sm:$0xff]
        %v478 = vld [vmem:[%s285 + $0x3c8] sm:$0xff]
        %v479 = vld [vmem:[%s285 + $0x3d0] sm:$0xff]
        %v480 = vld [vmem:[%s285 + $0x3d8] sm:$0xff]
        %v481 = vld [vmem:[%s285 + $0x3e0] sm:$0xff]
        %v482 = vld [vmem:[%s285 + $0x3e8] sm:$0xff]
        %v483 = vld [vmem:[%s285 + $0x3f0] sm:$0xff]
        %v484 = vld [vmem:[%s285 + $0x3f8] sm:$0xff]
        %v485 = vld [vmem:[%s285 + $0x400] sm:$0xff]
        %v486 = vld [vmem:[%s285 + $0x408] sm:$0xff]
        %v487 = vld [vmem:[%s285 + $0x410] sm:$0xff]
        %v488 = vld [vmem:[%s285 + $0x418] sm:$0xff]
        %v489 = vld [vmem:[%s285 + $0x420] sm:$0xff]
        %v490 = vld [vmem:[%s285 + $0x428] sm:$0xff]
        %v491 = vld [vmem:[%s285 + $0x430] sm:$0xff]
        %v492 = vld [vmem:[%s285 + $0x438] sm:$0xff]
        %v493 = vld [vmem:[%s285 + $0x440] sm:$0xff]
        %v494 = vld [vmem:[%s285 + $0x448] sm:$0xff]
        %v495 = vld [vmem:[%s285 + $0x450] sm:$0xff]
        %v496 = vld [vmem:[%s285 + $0x458] sm:$0xff]
        %v497 = vld [vmem:[%s285 + $0x460] sm:$0xff]
        %v498 = vld [vmem:[%s285 + $0x468] sm:$0xff]
        %v499 = vld [vmem:[%s285 + $0x470] sm:$0xff]
        %v500 = vld [vmem:[%s285 + $0x478] sm:$0xff]
        %v501 = vld [vmem:[%s285 + $0x480] sm:$0xff]
        %v502 = vld [vmem:[%s285 + $0x488] sm:$0xff]
        %v503 = vld [vmem:[%s285 + $0x490] sm:$0xff]
        %v504 = vld [vmem:[%s285 + $0x498] sm:$0xff]
        %v505 = vld [vmem:[%s285 + $0x4a0] sm:$0xff]
        %v506 = vld [vmem:[%s285 + $0x4a8] sm:$0xff]
        %v507 = vld [vmem:[%s285 + $0x4b0] sm:$0xff]
        %v508 = vld [vmem:[%s285 + $0x4b8] sm:$0xff]
        %v509 = vld [vmem:[%s285 + $0x4c0] sm:$0xff]
        %v510 = vld [vmem:[%s285 + $0x4c8] sm:$0xff]
        %v511 = vld [vmem:[%s285 + $0x4d0] sm:$0xff]
        %v512 = vld [vmem:[%s285 + $0x4d8] sm:$0xff]
        %v513 = vld [vmem:[%s285 + $0x4e0] sm:$0xff]
        %v514 = vld [vmem:[%s285 + $0x4e8] sm:$0xff]
        %v515 = vld [vmem:[%s285 + $0x4f0] sm:$0xff]
        %v516 = vld [vmem:[%s285 + $0x4f8] sm:$0xff]
        %v517 = vld [vmem:[%s285 + $0x500] sm:$0xff]
        %v518 = vld [vmem:[%s285 + $0x508] sm:$0xff]
        %v519 = vld [vmem:[%s285 + $0x510] sm:$0xff]
        %v520 = vld [vmem:[%s285 + $0x518] sm:$0xff]
        %v521 = vld [vmem:[%s285 + $0x520] sm:$0xff]
        %v522 = vld [vmem:[%s285 + $0x528] sm:$0xff]
        %v523 = vld [vmem:[%s285 + $0x530] sm:$0xff]
        %v524 = vld [vmem:[%s285 + $0x538] sm:$0xff]
        %v525 = vld [vmem:[%s285 + $0x540] sm:$0xff]
        %v526 = vld [vmem:[%s285 + $0x548] sm:$0xff]
        %v527 = vld [vmem:[%s285 + $0x550] sm:$0xff]
        %v528 = vld [vmem:[%s285 + $0x558] sm:$0xff]
        %v529 = vld [vmem:[%s285 + $0x560] sm:$0xff]
        %v530 = vld [vmem:[%s285 + $0x568] sm:$0xff]
        %v531 = vld [vmem:[%s285 + $0x570] sm:$0xff]
        %v532 = vld [vmem:[%s285 + $0x578] sm:$0xff]
        %v533 = vld [vmem:[%s285 + $0x580] sm:$0xff]
        %v534 = vld [vmem:[%s285 + $0x588] sm:$0xff]
        %v535 = vld [vmem:[%s285 + $0x590] sm:$0xff]
        %v536 = vld [vmem:[%s285 + $0x598] sm:$0xff]
        %v537 = vld [vmem:[%s285 + $0x5a0] sm:$0xff]
        %v538 = vld [vmem:[%s285 + $0x5a8] sm:$0xff]
        %v539 = vld [vmem:[%s285 + $0x5b0] sm:$0xff]
        %v540 = vld [vmem:[%s285 + $0x5b8] sm:$0xff]
        %v541 = vld [vmem:[%s285 + $0x5c0] sm:$0xff]
        %v542 = vld [vmem:[%s285 + $0x5c8] sm:$0xff]
        %v543 = vld [vmem:[%s285 + $0x5d0] sm:$0xff]
        %v544 = vld [vmem:[%s285 + $0x5d8] sm:$0xff]
        %v545 = vld [vmem:[%s285 + $0x5e0] sm:$0xff]
        %v546 = vld [vmem:[%s285 + $0x5e8] sm:$0xff]
        %v547 = vld [vmem:[%s285 + $0x5f0] sm:$0xff]
        %v548 = vld [vmem:[%s285 + $0x5f8] sm:$0xff]
        %v549 = vld [vmem:[%s285 + $0x600] sm:$0xff]
        %v550 = vld [vmem:[%s285 + $0x608] sm:$0xff]
        %v551 = vld [vmem:[%s285 + $0x610] sm:$0xff]
        %v552 = vld [vmem:[%s285 + $0x618] sm:$0xff]
        %v553 = vld [vmem:[%s285 + $0x620] sm:$0xff]
        %v554 = vld [vmem:[%s285 + $0x628] sm:$0xff]
        %v555 = vld [vmem:[%s285 + $0x630] sm:$0xff]
        %v556 = vld [vmem:[%s285 + $0x638] sm:$0xff]
        %v557 = vld [vmem:[%s285 + $0x640] sm:$0xff]
        %v558 = vld [vmem:[%s285 + $0x648] sm:$0xff]
        %v559 = vld [vmem:[%s285 + $0x650] sm:$0xff]
        %v560 = vld [vmem:[%s285 + $0x658] sm:$0xff]
        %v561 = vld [vmem:[%s285 + $0x660] sm:$0xff]
        %v562 = vld [vmem:[%s285 + $0x668] sm:$0xff]
        %v563 = vld [vmem:[%s285 + $0x670] sm:$0xff]
        %v564 = vld [vmem:[%s285 + $0x678] sm:$0xff]
        %v565 = vld [vmem:[%s285 + $0x680] sm:$0xff]
        %v566 = vld [vmem:[%s285 + $0x688] sm:$0xff]
        %v567 = vld [vmem:[%s285 + $0x690] sm:$0xff]
        %v568 = vld [vmem:[%s285 + $0x698] sm:$0xff]
        %v569 = vld [vmem:[%s285 + $0x6a0] sm:$0xff]
        %v570 = vld [vmem:[%s285 + $0x6a8] sm:$0xff]
        %v571 = vld [vmem:[%s285 + $0x6b0] sm:$0xff]
        %v572 = vld [vmem:[%s285 + $0x6b8] sm:$0xff]
        %v573 = vld [vmem:[%s285 + $0x6c0] sm:$0xff]
        %v574 = vld [vmem:[%s285 + $0x6c8] sm:$0xff]
        %v575 = vld [vmem:[%s285 + $0x6d0] sm:$0xff]
        %v576 = vld [vmem:[%s285 + $0x6d8] sm:$0xff]
        %v577 = vld [vmem:[%s285 + $0x6e0] sm:$0xff]
        %v578 = vld [vmem:[%s285 + $0x6e8] sm:$0xff]
        %v579 = vld [vmem:[%s285 + $0x6f0] sm:$0xff]
        %v580 = vld [vmem:[%s285 + $0x6f8] sm:$0xff]
        %v581 = vld [vmem:[%s285 + $0x700] sm:$0xff]
        %v582 = vld [vmem:[%s285 + $0x708] sm:$0xff]
        %v583 = vld [vmem:[%s285 + $0x710] sm:$0xff]
        %v584 = vld [vmem:[%s285 + $0x718] sm:$0xff]
        %v585 = vld [vmem:[%s285 + $0x720] sm:$0xff]
        %v586 = vld [vmem:[%s285 + $0x728] sm:$0xff]
        %v587 = vld [vmem:[%s285 + $0x730] sm:$0xff]
        %v588 = vld [vmem:[%s285 + $0x738] sm:$0xff]
        %v589 = vld [vmem:[%s285 + $0x740] sm:$0xff]
        %v590 = vld [vmem:[%s285 + $0x748] sm:$0xff]
        %v591 = vld [vmem:[%s285 + $0x750] sm:$0xff]
        %v592 = vld [vmem:[%s285 + $0x758] sm:$0xff]
        %v593 = vld [vmem:[%s285 + $0x760] sm:$0xff]
        %v594 = vld [vmem:[%s285 + $0x768] sm:$0xff]
        %v595 = vld [vmem:[%s285 + $0x770] sm:$0xff]
        %v596 = vld [vmem:[%s285 + $0x778] sm:$0xff]
        %v597 = vld [vmem:[%s285 + $0x780] sm:$0xff]
        %v598 = vld [vmem:[%s285 + $0x788] sm:$0xff]
        %v599 = vld [vmem:[%s285 + $0x790] sm:$0xff]
        %v600 = vld [vmem:[%s285 + $0x798] sm:$0xff]
        %v601 = vld [vmem:[%s285 + $0x7a0] sm:$0xff]
        %v602 = vld [vmem:[%s285 + $0x7a8] sm:$0xff]
        %v603 = vld [vmem:[%s285 + $0x7b0] sm:$0xff]
        %v604 = vld [vmem:[%s285 + $0x7b8] sm:$0xff]
        %v605 = vld [vmem:[%s285 + $0x7c0] sm:$0xff]
        %v606 = vld [vmem:[%s285 + $0x7c8] sm:$0xff]
        %v607 = vld [vmem:[%s285 + $0x7d0] sm:$0xff]
        %v608 = vld [vmem:[%s285 + $0x7d8] sm:$0xff]
        %v609 = vld [vmem:[%s285 + $0x7e0] sm:$0xff]
        %v610 = vld [vmem:[%s285 + $0x7e8] sm:$0xff]
        %v611 = vld [vmem:[%s285 + $0x7f0] sm:$0xff]
        %v612 = vld [vmem:[%s285 + $0x7f8] sm:$0xff]
        %v613 = vld [vmem:[%s285 + $0x800] sm:$0xff]
        %v614 = vld [vmem:[%s285 + $0x808] sm:$0xff]
        %v615 = vld [vmem:[%s285 + $0x810] sm:$0xff]
        %v616 = vld [vmem:[%s285 + $0x818] sm:$0xff]
        %v617 = vld [vmem:[%s285 + $0x820] sm:$0xff]
        %v618 = vld [vmem:[%s285 + $0x828] sm:$0xff]
        %v619 = vld [vmem:[%s285 + $0x830] sm:$0xff]
        %v620 = vld [vmem:[%s285 + $0x838] sm:$0xff]
        %v621 = vld [vmem:[%s285 + $0x840] sm:$0xff]
        %v622 = vld [vmem:[%s285 + $0x848] sm:$0xff]
        %v623 = vld [vmem:[%s285 + $0x850] sm:$0xff]
        %v624 = vld [vmem:[%s285 + $0x858] sm:$0xff]
        %v625 = vld [vmem:[%s285 + $0x860] sm:$0xff]
        %v626 = vld [vmem:[%s285 + $0x868] sm:$0xff]
        %v627 = vld [vmem:[%s285 + $0x870] sm:$0xff]
        %v628 = vld [vmem:[%s285 + $0x878] sm:$0xff]
        %v629 = vld [vmem:[%s285 + $0x880] sm:$0xff]
        %v630 = vld [vmem:[%s285 + $0x888] sm:$0xff]
        %v631 = vld [vmem:[%s285 + $0x890] sm:$0xff]
        %v632 = vld [vmem:[%s285 + $0x898] sm:$0xff]
        %v633 = vld [vmem:[%s285 + $0x8a0] sm:$0xff]
        %v634 = vld [vmem:[%s285 + $0x8a8] sm:$0xff]
        %v635 = vld [vmem:[%s285 + $0x8b0] sm:$0xff]
        %v636 = vld [vmem:[%s285 + $0x8b8] sm:$0xff]
        %v637 = vld [vmem:[%s285 + $0x8c0] sm:$0xff]
        %v638 = vld [vmem:[%s285 + $0x8c8] sm:$0xff]
        %v639 = vld [vmem:[%s285 + $0x8d0] sm:$0xff]
        %v640 = vld [vmem:[%s285 + $0x8d8] sm:$0xff]
        %v641 = vld [vmem:[%s285 + $0x8e0] sm:$0xff]
        %v642 = vld [vmem:[%s285 + $0x8e8] sm:$0xff]
        %v643 = vld [vmem:[%s285 + $0x8f0] sm:$0xff]
        %v644 = vld [vmem:[%s285 + $0x8f8] sm:$0xff]
        %v645 = vld [vmem:[%s285 + $0x900] sm:$0xff]
        %v646 = vld [vmem:[%s285 + $0x908] sm:$0xff]
        %v647 = vld [vmem:[%s285 + $0x910] sm:$0xff]
        %v648 = vld [vmem:[%s285 + $0x918] sm:$0xff]
        %v649 = vld [vmem:[%s285 + $0x920] sm:$0xff]
        %v650 = vld [vmem:[%s285 + $0x928] sm:$0xff]
        %v651 = vld [vmem:[%s285 + $0x930] sm:$0xff]
        %v652 = vld [vmem:[%s285 + $0x938] sm:$0xff]
        %v653 = vld [vmem:[%s285 + $0x940] sm:$0xff]
        %v654 = vld [vmem:[%s285 + $0x948] sm:$0xff]
        %v655 = vld [vmem:[%s285 + $0x950] sm:$0xff]
        %v656 = vld [vmem:[%s285 + $0x958] sm:$0xff]
        %v657 = vld [vmem:[%s285 + $0x960] sm:$0xff]
        %v658 = vld [vmem:[%s285 + $0x968] sm:$0xff]
        %v659 = vld [vmem:[%s285 + $0x970] sm:$0xff]
        %v660 = vld [vmem:[%s285 + $0x978] sm:$0xff]
        %v661 = vld [vmem:[%s285 + $0x980] sm:$0xff]
        %v662 = vld [vmem:[%s285 + $0x988] sm:$0xff]
        %v663 = vld [vmem:[%s285 + $0x990] sm:$0xff]
        %v664 = vld [vmem:[%s285 + $0x998] sm:$0xff]
        %v665 = vld [vmem:[%s285 + $0x9a0] sm:$0xff]
        %v666 = vld [vmem:[%s285 + $0x9a8] sm:$0xff]
        %v667 = vld [vmem:[%s285 + $0x9b0] sm:$0xff]
        %v668 = vld [vmem:[%s285 + $0x9b8] sm:$0xff]
        %v669 = vld [vmem:[%s285 + $0x9c0] sm:$0xff]
        %v670 = vld [vmem:[%s285 + $0x9c8] sm:$0xff]
        %v671 = vld [vmem:[%s285 + $0x9d0] sm:$0xff]
        %v672 = vld [vmem:[%s285 + $0x9d8] sm:$0xff]
        %v673 = vld [vmem:[%s285 + $0x9e0] sm:$0xff]
        %v674 = vld [vmem:[%s285 + $0x9e8] sm:$0xff]
        %v675 = vld [vmem:[%s285 + $0x9f0] sm:$0xff]
        %v676 = vld [vmem:[%s285 + $0x9f8] sm:$0xff]
        %v677 = vld [vmem:[%s285 + $0xa00] sm:$0xff]
        %v678 = vld [vmem:[%s285 + $0xa08] sm:$0xff]
        %v679 = vld [vmem:[%s285 + $0xa10] sm:$0xff]
        %v680 = vld [vmem:[%s285 + $0xa18] sm:$0xff]
        %v681 = vld [vmem:[%s285 + $0xa20] sm:$0xff]
        %v682 = vld [vmem:[%s285 + $0xa28] sm:$0xff]
        %v683 = vld [vmem:[%s285 + $0xa30] sm:$0xff]
        %v684 = vld [vmem:[%s285 + $0xa38] sm:$0xff]
        %v685 = vld [vmem:[%s285 + $0xa40] sm:$0xff]
        %v686 = vld [vmem:[%s285 + $0xa48] sm:$0xff]
        %v687 = vld [vmem:[%s285 + $0xa50] sm:$0xff]
        %v688 = vld [vmem:[%s285 + $0xa58] sm:$0xff]
        %v689 = vld [vmem:[%s285 + $0xa60] sm:$0xff]
        %v690 = vld [vmem:[%s285 + $0xa68] sm:$0xff]
        %v691 = vld [vmem:[%s285 + $0xa70] sm:$0xff]
        %v692 = vld [vmem:[%s285 + $0xa78] sm:$0xff]
        %v693 = vld [vmem:[%s285 + $0xa80] sm:$0xff]
        %v694 = vld [vmem:[%s285 + $0xa88] sm:$0xff]
        %v695 = vld [vmem:[%s285 + $0xa90] sm:$0xff]
        %v696 = vld [vmem:[%s285 + $0xa98] sm:$0xff]
        %v697 = vld [vmem:[%s285 + $0xaa0] sm:$0xff]
        %v698 = vld [vmem:[%s285 + $0xaa8] sm:$0xff]
        %v699 = vld [vmem:[%s285 + $0xab0] sm:$0xff]
        %v700 = vld [vmem:[%s285 + $0xab8] sm:$0xff]
        %v701 = vld [vmem:[%s285 + $0xac0] sm:$0xff]
        %v702 = vld [vmem:[%s285 + $0xac8] sm:$0xff]
        %v703 = vld [vmem:[%s285 + $0xad0] sm:$0xff]
        %v704 = vld [vmem:[%s285 + $0xad8] sm:$0xff]
        %v705 = vld [vmem:[%s285 + $0xae0] sm:$0xff]
        %v706 = vld [vmem:[%s285 + $0xae8] sm:$0xff]
        %v707 = vld [vmem:[%s285 + $0xaf0] sm:$0xff]
        %v708 = vld [vmem:[%s285 + $0xaf8] sm:$0xff]
        %v709 = vld [vmem:[%s285 + $0xb00] sm:$0xff]
        %v710 = vld [vmem:[%s285 + $0xb08] sm:$0xff]
        %v711 = vld [vmem:[%s285 + $0xb10] sm:$0xff]
        %v712 = vld [vmem:[%s285 + $0xb18] sm:$0xff]
        %v713 = vld [vmem:[%s285 + $0xb20] sm:$0xff]
        %v714 = vld [vmem:[%s285 + $0xb28] sm:$0xff]
        %v715 = vld [vmem:[%s285 + $0xb30] sm:$0xff]
        %v716 = vld [vmem:[%s285 + $0xb38] sm:$0xff]
        %v717 = vld [vmem:[%s285 + $0xb40] sm:$0xff]
        %v718 = vld [vmem:[%s285 + $0xb48] sm:$0xff]
        %v719 = vld [vmem:[%s285 + $0xb50] sm:$0xff]
        %v720 = vld [vmem:[%s285 + $0xb58] sm:$0xff]
        %v721 = vld [vmem:[%s285 + $0xb60] sm:$0xff]
        %v722 = vld [vmem:[%s285 + $0xb68] sm:$0xff]
        %v723 = vld [vmem:[%s285 + $0xb70] sm:$0xff]
        %v724 = vld [vmem:[%s285 + $0xb78] sm:$0xff]
        %v725 = vld [vmem:[%s285 + $0xb80] sm:$0xff]
        %v726 = vld [vmem:[%s285 + $0xb88] sm:$0xff]
        %v727 = vld [vmem:[%s285 + $0xb90] sm:$0xff]
        %v728 = vld [vmem:[%s285 + $0xb98] sm:$0xff]
        %v729 = vld [vmem:[%s285 + $0xba0] sm:$0xff]
        %v730 = vld [vmem:[%s285 + $0xba8] sm:$0xff]
        %v731 = vld [vmem:[%s285 + $0xbb0] sm:$0xff]
        %v732 = vld [vmem:[%s285 + $0xbb8] sm:$0xff]
        %v733 = vld [vmem:[%s285 + $0xbc0] sm:$0xff]
        %v734 = vld [vmem:[%s285 + $0xbc8] sm:$0xff]
        %v735 = vld [vmem:[%s285 + $0xbd0] sm:$0xff]
        %v736 = vld [vmem:[%s285 + $0xbd8] sm:$0xff]
        %v737 = vld [vmem:[%s285 + $0xbe0] sm:$0xff]
        %v738 = vld [vmem:[%s285 + $0xbe8] sm:$0xff]
        %v739 = vld [vmem:[%s285 + $0xbf0] sm:$0xff]
        %v740 = vld [vmem:[%s285 + $0xbf8] sm:$0xff]
        %v741 = vld [vmem:[%s285 + $0xc00] sm:$0xff]
        %v742 = vld [vmem:[%s285 + $0xc08] sm:$0xff]
        %v743 = vld [vmem:[%s285 + $0xc10] sm:$0xff]
        %v744 = vld [vmem:[%s285 + $0xc18] sm:$0xff]
        %v745 = vld [vmem:[%s285 + $0xc20] sm:$0xff]
        %v746 = vld [vmem:[%s285 + $0xc28] sm:$0xff]
        %v747 = vld [vmem:[%s285 + $0xc30] sm:$0xff]
        %v748 = vld [vmem:[%s285 + $0xc38] sm:$0xff]
        %v749 = vld [vmem:[%s285 + $0xc40] sm:$0xff]
        %v750 = vld [vmem:[%s285 + $0xc48] sm:$0xff]
        %v751 = vld [vmem:[%s285 + $0xc50] sm:$0xff]
        %v752 = vld [vmem:[%s285 + $0xc58] sm:$0xff]
        %v753 = vld [vmem:[%s285 + $0xc60] sm:$0xff]
        %v754 = vld [vmem:[%s285 + $0xc68] sm:$0xff]
        %v755 = vld [vmem:[%s285 + $0xc70] sm:$0xff]
        %v756 = vld [vmem:[%s285 + $0xc78] sm:$0xff]
        %v757 = vld [vmem:[%s285 + $0xc80] sm:$0xff]
        %v758 = vld [vmem:[%s285 + $0xc88] sm:$0xff]
        %v759 = vld [vmem:[%s285 + $0xc90] sm:$0xff]
        %v760 = vld [vmem:[%s285 + $0xc98] sm:$0xff]
        %v761 = vld [vmem:[%s285 + $0xca0] sm:$0xff]
        %v762 = vld [vmem:[%s285 + $0xca8] sm:$0xff]
        %v763 = vld [vmem:[%s285 + $0xcb0] sm:$0xff]
        %v764 = vld [vmem:[%s285 + $0xcb8] sm:$0xff]
        %v765 = vld [vmem:[%s285 + $0xcc0] sm:$0xff]
        %v766 = vld [vmem:[%s285 + $0xcc8] sm:$0xff]
        %v767 = vld [vmem:[%s285 + $0xcd0] sm:$0xff]
        %v768 = vld [vmem:[%s285 + $0xcd8] sm:$0xff]
        %v769 = vld [vmem:[%s285 + $0xce0] sm:$0xff]
        %v770 = vld [vmem:[%s285 + $0xce8] sm:$0xff]
        %v771 = vld [vmem:[%s285 + $0xcf0] sm:$0xff]
        %v772 = vld [vmem:[%s285 + $0xcf8] sm:$0xff]
        %v773 = vld [vmem:[%s285 + $0xd00] sm:$0xff]
        %v774 = vld [vmem:[%s285 + $0xd08] sm:$0xff]
        %v775 = vld [vmem:[%s285 + $0xd10] sm:$0xff]
        %v776 = vld [vmem:[%s285 + $0xd18] sm:$0xff]
        %v777 = vld [vmem:[%s285 + $0xd20] sm:$0xff]
        %v778 = vld [vmem:[%s285 + $0xd28] sm:$0xff]
        %v779 = vld [vmem:[%s285 + $0xd30] sm:$0xff]
        %v780 = vld [vmem:[%s285 + $0xd38] sm:$0xff]
        %v781 = vld [vmem:[%s285 + $0xd40] sm:$0xff]
        %v782 = vld [vmem:[%s285 + $0xd48] sm:$0xff]
        %v783 = vld [vmem:[%s285 + $0xd50] sm:$0xff]
        %v784 = vld [vmem:[%s285 + $0xd58] sm:$0xff]
        %v785 = vld [vmem:[%s285 + $0xd60] sm:$0xff]
        %v786 = vld [vmem:[%s285 + $0xd68] sm:$0xff]
        %v787 = vld [vmem:[%s285 + $0xd70] sm:$0xff]
        %v788 = vld [vmem:[%s285 + $0xd78] sm:$0xff]
        %v789 = vld [vmem:[%s285 + $0xd80] sm:$0xff]
        %v790 = vld [vmem:[%s285 + $0xd88] sm:$0xff]
        %v791 = vld [vmem:[%s285 + $0xd90] sm:$0xff]
        %v792 = vld [vmem:[%s285 + $0xd98] sm:$0xff]
        %v793 = vld [vmem:[%s285 + $0xda0] sm:$0xff]
        %v794 = vld [vmem:[%s285 + $0xda8] sm:$0xff]
        %v795 = vld [vmem:[%s285 + $0xdb0] sm:$0xff]
        %v796 = vld [vmem:[%s285 + $0xdb8] sm:$0xff]
        %v797 = vld [vmem:[%s285 + $0xdc0] sm:$0xff]
        %v798 = vld [vmem:[%s285 + $0xdc8] sm:$0xff]
        %v799 = vld [vmem:[%s285 + $0xdd0] sm:$0xff]
        %v800 = vld [vmem:[%s285 + $0xdd8] sm:$0xff]
        %v801 = vld [vmem:[%s285 + $0xde0] sm:$0xff]
        %v802 = vld [vmem:[%s285 + $0xde8] sm:$0xff]
        %v803 = vld [vmem:[%s285 + $0xdf0] sm:$0xff]
        %v804 = vld [vmem:[%s285 + $0xdf8] sm:$0xff]
        %v805 = vld [vmem:[%s285 + $0xe00] sm:$0xff]
        %v806 = vld [vmem:[%s285 + $0xe08] sm:$0xff]
        %v807 = vld [vmem:[%s285 + $0xe10] sm:$0xff]
        %v808 = vld [vmem:[%s285 + $0xe18] sm:$0xff]
        %v809 = vld [vmem:[%s285 + $0xe20] sm:$0xff]
        %v810 = vld [vmem:[%s285 + $0xe28] sm:$0xff]
        %v811 = vld [vmem:[%s285 + $0xe30] sm:$0xff]
        %v812 = vld [vmem:[%s285 + $0xe38] sm:$0xff]
        %v813 = vld [vmem:[%s285 + $0xe40] sm:$0xff]
        %v814 = vld [vmem:[%s285 + $0xe48] sm:$0xff]
        %v815 = vld [vmem:[%s285 + $0xe50] sm:$0xff]
        %v816 = vld [vmem:[%s285 + $0xe58] sm:$0xff]
        %v817 = vld [vmem:[%s285 + $0xe60] sm:$0xff]
        %v818 = vld [vmem:[%s285 + $0xe68] sm:$0xff]
        %v819 = vld [vmem:[%s285 + $0xe70] sm:$0xff]
        %v820 = vld [vmem:[%s285 + $0xe78] sm:$0xff]
        %v821 = vld [vmem:[%s285 + $0xe80] sm:$0xff]
        %v822 = vld [vmem:[%s285 + $0xe88] sm:$0xff]
        %v823 = vld [vmem:[%s285 + $0xe90] sm:$0xff]
        %v824 = vld [vmem:[%s285 + $0xe98] sm:$0xff]
        %v825 = vld [vmem:[%s285 + $0xea0] sm:$0xff]
        %v826 = vld [vmem:[%s285 + $0xea8] sm:$0xff]
        %v827 = vld [vmem:[%s285 + $0xeb0] sm:$0xff]
        %v828 = vld [vmem:[%s285 + $0xeb8] sm:$0xff]
        %v829 = vld [vmem:[%s285 + $0xec0] sm:$0xff]
        %v830 = vld [vmem:[%s285 + $0xec8] sm:$0xff]
        %v831 = vld [vmem:[%s285 + $0xed0] sm:$0xff]
        %v832 = vld [vmem:[%s285 + $0xed8] sm:$0xff]
        %v833 = vld [vmem:[%s285 + $0xee0] sm:$0xff]
        %v834 = vld [vmem:[%s285 + $0xee8] sm:$0xff]
        %v835 = vld [vmem:[%s285 + $0xef0] sm:$0xff]
        %v836 = vld [vmem:[%s285 + $0xef8] sm:$0xff]
        %v837 = vld [vmem:[%s285 + $0xf00] sm:$0xff]
        %v838 = vld [vmem:[%s285 + $0xf08] sm:$0xff]
        %v839 = vld [vmem:[%s285 + $0xf10] sm:$0xff]
        %v840 = vld [vmem:[%s285 + $0xf18] sm:$0xff]
        %v841 = vld [vmem:[%s285 + $0xf20] sm:$0xff]
        %v842 = vld [vmem:[%s285 + $0xf28] sm:$0xff]
        %v843 = vld [vmem:[%s285 + $0xf30] sm:$0xff]
        %v844 = vld [vmem:[%s285 + $0xf38] sm:$0xff]
        %v845 = vld [vmem:[%s285 + $0xf40] sm:$0xff]
        %v846 = vld [vmem:[%s285 + $0xf48] sm:$0xff]
        %v847 = vld [vmem:[%s285 + $0xf50] sm:$0xff]
        %v848 = vld [vmem:[%s285 + $0xf58] sm:$0xff]
        %v849 = vld [vmem:[%s285 + $0xf60] sm:$0xff]
        %v850 = vld [vmem:[%s285 + $0xf68] sm:$0xff]
        %v851 = vld [vmem:[%s285 + $0xf70] sm:$0xff]
        %v852 = vld [vmem:[%s285 + $0xf78] sm:$0xff]
        %v853 = vld [vmem:[%s285 + $0xf80] sm:$0xff]
        %v854 = vld [vmem:[%s285 + $0xf88] sm:$0xff]
        %v855 = vld [vmem:[%s285 + $0xf90] sm:$0xff]
        %v856 = vld [vmem:[%s285 + $0xf98] sm:$0xff]
        %v857 = vld [vmem:[%s285 + $0xfa0] sm:$0xff]
        %v858 = vld [vmem:[%s285 + $0xfa8] sm:$0xff]
        %v859 = vld [vmem:[%s285 + $0xfb0] sm:$0xff]
        %v860 = vld [vmem:[%s285 + $0xfb8] sm:$0xff]
        %v861 = vld [vmem:[%s285 + $0xfc0] sm:$0xff]
        %v862 = vld [vmem:[%s285 + $0xfc8] sm:$0xff]
        %v863 = vld [vmem:[%s285 + $0xfd0] sm:$0xff]
        %v864 = vld [vmem:[%s285 + $0xfd8] sm:$0xff]
        %v865 = vld [vmem:[%s285 + $0xfe0] sm:$0xff]
        %v866 = vld [vmem:[%s285 + $0xfe8] sm:$0xff]
        %v867 = vld [vmem:[%s285 + $0xff0] sm:$0xff]
        %v868 = vld [vmem:[%s285 + $0xff8] sm:$0xff]
        %870 = vst [vmem:[#allocation1] ss:$9 sm:$0xff] %v355
        %v871 = vld [vmem:[#allocation1] sm:$0xff]
        %v872 = vld [vmem:[#allocation1 + $0x9] sm:$0xff]
        %v873 = vld [vmem:[#allocation1 + $0x12] sm:$0xff]
        %v874 = vld [vmem:[#allocation1 + $0x1b] sm:$0xff]
        %v875 = vld [vmem:[#allocation1 + $0x24] sm:$0xff]
        %v876 = vld [vmem:[#allocation1 + $0x2d] sm:$0xff]
        %v877 = vld [vmem:[#allocation1 + $0x36] sm:$0xff]
        %v878 = vld [vmem:[#allocation1 + $0x3f] sm:$0xff]
        %880 = vst [vmem:[#allocation1] ss:$9 sm:$0xff] %v356
        %v881 = vld [vmem:[#allocation1] sm:$0xff]
        %v882 = vld [vmem:[#allocation1 + $0x9] sm:$0xff]
        %v883 = vld [vmem:[#allocation1 + $0x12] sm:$0xff]
        %v884 = vld [vmem:[#allocation1 + $0x1b] sm:$0xff]
        %v885 = vld [vmem:[#allocation1 + $0x24] sm:$0xff]
        %v886 = vld [vmem:[#allocation1 + $0x2d] sm:$0xff]
        %v887 = vld [vmem:[#allocation1 + $0x36] sm:$0xff]
        %v888 = vld [vmem:[#allocation1 + $0x3f] sm:$0xff]
        %v1417 = vunpack.c.l.b16 %v357
        %v1418 = vunpack.c.h.b16 %v357
        %v1419 = vunpack.c.l.b16 %v358
        %v1420 = vunpack.c.h.b16 %v358
        %v1421 = vunpack.c.l.b16 %v359
        %v1422 = vunpack.c.h.b16 %v359
        %v1423 = vunpack.c.l.b16 %v360
        %v1424 = vunpack.c.h.b16 %v360
        %v1425 = vunpack.c.l.b16 %v361
        %v1426 = vunpack.c.h.b16 %v361
        %v1427 = vunpack.c.l.b16 %v362
        %v1428 = vunpack.c.h.b16 %v362
        %v1429 = vunpack.c.l.b16 %v363
        %v1430 = vunpack.c.h.b16 %v363
        %v1431 = vunpack.c.l.b16 %v364
        %v1432 = vunpack.c.h.b16 %v364
        %v1433 = vunpack.c.l.b16 %v365
        %v1434 = vunpack.c.h.b16 %v365
        %v1435 = vunpack.c.l.b16 %v366
        %v1436 = vunpack.c.h.b16 %v366
        %v1437 = vunpack.c.l.b16 %v367
        %v1438 = vunpack.c.h.b16 %v367
        %v1439 = vunpack.c.l.b16 %v368
        %v1440 = vunpack.c.h.b16 %v368
        %v1441 = vunpack.c.l.b16 %v369
        %v1442 = vunpack.c.h.b16 %v369
        %v1443 = vunpack.c.l.b16 %v370
        %v1444 = vunpack.c.h.b16 %v370
        %v1445 = vunpack.c.l.b16 %v371
        %v1446 = vunpack.c.h.b16 %v371
        %v1447 = vunpack.c.l.b16 %v372
        %v1448 = vunpack.c.h.b16 %v372
        %v1449 = vunpack.c.l.b16 %v373
        %v1450 = vunpack.c.h.b16 %v373
        %v1451 = vunpack.c.l.b16 %v374
        %v1452 = vunpack.c.h.b16 %v374
        %v1453 = vunpack.c.l.b16 %v375
        %v1454 = vunpack.c.h.b16 %v375
        %v1455 = vunpack.c.l.b16 %v376
        %v1456 = vunpack.c.h.b16 %v376
        %v1457 = vunpack.c.l.b16 %v377
        %v1458 = vunpack.c.h.b16 %v377
        %v1459 = vunpack.c.l.b16 %v378
        %v1460 = vunpack.c.h.b16 %v378
        %v1461 = vunpack.c.l.b16 %v379
        %v1462 = vunpack.c.h.b16 %v379
        %v1463 = vunpack.c.l.b16 %v380
        %v1464 = vunpack.c.h.b16 %v380
        %v1465 = vunpack.c.l.b16 %v381
        %v1466 = vunpack.c.h.b16 %v381
        %v1467 = vunpack.c.l.b16 %v382
        %v1468 = vunpack.c.h.b16 %v382
        %v1469 = vunpack.c.l.b16 %v383
        %v1470 = vunpack.c.h.b16 %v383
        %v1471 = vunpack.c.l.b16 %v384
        %v1472 = vunpack.c.h.b16 %v384
        %v1473 = vunpack.c.l.b16 %v385
        %v1474 = vunpack.c.h.b16 %v385
        %v1475 = vunpack.c.l.b16 %v386
        %v1476 = vunpack.c.h.b16 %v386
        %v1477 = vunpack.c.l.b16 %v387
        %v1478 = vunpack.c.h.b16 %v387
        %v1479 = vunpack.c.l.b16 %v388
        %v1480 = vunpack.c.h.b16 %v388
        %v1481 = vunpack.c.l.b16 %v389
        %v1482 = vunpack.c.h.b16 %v389
        %v1483 = vunpack.c.l.b16 %v390
        %v1484 = vunpack.c.h.b16 %v390
        %v1485 = vunpack.c.l.b16 %v391
        %v1486 = vunpack.c.h.b16 %v391
        %v1487 = vunpack.c.l.b16 %v392
        %v1488 = vunpack.c.h.b16 %v392
        %v1489 = vunpack.c.l.b16 %v393
        %v1490 = vunpack.c.h.b16 %v393
        %v1491 = vunpack.c.l.b16 %v394
        %v1492 = vunpack.c.h.b16 %v394
        %v1493 = vunpack.c.l.b16 %v395
        %v1494 = vunpack.c.h.b16 %v395
        %v1495 = vunpack.c.l.b16 %v396
        %v1496 = vunpack.c.h.b16 %v396
        %v1497 = vunpack.c.l.b16 %v397
        %v1498 = vunpack.c.h.b16 %v397
        %v1499 = vunpack.c.l.b16 %v398
        %v1500 = vunpack.c.h.b16 %v398
        %v1501 = vunpack.c.l.b16 %v399
        %v1502 = vunpack.c.h.b16 %v399
        %v1503 = vunpack.c.l.b16 %v400
        %v1504 = vunpack.c.h.b16 %v400
        %v1505 = vunpack.c.l.b16 %v401
        %v1506 = vunpack.c.h.b16 %v401
        %v1507 = vunpack.c.l.b16 %v402
        %v1508 = vunpack.c.h.b16 %v402
        %v1509 = vunpack.c.l.b16 %v403
        %v1510 = vunpack.c.h.b16 %v403
        %v1511 = vunpack.c.l.b16 %v404
        %v1512 = vunpack.c.h.b16 %v404
        %v1513 = vunpack.c.l.b16 %v405
        %v1514 = vunpack.c.h.b16 %v405
        %v1515 = vunpack.c.l.b16 %v406
        %v1516 = vunpack.c.h.b16 %v406
        %v1517 = vunpack.c.l.b16 %v407
        %v1518 = vunpack.c.h.b16 %v407
        %v1519 = vunpack.c.l.b16 %v408
        %v1520 = vunpack.c.h.b16 %v408
        %v1521 = vunpack.c.l.b16 %v409
        %v1522 = vunpack.c.h.b16 %v409
        %v1523 = vunpack.c.l.b16 %v410
        %v1524 = vunpack.c.h.b16 %v410
        %v1525 = vunpack.c.l.b16 %v411
        %v1526 = vunpack.c.h.b16 %v411
        %v1527 = vunpack.c.l.b16 %v412
        %v1528 = vunpack.c.h.b16 %v412
        %v1529 = vunpack.c.l.b16 %v413
        %v1530 = vunpack.c.h.b16 %v413
        %v1531 = vunpack.c.l.b16 %v414
        %v1532 = vunpack.c.h.b16 %v414
        %v1533 = vunpack.c.l.b16 %v415
        %v1534 = vunpack.c.h.b16 %v415
        %v1535 = vunpack.c.l.b16 %v416
        %v1536 = vunpack.c.h.b16 %v416
        %v1537 = vunpack.c.l.b16 %v417
        %v1538 = vunpack.c.h.b16 %v417
        %v1539 = vunpack.c.l.b16 %v418
        %v1540 = vunpack.c.h.b16 %v418
        %v1541 = vunpack.c.l.b16 %v419
        %v1542 = vunpack.c.h.b16 %v419
        %v1543 = vunpack.c.l.b16 %v420
        %v1544 = vunpack.c.h.b16 %v420
        %v1545 = vunpack.c.l.b16 %v421
        %v1546 = vunpack.c.h.b16 %v421
        %v1547 = vunpack.c.l.b16 %v422
        %v1548 = vunpack.c.h.b16 %v422
        %v1549 = vunpack.c.l.b16 %v423
        %v1550 = vunpack.c.h.b16 %v423
        %v1551 = vunpack.c.l.b16 %v424
        %v1552 = vunpack.c.h.b16 %v424
        %v1553 = vunpack.c.l.b16 %v425
        %v1554 = vunpack.c.h.b16 %v425
        %v1555 = vunpack.c.l.b16 %v426
        %v1556 = vunpack.c.h.b16 %v426
        %v1557 = vunpack.c.l.b16 %v427
        %v1558 = vunpack.c.h.b16 %v427
        %v1559 = vunpack.c.l.b16 %v428
        %v1560 = vunpack.c.h.b16 %v428
        %v1561 = vunpack.c.l.b16 %v429
        %v1562 = vunpack.c.h.b16 %v429
        %v1563 = vunpack.c.l.b16 %v430
        %v1564 = vunpack.c.h.b16 %v430
        %v1565 = vunpack.c.l.b16 %v431
        %v1566 = vunpack.c.h.b16 %v431
        %v1567 = vunpack.c.l.b16 %v432
        %v1568 = vunpack.c.h.b16 %v432
        %v1569 = vunpack.c.l.b16 %v433
        %v1570 = vunpack.c.h.b16 %v433
        %v1571 = vunpack.c.l.b16 %v434
        %v1572 = vunpack.c.h.b16 %v434
        %v1573 = vunpack.c.l.b16 %v435
        %v1574 = vunpack.c.h.b16 %v435
        %v1575 = vunpack.c.l.b16 %v436
        %v1576 = vunpack.c.h.b16 %v436
        %v1577 = vunpack.c.l.b16 %v437
        %v1578 = vunpack.c.h.b16 %v437
        %v1579 = vunpack.c.l.b16 %v438
        %v1580 = vunpack.c.h.b16 %v438
        %v1581 = vunpack.c.l.b16 %v439
        %v1582 = vunpack.c.h.b16 %v439
        %v1583 = vunpack.c.l.b16 %v440
        %v1584 = vunpack.c.h.b16 %v440
        %v1585 = vunpack.c.l.b16 %v441
        %v1586 = vunpack.c.h.b16 %v441
        %v1587 = vunpack.c.l.b16 %v442
        %v1588 = vunpack.c.h.b16 %v442
        %v1589 = vunpack.c.l.b16 %v443
        %v1590 = vunpack.c.h.b16 %v443
        %v1591 = vunpack.c.l.b16 %v444
        %v1592 = vunpack.c.h.b16 %v444
        %v1593 = vunpack.c.l.b16 %v445
        %v1594 = vunpack.c.h.b16 %v445
        %v1595 = vunpack.c.l.b16 %v446
        %v1596 = vunpack.c.h.b16 %v446
        %v1597 = vunpack.c.l.b16 %v447
        %v1598 = vunpack.c.h.b16 %v447
        %v1599 = vunpack.c.l.b16 %v448
        %v1600 = vunpack.c.h.b16 %v448
        %v1601 = vunpack.c.l.b16 %v449
        %v1602 = vunpack.c.h.b16 %v449
        %v1603 = vunpack.c.l.b16 %v450
        %v1604 = vunpack.c.h.b16 %v450
        %v1605 = vunpack.c.l.b16 %v451
        %v1606 = vunpack.c.h.b16 %v451
        %v1607 = vunpack.c.l.b16 %v452
        %v1608 = vunpack.c.h.b16 %v452
        %v1609 = vunpack.c.l.b16 %v453
        %v1610 = vunpack.c.h.b16 %v453
        %v1611 = vunpack.c.l.b16 %v454
        %v1612 = vunpack.c.h.b16 %v454
        %v1613 = vunpack.c.l.b16 %v455
        %v1614 = vunpack.c.h.b16 %v455
        %v1615 = vunpack.c.l.b16 %v456
        %v1616 = vunpack.c.h.b16 %v456
        %v1617 = vunpack.c.l.b16 %v457
        %v1618 = vunpack.c.h.b16 %v457
        %v1619 = vunpack.c.l.b16 %v458
        %v1620 = vunpack.c.h.b16 %v458
        %v1621 = vunpack.c.l.b16 %v459
        %v1622 = vunpack.c.h.b16 %v459
        %v1623 = vunpack.c.l.b16 %v460
        %v1624 = vunpack.c.h.b16 %v460
        %v1625 = vunpack.c.l.b16 %v461
        %v1626 = vunpack.c.h.b16 %v461
        %v1627 = vunpack.c.l.b16 %v462
        %v1628 = vunpack.c.h.b16 %v462
        %v1629 = vunpack.c.l.b16 %v463
        %v1630 = vunpack.c.h.b16 %v463
        %v1631 = vunpack.c.l.b16 %v464
        %v1632 = vunpack.c.h.b16 %v464
        %v1633 = vunpack.c.l.b16 %v465
        %v1634 = vunpack.c.h.b16 %v465
        %v1635 = vunpack.c.l.b16 %v466
        %v1636 = vunpack.c.h.b16 %v466
        %v1637 = vunpack.c.l.b16 %v467
        %v1638 = vunpack.c.h.b16 %v467
        %v1639 = vunpack.c.l.b16 %v468
        %v1640 = vunpack.c.h.b16 %v468
        %v1641 = vunpack.c.l.b16 %v469
        %v1642 = vunpack.c.h.b16 %v469
        %v1643 = vunpack.c.l.b16 %v470
        %v1644 = vunpack.c.h.b16 %v470
        %v1645 = vunpack.c.l.b16 %v471
        %v1646 = vunpack.c.h.b16 %v471
        %v1647 = vunpack.c.l.b16 %v472
        %v1648 = vunpack.c.h.b16 %v472
        %v1649 = vunpack.c.l.b16 %v473
        %v1650 = vunpack.c.h.b16 %v473
        %v1651 = vunpack.c.l.b16 %v474
        %v1652 = vunpack.c.h.b16 %v474
        %v1653 = vunpack.c.l.b16 %v475
        %v1654 = vunpack.c.h.b16 %v475
        %v1655 = vunpack.c.l.b16 %v476
        %v1656 = vunpack.c.h.b16 %v476
        %v1657 = vunpack.c.l.b16 %v477
        %v1658 = vunpack.c.h.b16 %v477
        %v1659 = vunpack.c.l.b16 %v478
        %v1660 = vunpack.c.h.b16 %v478
        %v1661 = vunpack.c.l.b16 %v479
        %v1662 = vunpack.c.h.b16 %v479
        %v1663 = vunpack.c.l.b16 %v480
        %v1664 = vunpack.c.h.b16 %v480
        %v1665 = vunpack.c.l.b16 %v481
        %v1666 = vunpack.c.h.b16 %v481
        %v1667 = vunpack.c.l.b16 %v482
        %v1668 = vunpack.c.h.b16 %v482
        %v1669 = vunpack.c.l.b16 %v483
        %v1670 = vunpack.c.h.b16 %v483
        %v1671 = vunpack.c.l.b16 %v484
        %v1672 = vunpack.c.h.b16 %v484
        %v1673 = vunpack.c.l.b16 %v485
        %v1674 = vunpack.c.h.b16 %v485
        %v1675 = vunpack.c.l.b16 %v486
        %v1676 = vunpack.c.h.b16 %v486
        %v1677 = vunpack.c.l.b16 %v487
        %v1678 = vunpack.c.h.b16 %v487
        %v1679 = vunpack.c.l.b16 %v488
        %v1680 = vunpack.c.h.b16 %v488
        %v1681 = vunpack.c.l.b16 %v489
        %v1682 = vunpack.c.h.b16 %v489
        %v1683 = vunpack.c.l.b16 %v490
        %v1684 = vunpack.c.h.b16 %v490
        %v1685 = vunpack.c.l.b16 %v491
        %v1686 = vunpack.c.h.b16 %v491
        %v1687 = vunpack.c.l.b16 %v492
        %v1688 = vunpack.c.h.b16 %v492
        %v1689 = vunpack.c.l.b16 %v493
        %v1690 = vunpack.c.h.b16 %v493
        %v1691 = vunpack.c.l.b16 %v494
        %v1692 = vunpack.c.h.b16 %v494
        %v1693 = vunpack.c.l.b16 %v495
        %v1694 = vunpack.c.h.b16 %v495
        %v1695 = vunpack.c.l.b16 %v496
        %v1696 = vunpack.c.h.b16 %v496
        %v1697 = vunpack.c.l.b16 %v497
        %v1698 = vunpack.c.h.b16 %v497
        %v1699 = vunpack.c.l.b16 %v498
        %v1700 = vunpack.c.h.b16 %v498
        %v1701 = vunpack.c.l.b16 %v499
        %v1702 = vunpack.c.h.b16 %v499
        %v1703 = vunpack.c.l.b16 %v500
        %v1704 = vunpack.c.h.b16 %v500
        %v1705 = vunpack.c.l.b16 %v501
        %v1706 = vunpack.c.h.b16 %v501
        %v1707 = vunpack.c.l.b16 %v502
        %v1708 = vunpack.c.h.b16 %v502
        %v1709 = vunpack.c.l.b16 %v503
        %v1710 = vunpack.c.h.b16 %v503
        %v1711 = vunpack.c.l.b16 %v504
        %v1712 = vunpack.c.h.b16 %v504
        %v1713 = vunpack.c.l.b16 %v505
        %v1714 = vunpack.c.h.b16 %v505
        %v1715 = vunpack.c.l.b16 %v506
        %v1716 = vunpack.c.h.b16 %v506
        %v1717 = vunpack.c.l.b16 %v507
        %v1718 = vunpack.c.h.b16 %v507
        %v1719 = vunpack.c.l.b16 %v508
        %v1720 = vunpack.c.h.b16 %v508
        %v1721 = vunpack.c.l.b16 %v509
        %v1722 = vunpack.c.h.b16 %v509
        %v1723 = vunpack.c.l.b16 %v510
        %v1724 = vunpack.c.h.b16 %v510
        %v1725 = vunpack.c.l.b16 %v511
        %v1726 = vunpack.c.h.b16 %v511
        %v1727 = vunpack.c.l.b16 %v512
        %v1728 = vunpack.c.h.b16 %v512
        %v1729 = vunpack.c.l.b16 %v513
        %v1730 = vunpack.c.h.b16 %v513
        %v1731 = vunpack.c.l.b16 %v514
        %v1732 = vunpack.c.h.b16 %v514
        %v1733 = vunpack.c.l.b16 %v515
        %v1734 = vunpack.c.h.b16 %v515
        %v1735 = vunpack.c.l.b16 %v516
        %v1736 = vunpack.c.h.b16 %v516
        %v1737 = vunpack.c.l.b16 %v517
        %v1738 = vunpack.c.h.b16 %v517
        %v1739 = vunpack.c.l.b16 %v518
        %v1740 = vunpack.c.h.b16 %v518
        %v1741 = vunpack.c.l.b16 %v519
        %v1742 = vunpack.c.h.b16 %v519
        %v1743 = vunpack.c.l.b16 %v520
        %v1744 = vunpack.c.h.b16 %v520
        %v1745 = vunpack.c.l.b16 %v521
        %v1746 = vunpack.c.h.b16 %v521
        %v1747 = vunpack.c.l.b16 %v522
        %v1748 = vunpack.c.h.b16 %v522
        %v1749 = vunpack.c.l.b16 %v523
        %v1750 = vunpack.c.h.b16 %v523
        %v1751 = vunpack.c.l.b16 %v524
        %v1752 = vunpack.c.h.b16 %v524
        %v1753 = vunpack.c.l.b16 %v525
        %v1754 = vunpack.c.h.b16 %v525
        %v1755 = vunpack.c.l.b16 %v526
        %v1756 = vunpack.c.h.b16 %v526
        %v1757 = vunpack.c.l.b16 %v527
        %v1758 = vunpack.c.h.b16 %v527
        %v1759 = vunpack.c.l.b16 %v528
        %v1760 = vunpack.c.h.b16 %v528
        %v1761 = vunpack.c.l.b16 %v529
        %v1762 = vunpack.c.h.b16 %v529
        %v1763 = vunpack.c.l.b16 %v530
        %v1764 = vunpack.c.h.b16 %v530
        %v1765 = vunpack.c.l.b16 %v531
        %v1766 = vunpack.c.h.b16 %v531
        %v1767 = vunpack.c.l.b16 %v532
        %v1768 = vunpack.c.h.b16 %v532
        %v1769 = vunpack.c.l.b16 %v533
        %v1770 = vunpack.c.h.b16 %v533
        %v1771 = vunpack.c.l.b16 %v534
        %v1772 = vunpack.c.h.b16 %v534
        %v1773 = vunpack.c.l.b16 %v535
        %v1774 = vunpack.c.h.b16 %v535
        %v1775 = vunpack.c.l.b16 %v536
        %v1776 = vunpack.c.h.b16 %v536
        %v1777 = vunpack.c.l.b16 %v537
        %v1778 = vunpack.c.h.b16 %v537
        %v1779 = vunpack.c.l.b16 %v538
        %v1780 = vunpack.c.h.b16 %v538
        %v1781 = vunpack.c.l.b16 %v539
        %v1782 = vunpack.c.h.b16 %v539
        %v1783 = vunpack.c.l.b16 %v540
        %v1784 = vunpack.c.h.b16 %v540
        %v1785 = vunpack.c.l.b16 %v541
        %v1786 = vunpack.c.h.b16 %v541
        %v1787 = vunpack.c.l.b16 %v542
        %v1788 = vunpack.c.h.b16 %v542
        %v1789 = vunpack.c.l.b16 %v543
        %v1790 = vunpack.c.h.b16 %v543
        %v1791 = vunpack.c.l.b16 %v544
        %v1792 = vunpack.c.h.b16 %v544
        %v1793 = vunpack.c.l.b16 %v545
        %v1794 = vunpack.c.h.b16 %v545
        %v1795 = vunpack.c.l.b16 %v546
        %v1796 = vunpack.c.h.b16 %v546
        %v1797 = vunpack.c.l.b16 %v547
        %v1798 = vunpack.c.h.b16 %v547
        %v1799 = vunpack.c.l.b16 %v548
        %v1800 = vunpack.c.h.b16 %v548
        %v1801 = vunpack.c.l.b16 %v549
        %v1802 = vunpack.c.h.b16 %v549
        %v1803 = vunpack.c.l.b16 %v550
        %v1804 = vunpack.c.h.b16 %v550
        %v1805 = vunpack.c.l.b16 %v551
        %v1806 = vunpack.c.h.b16 %v551
        %v1807 = vunpack.c.l.b16 %v552
        %v1808 = vunpack.c.h.b16 %v552
        %v1809 = vunpack.c.l.b16 %v553
        %v1810 = vunpack.c.h.b16 %v553
        %v1811 = vunpack.c.l.b16 %v554
        %v1812 = vunpack.c.h.b16 %v554
        %v1813 = vunpack.c.l.b16 %v555
        %v1814 = vunpack.c.h.b16 %v555
        %v1815 = vunpack.c.l.b16 %v556
        %v1816 = vunpack.c.h.b16 %v556
        %v1817 = vunpack.c.l.b16 %v557
        %v1818 = vunpack.c.h.b16 %v557
        %v1819 = vunpack.c.l.b16 %v558
        %v1820 = vunpack.c.h.b16 %v558
        %v1821 = vunpack.c.l.b16 %v559
        %v1822 = vunpack.c.h.b16 %v559
        %v1823 = vunpack.c.l.b16 %v560
        %v1824 = vunpack.c.h.b16 %v560
        %v1825 = vunpack.c.l.b16 %v561
        %v1826 = vunpack.c.h.b16 %v561
        %v1827 = vunpack.c.l.b16 %v562
        %v1828 = vunpack.c.h.b16 %v562
        %v1829 = vunpack.c.l.b16 %v563
        %v1830 = vunpack.c.h.b16 %v563
        %v1831 = vunpack.c.l.b16 %v564
        %v1832 = vunpack.c.h.b16 %v564
        %v1833 = vunpack.c.l.b16 %v565
        %v1834 = vunpack.c.h.b16 %v565
        %v1835 = vunpack.c.l.b16 %v566
        %v1836 = vunpack.c.h.b16 %v566
        %v1837 = vunpack.c.l.b16 %v567
        %v1838 = vunpack.c.h.b16 %v567
        %v1839 = vunpack.c.l.b16 %v568
        %v1840 = vunpack.c.h.b16 %v568
        %v1841 = vunpack.c.l.b16 %v569
        %v1842 = vunpack.c.h.b16 %v569
        %v1843 = vunpack.c.l.b16 %v570
        %v1844 = vunpack.c.h.b16 %v570
        %v1845 = vunpack.c.l.b16 %v571
        %v1846 = vunpack.c.h.b16 %v571
        %v1847 = vunpack.c.l.b16 %v572
        %v1848 = vunpack.c.h.b16 %v572
        %v1849 = vunpack.c.l.b16 %v573
        %v1850 = vunpack.c.h.b16 %v573
        %v1851 = vunpack.c.l.b16 %v574
        %v1852 = vunpack.c.h.b16 %v574
        %v1853 = vunpack.c.l.b16 %v575
        %v1854 = vunpack.c.h.b16 %v575
        %v1855 = vunpack.c.l.b16 %v576
        %v1856 = vunpack.c.h.b16 %v576
        %v1857 = vunpack.c.l.b16 %v577
        %v1858 = vunpack.c.h.b16 %v577
        %v1859 = vunpack.c.l.b16 %v578
        %v1860 = vunpack.c.h.b16 %v578
        %v1861 = vunpack.c.l.b16 %v579
        %v1862 = vunpack.c.h.b16 %v579
        %v1863 = vunpack.c.l.b16 %v580
        %v1864 = vunpack.c.h.b16 %v580
        %v1865 = vunpack.c.l.b16 %v581
        %v1866 = vunpack.c.h.b16 %v581
        %v1867 = vunpack.c.l.b16 %v582
        %v1868 = vunpack.c.h.b16 %v582
        %v1869 = vunpack.c.l.b16 %v583
        %v1870 = vunpack.c.h.b16 %v583
        %v1871 = vunpack.c.l.b16 %v584
        %v1872 = vunpack.c.h.b16 %v584
        %v1873 = vunpack.c.l.b16 %v585
        %v1874 = vunpack.c.h.b16 %v585
        %v1875 = vunpack.c.l.b16 %v586
        %v1876 = vunpack.c.h.b16 %v586
        %v1877 = vunpack.c.l.b16 %v587
        %v1878 = vunpack.c.h.b16 %v587
        %v1879 = vunpack.c.l.b16 %v588
        %v1880 = vunpack.c.h.b16 %v588
        %v1881 = vunpack.c.l.b16 %v589
        %v1882 = vunpack.c.h.b16 %v589
        %v1883 = vunpack.c.l.b16 %v590
        %v1884 = vunpack.c.h.b16 %v590
        %v1885 = vunpack.c.l.b16 %v591
        %v1886 = vunpack.c.h.b16 %v591
        %v1887 = vunpack.c.l.b16 %v592
        %v1888 = vunpack.c.h.b16 %v592
        %v1889 = vunpack.c.l.b16 %v593
        %v1890 = vunpack.c.h.b16 %v593
        %v1891 = vunpack.c.l.b16 %v594
        %v1892 = vunpack.c.h.b16 %v594
        %v1893 = vunpack.c.l.b16 %v595
        %v1894 = vunpack.c.h.b16 %v595
        %v1895 = vunpack.c.l.b16 %v596
        %v1896 = vunpack.c.h.b16 %v596
        %v1897 = vunpack.c.l.b16 %v597
        %v1898 = vunpack.c.h.b16 %v597
        %v1899 = vunpack.c.l.b16 %v598
        %v1900 = vunpack.c.h.b16 %v598
        %v1901 = vunpack.c.l.b16 %v599
        %v1902 = vunpack.c.h.b16 %v599
        %v1903 = vunpack.c.l.b16 %v600
        %v1904 = vunpack.c.h.b16 %v600
        %v1905 = vunpack.c.l.b16 %v601
        %v1906 = vunpack.c.h.b16 %v601
        %v1907 = vunpack.c.l.b16 %v602
        %v1908 = vunpack.c.h.b16 %v602
        %v1909 = vunpack.c.l.b16 %v603
        %v1910 = vunpack.c.h.b16 %v603
        %v1911 = vunpack.c.l.b16 %v604
        %v1912 = vunpack.c.h.b16 %v604
        %v1913 = vunpack.c.l.b16 %v605
        %v1914 = vunpack.c.h.b16 %v605
        %v1915 = vunpack.c.l.b16 %v606
        %v1916 = vunpack.c.h.b16 %v606
        %v1917 = vunpack.c.l.b16 %v607
        %v1918 = vunpack.c.h.b16 %v607
        %v1919 = vunpack.c.l.b16 %v608
        %v1920 = vunpack.c.h.b16 %v608
        %v1921 = vunpack.c.l.b16 %v609
        %v1922 = vunpack.c.h.b16 %v609
        %v1923 = vunpack.c.l.b16 %v610
        %v1924 = vunpack.c.h.b16 %v610
        %v1925 = vunpack.c.l.b16 %v611
        %v1926 = vunpack.c.h.b16 %v611
        %v1927 = vunpack.c.l.b16 %v612
        %v1928 = vunpack.c.h.b16 %v612
        %v1929 = vunpack.c.l.b16 %v613
        %v1930 = vunpack.c.h.b16 %v613
        %v1931 = vunpack.c.l.b16 %v614
        %v1932 = vunpack.c.h.b16 %v614
        %v1933 = vunpack.c.l.b16 %v615
        %v1934 = vunpack.c.h.b16 %v615
        %v1935 = vunpack.c.l.b16 %v616
        %v1936 = vunpack.c.h.b16 %v616
        %v1937 = vunpack.c.l.b16 %v617
        %v1938 = vunpack.c.h.b16 %v617
        %v1939 = vunpack.c.l.b16 %v618
        %v1940 = vunpack.c.h.b16 %v618
        %v1941 = vunpack.c.l.b16 %v619
        %v1942 = vunpack.c.h.b16 %v619
        %v1943 = vunpack.c.l.b16 %v620
        %v1944 = vunpack.c.h.b16 %v620
        %v1945 = vunpack.c.l.b16 %v621
        %v1946 = vunpack.c.h.b16 %v621
        %v1947 = vunpack.c.l.b16 %v622
        %v1948 = vunpack.c.h.b16 %v622
        %v1949 = vunpack.c.l.b16 %v623
        %v1950 = vunpack.c.h.b16 %v623
        %v1951 = vunpack.c.l.b16 %v624
        %v1952 = vunpack.c.h.b16 %v624
        %v1953 = vunpack.c.l.b16 %v625
        %v1954 = vunpack.c.h.b16 %v625
        %v1955 = vunpack.c.l.b16 %v626
        %v1956 = vunpack.c.h.b16 %v626
        %v1957 = vunpack.c.l.b16 %v627
        %v1958 = vunpack.c.h.b16 %v627
        %v1959 = vunpack.c.l.b16 %v628
        %v1960 = vunpack.c.h.b16 %v628
        %v1961 = vunpack.c.l.b16 %v629
        %v1962 = vunpack.c.h.b16 %v629
        %v1963 = vunpack.c.l.b16 %v630
        %v1964 = vunpack.c.h.b16 %v630
        %v1965 = vunpack.c.l.b16 %v631
        %v1966 = vunpack.c.h.b16 %v631
        %v1967 = vunpack.c.l.b16 %v632
        %v1968 = vunpack.c.h.b16 %v632
        %v1969 = vunpack.c.l.b16 %v633
        %v1970 = vunpack.c.h.b16 %v633
        %v1971 = vunpack.c.l.b16 %v634
        %v1972 = vunpack.c.h.b16 %v634
        %v1973 = vunpack.c.l.b16 %v635
        %v1974 = vunpack.c.h.b16 %v635
        %v1975 = vunpack.c.l.b16 %v636
        %v1976 = vunpack.c.h.b16 %v636
        %v1977 = vunpack.c.l.b16 %v637
        %v1978 = vunpack.c.h.b16 %v637
        %v1979 = vunpack.c.l.b16 %v638
        %v1980 = vunpack.c.h.b16 %v638
        %v1981 = vunpack.c.l.b16 %v639
        %v1982 = vunpack.c.h.b16 %v639
        %v1983 = vunpack.c.l.b16 %v640
        %v1984 = vunpack.c.h.b16 %v640
        %v1985 = vunpack.c.l.b16 %v641
        %v1986 = vunpack.c.h.b16 %v641
        %v1987 = vunpack.c.l.b16 %v642
        %v1988 = vunpack.c.h.b16 %v642
        %v1989 = vunpack.c.l.b16 %v643
        %v1990 = vunpack.c.h.b16 %v643
        %v1991 = vunpack.c.l.b16 %v644
        %v1992 = vunpack.c.h.b16 %v644
        %v1993 = vunpack.c.l.b16 %v645
        %v1994 = vunpack.c.h.b16 %v645
        %v1995 = vunpack.c.l.b16 %v646
        %v1996 = vunpack.c.h.b16 %v646
        %v1997 = vunpack.c.l.b16 %v647
        %v1998 = vunpack.c.h.b16 %v647
        %v1999 = vunpack.c.l.b16 %v648
        %v2000 = vunpack.c.h.b16 %v648
        %v2001 = vunpack.c.l.b16 %v649
        %v2002 = vunpack.c.h.b16 %v649
        %v2003 = vunpack.c.l.b16 %v650
        %v2004 = vunpack.c.h.b16 %v650
        %v2005 = vunpack.c.l.b16 %v651
        %v2006 = vunpack.c.h.b16 %v651
        %v2007 = vunpack.c.l.b16 %v652
        %v2008 = vunpack.c.h.b16 %v652
        %v2009 = vunpack.c.l.b16 %v653
        %v2010 = vunpack.c.h.b16 %v653
        %v2011 = vunpack.c.l.b16 %v654
        %v2012 = vunpack.c.h.b16 %v654
        %v2013 = vunpack.c.l.b16 %v655
        %v2014 = vunpack.c.h.b16 %v655
        %v2015 = vunpack.c.l.b16 %v656
        %v2016 = vunpack.c.h.b16 %v656
        %v2017 = vunpack.c.l.b16 %v657
        %v2018 = vunpack.c.h.b16 %v657
        %v2019 = vunpack.c.l.b16 %v658
        %v2020 = vunpack.c.h.b16 %v658
        %v2021 = vunpack.c.l.b16 %v659
        %v2022 = vunpack.c.h.b16 %v659
        %v2023 = vunpack.c.l.b16 %v660
        %v2024 = vunpack.c.h.b16 %v660
        %v2025 = vunpack.c.l.b16 %v661
        %v2026 = vunpack.c.h.b16 %v661
        %v2027 = vunpack.c.l.b16 %v662
        %v2028 = vunpack.c.h.b16 %v662
        %v2029 = vunpack.c.l.b16 %v663
        %v2030 = vunpack.c.h.b16 %v663
        %v2031 = vunpack.c.l.b16 %v664
        %v2032 = vunpack.c.h.b16 %v664
        %v2033 = vunpack.c.l.b16 %v665
        %v2034 = vunpack.c.h.b16 %v665
        %v2035 = vunpack.c.l.b16 %v666
        %v2036 = vunpack.c.h.b16 %v666
        %v2037 = vunpack.c.l.b16 %v667
        %v2038 = vunpack.c.h.b16 %v667
        %v2039 = vunpack.c.l.b16 %v668
        %v2040 = vunpack.c.h.b16 %v668
        %v2041 = vunpack.c.l.b16 %v669
        %v2042 = vunpack.c.h.b16 %v669
        %v2043 = vunpack.c.l.b16 %v670
        %v2044 = vunpack.c.h.b16 %v670
        %v2045 = vunpack.c.l.b16 %v671
        %v2046 = vunpack.c.h.b16 %v671
        %v2047 = vunpack.c.l.b16 %v672
        %v2048 = vunpack.c.h.b16 %v672
        %v2049 = vunpack.c.l.b16 %v673
        %v2050 = vunpack.c.h.b16 %v673
        %v2051 = vunpack.c.l.b16 %v674
        %v2052 = vunpack.c.h.b16 %v674
        %v2053 = vunpack.c.l.b16 %v675
        %v2054 = vunpack.c.h.b16 %v675
        %v2055 = vunpack.c.l.b16 %v676
        %v2056 = vunpack.c.h.b16 %v676
        %v2057 = vunpack.c.l.b16 %v677
        %v2058 = vunpack.c.h.b16 %v677
        %v2059 = vunpack.c.l.b16 %v678
        %v2060 = vunpack.c.h.b16 %v678
        %v2061 = vunpack.c.l.b16 %v679
        %v2062 = vunpack.c.h.b16 %v679
        %v2063 = vunpack.c.l.b16 %v680
        %v2064 = vunpack.c.h.b16 %v680
        %v2065 = vunpack.c.l.b16 %v681
        %v2066 = vunpack.c.h.b16 %v681
        %v2067 = vunpack.c.l.b16 %v682
        %v2068 = vunpack.c.h.b16 %v682
        %v2069 = vunpack.c.l.b16 %v683
        %v2070 = vunpack.c.h.b16 %v683
        %v2071 = vunpack.c.l.b16 %v684
        %v2072 = vunpack.c.h.b16 %v684
        %v2073 = vunpack.c.l.b16 %v685
        %v2074 = vunpack.c.h.b16 %v685
        %v2075 = vunpack.c.l.b16 %v686
        %v2076 = vunpack.c.h.b16 %v686
        %v2077 = vunpack.c.l.b16 %v687
        %v2078 = vunpack.c.h.b16 %v687
        %v2079 = vunpack.c.l.b16 %v688
        %v2080 = vunpack.c.h.b16 %v688
        %v2081 = vunpack.c.l.b16 %v689
        %v2082 = vunpack.c.h.b16 %v689
        %v2083 = vunpack.c.l.b16 %v690
        %v2084 = vunpack.c.h.b16 %v690
        %v2085 = vunpack.c.l.b16 %v691
        %v2086 = vunpack.c.h.b16 %v691
        %v2087 = vunpack.c.l.b16 %v692
        %v2088 = vunpack.c.h.b16 %v692
        %v2089 = vunpack.c.l.b16 %v693
        %v2090 = vunpack.c.h.b16 %v693
        %v2091 = vunpack.c.l.b16 %v694
        %v2092 = vunpack.c.h.b16 %v694
        %v2093 = vunpack.c.l.b16 %v695
        %v2094 = vunpack.c.h.b16 %v695
        %v2095 = vunpack.c.l.b16 %v696
        %v2096 = vunpack.c.h.b16 %v696
        %v2097 = vunpack.c.l.b16 %v697
        %v2098 = vunpack.c.h.b16 %v697
        %v2099 = vunpack.c.l.b16 %v698
        %v2100 = vunpack.c.h.b16 %v698
        %v2101 = vunpack.c.l.b16 %v699
        %v2102 = vunpack.c.h.b16 %v699
        %v2103 = vunpack.c.l.b16 %v700
        %v2104 = vunpack.c.h.b16 %v700
        %v2105 = vunpack.c.l.b16 %v701
        %v2106 = vunpack.c.h.b16 %v701
        %v2107 = vunpack.c.l.b16 %v702
        %v2108 = vunpack.c.h.b16 %v702
        %v2109 = vunpack.c.l.b16 %v703
        %v2110 = vunpack.c.h.b16 %v703
        %v2111 = vunpack.c.l.b16 %v704
        %v2112 = vunpack.c.h.b16 %v704
        %v2113 = vunpack.c.l.b16 %v705
        %v2114 = vunpack.c.h.b16 %v705
        %v2115 = vunpack.c.l.b16 %v706
        %v2116 = vunpack.c.h.b16 %v706
        %v2117 = vunpack.c.l.b16 %v707
        %v2118 = vunpack.c.h.b16 %v707
        %v2119 = vunpack.c.l.b16 %v708
        %v2120 = vunpack.c.h.b16 %v708
        %v2121 = vunpack.c.l.b16 %v709
        %v2122 = vunpack.c.h.b16 %v709
        %v2123 = vunpack.c.l.b16 %v710
        %v2124 = vunpack.c.h.b16 %v710
        %v2125 = vunpack.c.l.b16 %v711
        %v2126 = vunpack.c.h.b16 %v711
        %v2127 = vunpack.c.l.b16 %v712
        %v2128 = vunpack.c.h.b16 %v712
        %v2129 = vunpack.c.l.b16 %v713
        %v2130 = vunpack.c.h.b16 %v713
        %v2131 = vunpack.c.l.b16 %v714
        %v2132 = vunpack.c.h.b16 %v714
        %v2133 = vunpack.c.l.b16 %v715
        %v2134 = vunpack.c.h.b16 %v715
        %v2135 = vunpack.c.l.b16 %v716
        %v2136 = vunpack.c.h.b16 %v716
        %v2137 = vunpack.c.l.b16 %v717
        %v2138 = vunpack.c.h.b16 %v717
        %v2139 = vunpack.c.l.b16 %v718
        %v2140 = vunpack.c.h.b16 %v718
        %v2141 = vunpack.c.l.b16 %v719
        %v2142 = vunpack.c.h.b16 %v719
        %v2143 = vunpack.c.l.b16 %v720
        %v2144 = vunpack.c.h.b16 %v720
        %v2145 = vunpack.c.l.b16 %v721
        %v2146 = vunpack.c.h.b16 %v721
        %v2147 = vunpack.c.l.b16 %v722
        %v2148 = vunpack.c.h.b16 %v722
        %v2149 = vunpack.c.l.b16 %v723
        %v2150 = vunpack.c.h.b16 %v723
        %v2151 = vunpack.c.l.b16 %v724
        %v2152 = vunpack.c.h.b16 %v724
        %v2153 = vunpack.c.l.b16 %v725
        %v2154 = vunpack.c.h.b16 %v725
        %v2155 = vunpack.c.l.b16 %v726
        %v2156 = vunpack.c.h.b16 %v726
        %v2157 = vunpack.c.l.b16 %v727
        %v2158 = vunpack.c.h.b16 %v727
        %v2159 = vunpack.c.l.b16 %v728
        %v2160 = vunpack.c.h.b16 %v728
        %v2161 = vunpack.c.l.b16 %v729
        %v2162 = vunpack.c.h.b16 %v729
        %v2163 = vunpack.c.l.b16 %v730
        %v2164 = vunpack.c.h.b16 %v730
        %v2165 = vunpack.c.l.b16 %v731
        %v2166 = vunpack.c.h.b16 %v731
        %v2167 = vunpack.c.l.b16 %v732
        %v2168 = vunpack.c.h.b16 %v732
        %v2169 = vunpack.c.l.b16 %v733
        %v2170 = vunpack.c.h.b16 %v733
        %v2171 = vunpack.c.l.b16 %v734
        %v2172 = vunpack.c.h.b16 %v734
        %v2173 = vunpack.c.l.b16 %v735
        %v2174 = vunpack.c.h.b16 %v735
        %v2175 = vunpack.c.l.b16 %v736
        %v2176 = vunpack.c.h.b16 %v736
        %v2177 = vunpack.c.l.b16 %v737
        %v2178 = vunpack.c.h.b16 %v737
        %v2179 = vunpack.c.l.b16 %v738
        %v2180 = vunpack.c.h.b16 %v738
        %v2181 = vunpack.c.l.b16 %v739
        %v2182 = vunpack.c.h.b16 %v739
        %v2183 = vunpack.c.l.b16 %v740
        %v2184 = vunpack.c.h.b16 %v740
        %v2185 = vunpack.c.l.b16 %v741
        %v2186 = vunpack.c.h.b16 %v741
        %v2187 = vunpack.c.l.b16 %v742
        %v2188 = vunpack.c.h.b16 %v742
        %v2189 = vunpack.c.l.b16 %v743
        %v2190 = vunpack.c.h.b16 %v743
        %v2191 = vunpack.c.l.b16 %v744
        %v2192 = vunpack.c.h.b16 %v744
        %v2193 = vunpack.c.l.b16 %v745
        %v2194 = vunpack.c.h.b16 %v745
        %v2195 = vunpack.c.l.b16 %v746
        %v2196 = vunpack.c.h.b16 %v746
        %v2197 = vunpack.c.l.b16 %v747
        %v2198 = vunpack.c.h.b16 %v747
        %v2199 = vunpack.c.l.b16 %v748
        %v2200 = vunpack.c.h.b16 %v748
        %v2201 = vunpack.c.l.b16 %v749
        %v2202 = vunpack.c.h.b16 %v749
        %v2203 = vunpack.c.l.b16 %v750
        %v2204 = vunpack.c.h.b16 %v750
        %v2205 = vunpack.c.l.b16 %v751
        %v2206 = vunpack.c.h.b16 %v751
        %v2207 = vunpack.c.l.b16 %v752
        %v2208 = vunpack.c.h.b16 %v752
        %v2209 = vunpack.c.l.b16 %v753
        %v2210 = vunpack.c.h.b16 %v753
        %v2211 = vunpack.c.l.b16 %v754
        %v2212 = vunpack.c.h.b16 %v754
        %v2213 = vunpack.c.l.b16 %v755
        %v2214 = vunpack.c.h.b16 %v755
        %v2215 = vunpack.c.l.b16 %v756
        %v2216 = vunpack.c.h.b16 %v756
        %v2217 = vunpack.c.l.b16 %v757
        %v2218 = vunpack.c.h.b16 %v757
        %v2219 = vunpack.c.l.b16 %v758
        %v2220 = vunpack.c.h.b16 %v758
        %v2221 = vunpack.c.l.b16 %v759
        %v2222 = vunpack.c.h.b16 %v759
        %v2223 = vunpack.c.l.b16 %v760
        %v2224 = vunpack.c.h.b16 %v760
        %v2225 = vunpack.c.l.b16 %v761
        %v2226 = vunpack.c.h.b16 %v761
        %v2227 = vunpack.c.l.b16 %v762
        %v2228 = vunpack.c.h.b16 %v762
        %v2229 = vunpack.c.l.b16 %v763
        %v2230 = vunpack.c.h.b16 %v763
        %v2231 = vunpack.c.l.b16 %v764
        %v2232 = vunpack.c.h.b16 %v764
        %v2233 = vunpack.c.l.b16 %v765
        %v2234 = vunpack.c.h.b16 %v765
        %v2235 = vunpack.c.l.b16 %v766
        %v2236 = vunpack.c.h.b16 %v766
        %v2237 = vunpack.c.l.b16 %v767
        %v2238 = vunpack.c.h.b16 %v767
        %v2239 = vunpack.c.l.b16 %v768
        %v2240 = vunpack.c.h.b16 %v768
        %v2241 = vunpack.c.l.b16 %v769
        %v2242 = vunpack.c.h.b16 %v769
        %v2243 = vunpack.c.l.b16 %v770
        %v2244 = vunpack.c.h.b16 %v770
        %v2245 = vunpack.c.l.b16 %v771
        %v2246 = vunpack.c.h.b16 %v771
        %v2247 = vunpack.c.l.b16 %v772
        %v2248 = vunpack.c.h.b16 %v772
        %v2249 = vunpack.c.l.b16 %v773
        %v2250 = vunpack.c.h.b16 %v773
        %v2251 = vunpack.c.l.b16 %v774
        %v2252 = vunpack.c.h.b16 %v774
        %v2253 = vunpack.c.l.b16 %v775
        %v2254 = vunpack.c.h.b16 %v775
        %v2255 = vunpack.c.l.b16 %v776
        %v2256 = vunpack.c.h.b16 %v776
        %v2257 = vunpack.c.l.b16 %v777
        %v2258 = vunpack.c.h.b16 %v777
        %v2259 = vunpack.c.l.b16 %v778
        %v2260 = vunpack.c.h.b16 %v778
        %v2261 = vunpack.c.l.b16 %v779
        %v2262 = vunpack.c.h.b16 %v779
        %v2263 = vunpack.c.l.b16 %v780
        %v2264 = vunpack.c.h.b16 %v780
        %v2265 = vunpack.c.l.b16 %v781
        %v2266 = vunpack.c.h.b16 %v781
        %v2267 = vunpack.c.l.b16 %v782
        %v2268 = vunpack.c.h.b16 %v782
        %v2269 = vunpack.c.l.b16 %v783
        %v2270 = vunpack.c.h.b16 %v783
        %v2271 = vunpack.c.l.b16 %v784
        %v2272 = vunpack.c.h.b16 %v784
        %v2273 = vunpack.c.l.b16 %v785
        %v2274 = vunpack.c.h.b16 %v785
        %v2275 = vunpack.c.l.b16 %v786
        %v2276 = vunpack.c.h.b16 %v786
        %v2277 = vunpack.c.l.b16 %v787
        %v2278 = vunpack.c.h.b16 %v787
        %v2279 = vunpack.c.l.b16 %v788
        %v2280 = vunpack.c.h.b16 %v788
        %v2281 = vunpack.c.l.b16 %v789
        %v2282 = vunpack.c.h.b16 %v789
        %v2283 = vunpack.c.l.b16 %v790
        %v2284 = vunpack.c.h.b16 %v790
        %v2285 = vunpack.c.l.b16 %v791
        %v2286 = vunpack.c.h.b16 %v791
        %v2287 = vunpack.c.l.b16 %v792
        %v2288 = vunpack.c.h.b16 %v792
        %v2289 = vunpack.c.l.b16 %v793
        %v2290 = vunpack.c.h.b16 %v793
        %v2291 = vunpack.c.l.b16 %v794
        %v2292 = vunpack.c.h.b16 %v794
        %v2293 = vunpack.c.l.b16 %v795
        %v2294 = vunpack.c.h.b16 %v795
        %v2295 = vunpack.c.l.b16 %v796
        %v2296 = vunpack.c.h.b16 %v796
        %v2297 = vunpack.c.l.b16 %v797
        %v2298 = vunpack.c.h.b16 %v797
        %v2299 = vunpack.c.l.b16 %v798
        %v2300 = vunpack.c.h.b16 %v798
        %v2301 = vunpack.c.l.b16 %v799
        %v2302 = vunpack.c.h.b16 %v799
        %v2303 = vunpack.c.l.b16 %v800
        %v2304 = vunpack.c.h.b16 %v800
        %v2305 = vunpack.c.l.b16 %v801
        %v2306 = vunpack.c.h.b16 %v801
        %v2307 = vunpack.c.l.b16 %v802
        %v2308 = vunpack.c.h.b16 %v802
        %v2309 = vunpack.c.l.b16 %v803
        %v2310 = vunpack.c.h.b16 %v803
        %v2311 = vunpack.c.l.b16 %v804
        %v2312 = vunpack.c.h.b16 %v804
        %v2313 = vunpack.c.l.b16 %v805
        %v2314 = vunpack.c.h.b16 %v805
        %v2315 = vunpack.c.l.b16 %v806
        %v2316 = vunpack.c.h.b16 %v806
        %v2317 = vunpack.c.l.b16 %v807
        %v2318 = vunpack.c.h.b16 %v807
        %v2319 = vunpack.c.l.b16 %v808
        %v2320 = vunpack.c.h.b16 %v808
        %v2321 = vunpack.c.l.b16 %v809
        %v2322 = vunpack.c.h.b16 %v809
        %v2323 = vunpack.c.l.b16 %v810
        %v2324 = vunpack.c.h.b16 %v810
        %v2325 = vunpack.c.l.b16 %v811
        %v2326 = vunpack.c.h.b16 %v811
        %v2327 = vunpack.c.l.b16 %v812
        %v2328 = vunpack.c.h.b16 %v812
        %v2329 = vunpack.c.l.b16 %v813
        %v2330 = vunpack.c.h.b16 %v813
        %v2331 = vunpack.c.l.b16 %v814
        %v2332 = vunpack.c.h.b16 %v814
        %v2333 = vunpack.c.l.b16 %v815
        %v2334 = vunpack.c.h.b16 %v815
        %v2335 = vunpack.c.l.b16 %v816
        %v2336 = vunpack.c.h.b16 %v816
        %v2337 = vunpack.c.l.b16 %v817
        %v2338 = vunpack.c.h.b16 %v817
        %v2339 = vunpack.c.l.b16 %v818
        %v2340 = vunpack.c.h.b16 %v818
        %v2341 = vunpack.c.l.b16 %v819
        %v2342 = vunpack.c.h.b16 %v819
        %v2343 = vunpack.c.l.b16 %v820
        %v2344 = vunpack.c.h.b16 %v820
        %v2345 = vunpack.c.l.b16 %v821
        %v2346 = vunpack.c.h.b16 %v821
        %v2347 = vunpack.c.l.b16 %v822
        %v2348 = vunpack.c.h.b16 %v822
        %v2349 = vunpack.c.l.b16 %v823
        %v2350 = vunpack.c.h.b16 %v823
        %v2351 = vunpack.c.l.b16 %v824
        %v2352 = vunpack.c.h.b16 %v824
        %v2353 = vunpack.c.l.b16 %v825
        %v2354 = vunpack.c.h.b16 %v825
        %v2355 = vunpack.c.l.b16 %v826
        %v2356 = vunpack.c.h.b16 %v826
        %v2357 = vunpack.c.l.b16 %v827
        %v2358 = vunpack.c.h.b16 %v827
        %v2359 = vunpack.c.l.b16 %v828
        %v2360 = vunpack.c.h.b16 %v828
        %v2361 = vunpack.c.l.b16 %v829
        %v2362 = vunpack.c.h.b16 %v829
        %v2363 = vunpack.c.l.b16 %v830
        %v2364 = vunpack.c.h.b16 %v830
        %v2365 = vunpack.c.l.b16 %v831
        %v2366 = vunpack.c.h.b16 %v831
        %v2367 = vunpack.c.l.b16 %v832
        %v2368 = vunpack.c.h.b16 %v832
        %v2369 = vunpack.c.l.b16 %v833
        %v2370 = vunpack.c.h.b16 %v833
        %v2371 = vunpack.c.l.b16 %v834
        %v2372 = vunpack.c.h.b16 %v834
        %v2373 = vunpack.c.l.b16 %v835
        %v2374 = vunpack.c.h.b16 %v835
        %v2375 = vunpack.c.l.b16 %v836
        %v2376 = vunpack.c.h.b16 %v836
        %v2377 = vunpack.c.l.b16 %v837
        %v2378 = vunpack.c.h.b16 %v837
        %v2379 = vunpack.c.l.b16 %v838
        %v2380 = vunpack.c.h.b16 %v838
        %v2381 = vunpack.c.l.b16 %v839
        %v2382 = vunpack.c.h.b16 %v839
        %v2383 = vunpack.c.l.b16 %v840
        %v2384 = vunpack.c.h.b16 %v840
        %v2385 = vunpack.c.l.b16 %v841
        %v2386 = vunpack.c.h.b16 %v841
        %v2387 = vunpack.c.l.b16 %v842
        %v2388 = vunpack.c.h.b16 %v842
        %v2389 = vunpack.c.l.b16 %v843
        %v2390 = vunpack.c.h.b16 %v843
        %v2391 = vunpack.c.l.b16 %v844
        %v2392 = vunpack.c.h.b16 %v844
        %v2393 = vunpack.c.l.b16 %v845
        %v2394 = vunpack.c.h.b16 %v845
        %v2395 = vunpack.c.l.b16 %v846
        %v2396 = vunpack.c.h.b16 %v846
        %v2397 = vunpack.c.l.b16 %v847
        %v2398 = vunpack.c.h.b16 %v847
        %v2399 = vunpack.c.l.b16 %v848
        %v2400 = vunpack.c.h.b16 %v848
        %v2401 = vunpack.c.l.b16 %v849
        %v2402 = vunpack.c.h.b16 %v849
        %v2403 = vunpack.c.l.b16 %v850
        %v2404 = vunpack.c.h.b16 %v850
        %v2405 = vunpack.c.l.b16 %v851
        %v2406 = vunpack.c.h.b16 %v851
        %v2407 = vunpack.c.l.b16 %v852
        %v2408 = vunpack.c.h.b16 %v852
        %v2409 = vunpack.c.l.b16 %v853
        %v2410 = vunpack.c.h.b16 %v853
        %v2411 = vunpack.c.l.b16 %v854
        %v2412 = vunpack.c.h.b16 %v854
        %v2413 = vunpack.c.l.b16 %v855
        %v2414 = vunpack.c.h.b16 %v855
        %v2415 = vunpack.c.l.b16 %v856
        %v2416 = vunpack.c.h.b16 %v856
        %v2417 = vunpack.c.l.b16 %v857
        %v2418 = vunpack.c.h.b16 %v857
        %v2419 = vunpack.c.l.b16 %v858
        %v2420 = vunpack.c.h.b16 %v858
        %v2421 = vunpack.c.l.b16 %v859
        %v2422 = vunpack.c.h.b16 %v859
        %v2423 = vunpack.c.l.b16 %v860
        %v2424 = vunpack.c.h.b16 %v860
        %v2425 = vunpack.c.l.b16 %v861
        %v2426 = vunpack.c.h.b16 %v861
        %v2427 = vunpack.c.l.b16 %v862
        %v2428 = vunpack.c.h.b16 %v862
        %v2429 = vunpack.c.l.b16 %v863
        %v2430 = vunpack.c.h.b16 %v863
        %v2431 = vunpack.c.l.b16 %v864
        %v2432 = vunpack.c.h.b16 %v864
        %v2433 = vunpack.c.l.b16 %v865
        %v2434 = vunpack.c.h.b16 %v865
        %v2435 = vunpack.c.l.b16 %v866
        %v2436 = vunpack.c.h.b16 %v866
        %v2437 = vunpack.c.l.b16 %v867
        %v2438 = vunpack.c.h.b16 %v867
        %v2439 = vunpack.c.l.b16 %v868
        %v2440 = vunpack.c.h.b16 %v868
        %v2441 = vpack.c.b16 %v1421, %v1417
        %v2442 = vpack.c.b16 %v1422, %v1418
        %v2443 = vpack.c.b16 %v1423, %v1419
        %v2444 = vpack.c.b16 %v1424, %v1420
        %v2445 = vpack.c.b16 %v1429, %v1425
        %v2446 = vpack.c.b16 %v1430, %v1426
        %v2447 = vpack.c.b16 %v1431, %v1427
        %v2448 = vpack.c.b16 %v1432, %v1428
        %v2449 = vpack.c.b16 %v1437, %v1433
        %v2450 = vpack.c.b16 %v1438, %v1434
        %v2451 = vpack.c.b16 %v1439, %v1435
        %v2452 = vpack.c.b16 %v1440, %v1436
        %v2453 = vpack.c.b16 %v1445, %v1441
        %v2454 = vpack.c.b16 %v1446, %v1442
        %v2455 = vpack.c.b16 %v1447, %v1443
        %v2456 = vpack.c.b16 %v1448, %v1444
        %v2457 = vpack.c.b16 %v1453, %v1449
        %v2458 = vpack.c.b16 %v1454, %v1450
        %v2459 = vpack.c.b16 %v1455, %v1451
        %v2460 = vpack.c.b16 %v1456, %v1452
        %v2461 = vpack.c.b16 %v1461, %v1457
        %v2462 = vpack.c.b16 %v1462, %v1458
        %v2463 = vpack.c.b16 %v1463, %v1459
        %v2464 = vpack.c.b16 %v1464, %v1460
        %v2465 = vpack.c.b16 %v1469, %v1465
        %v2466 = vpack.c.b16 %v1470, %v1466
        %v2467 = vpack.c.b16 %v1471, %v1467
        %v2468 = vpack.c.b16 %v1472, %v1468
        %v2469 = vpack.c.b16 %v1477, %v1473
        %v2470 = vpack.c.b16 %v1478, %v1474
        %v2471 = vpack.c.b16 %v1479, %v1475
        %v2472 = vpack.c.b16 %v1480, %v1476
        %v2473 = vpack.c.b16 %v1485, %v1481
        %v2474 = vpack.c.b16 %v1486, %v1482
        %v2475 = vpack.c.b16 %v1487, %v1483
        %v2476 = vpack.c.b16 %v1488, %v1484
        %v2477 = vpack.c.b16 %v1493, %v1489
        %v2478 = vpack.c.b16 %v1494, %v1490
        %v2479 = vpack.c.b16 %v1495, %v1491
        %v2480 = vpack.c.b16 %v1496, %v1492
        %v2481 = vpack.c.b16 %v1501, %v1497
        %v2482 = vpack.c.b16 %v1502, %v1498
        %v2483 = vpack.c.b16 %v1503, %v1499
        %v2484 = vpack.c.b16 %v1504, %v1500
        %v2485 = vpack.c.b16 %v1509, %v1505
        %v2486 = vpack.c.b16 %v1510, %v1506
        %v2487 = vpack.c.b16 %v1511, %v1507
        %v2488 = vpack.c.b16 %v1512, %v1508
        %v2489 = vpack.c.b16 %v1517, %v1513
        %v2490 = vpack.c.b16 %v1518, %v1514
        %v2491 = vpack.c.b16 %v1519, %v1515
        %v2492 = vpack.c.b16 %v1520, %v1516
        %v2493 = vpack.c.b16 %v1525, %v1521
        %v2494 = vpack.c.b16 %v1526, %v1522
        %v2495 = vpack.c.b16 %v1527, %v1523
        %v2496 = vpack.c.b16 %v1528, %v1524
        %v2497 = vpack.c.b16 %v1533, %v1529
        %v2498 = vpack.c.b16 %v1534, %v1530
        %v2499 = vpack.c.b16 %v1535, %v1531
        %v2500 = vpack.c.b16 %v1536, %v1532
        %v2501 = vpack.c.b16 %v1541, %v1537
        %v2502 = vpack.c.b16 %v1542, %v1538
        %v2503 = vpack.c.b16 %v1543, %v1539
        %v2504 = vpack.c.b16 %v1544, %v1540
        %v2505 = vpack.c.b16 %v1549, %v1545
        %v2506 = vpack.c.b16 %v1550, %v1546
        %v2507 = vpack.c.b16 %v1551, %v1547
        %v2508 = vpack.c.b16 %v1552, %v1548
        %v2509 = vpack.c.b16 %v1557, %v1553
        %v2510 = vpack.c.b16 %v1558, %v1554
        %v2511 = vpack.c.b16 %v1559, %v1555
        %v2512 = vpack.c.b16 %v1560, %v1556
        %v2513 = vpack.c.b16 %v1565, %v1561
        %v2514 = vpack.c.b16 %v1566, %v1562
        %v2515 = vpack.c.b16 %v1567, %v1563
        %v2516 = vpack.c.b16 %v1568, %v1564
        %v2517 = vpack.c.b16 %v1573, %v1569
        %v2518 = vpack.c.b16 %v1574, %v1570
        %v2519 = vpack.c.b16 %v1575, %v1571
        %v2520 = vpack.c.b16 %v1576, %v1572
        %v2521 = vpack.c.b16 %v1581, %v1577
        %v2522 = vpack.c.b16 %v1582, %v1578
        %v2523 = vpack.c.b16 %v1583, %v1579
        %v2524 = vpack.c.b16 %v1584, %v1580
        %v2525 = vpack.c.b16 %v1589, %v1585
        %v2526 = vpack.c.b16 %v1590, %v1586
        %v2527 = vpack.c.b16 %v1591, %v1587
        %v2528 = vpack.c.b16 %v1592, %v1588
        %v2529 = vpack.c.b16 %v1597, %v1593
        %v2530 = vpack.c.b16 %v1598, %v1594
        %v2531 = vpack.c.b16 %v1599, %v1595
        %v2532 = vpack.c.b16 %v1600, %v1596
        %v2533 = vpack.c.b16 %v1605, %v1601
        %v2534 = vpack.c.b16 %v1606, %v1602
        %v2535 = vpack.c.b16 %v1607, %v1603
        %v2536 = vpack.c.b16 %v1608, %v1604
        %v2537 = vpack.c.b16 %v1613, %v1609
        %v2538 = vpack.c.b16 %v1614, %v1610
        %v2539 = vpack.c.b16 %v1615, %v1611
        %v2540 = vpack.c.b16 %v1616, %v1612
        %v2541 = vpack.c.b16 %v1621, %v1617
        %v2542 = vpack.c.b16 %v1622, %v1618
        %v2543 = vpack.c.b16 %v1623, %v1619
        %v2544 = vpack.c.b16 %v1624, %v1620
        %v2545 = vpack.c.b16 %v1629, %v1625
        %v2546 = vpack.c.b16 %v1630, %v1626
        %v2547 = vpack.c.b16 %v1631, %v1627
        %v2548 = vpack.c.b16 %v1632, %v1628
        %v2549 = vpack.c.b16 %v1637, %v1633
        %v2550 = vpack.c.b16 %v1638, %v1634
        %v2551 = vpack.c.b16 %v1639, %v1635
        %v2552 = vpack.c.b16 %v1640, %v1636
        %v2553 = vpack.c.b16 %v1645, %v1641
        %v2554 = vpack.c.b16 %v1646, %v1642
        %v2555 = vpack.c.b16 %v1647, %v1643
        %v2556 = vpack.c.b16 %v1648, %v1644
        %v2557 = vpack.c.b16 %v1653, %v1649
        %v2558 = vpack.c.b16 %v1654, %v1650
        %v2559 = vpack.c.b16 %v1655, %v1651
        %v2560 = vpack.c.b16 %v1656, %v1652
        %v2561 = vpack.c.b16 %v1661, %v1657
        %v2562 = vpack.c.b16 %v1662, %v1658
        %v2563 = vpack.c.b16 %v1663, %v1659
        %v2564 = vpack.c.b16 %v1664, %v1660
        %v2565 = vpack.c.b16 %v1669, %v1665
        %v2566 = vpack.c.b16 %v1670, %v1666
        %v2567 = vpack.c.b16 %v1671, %v1667
        %v2568 = vpack.c.b16 %v1672, %v1668
        %v2569 = vpack.c.b16 %v1677, %v1673
        %v2570 = vpack.c.b16 %v1678, %v1674
        %v2571 = vpack.c.b16 %v1679, %v1675
        %v2572 = vpack.c.b16 %v1680, %v1676
        %v2573 = vpack.c.b16 %v1685, %v1681
        %v2574 = vpack.c.b16 %v1686, %v1682
        %v2575 = vpack.c.b16 %v1687, %v1683
        %v2576 = vpack.c.b16 %v1688, %v1684
        %v2577 = vpack.c.b16 %v1693, %v1689
        %v2578 = vpack.c.b16 %v1694, %v1690
        %v2579 = vpack.c.b16 %v1695, %v1691
        %v2580 = vpack.c.b16 %v1696, %v1692
        %v2581 = vpack.c.b16 %v1701, %v1697
        %v2582 = vpack.c.b16 %v1702, %v1698
        %v2583 = vpack.c.b16 %v1703, %v1699
        %v2584 = vpack.c.b16 %v1704, %v1700
        %v2585 = vpack.c.b16 %v1709, %v1705
        %v2586 = vpack.c.b16 %v1710, %v1706
        %v2587 = vpack.c.b16 %v1711, %v1707
        %v2588 = vpack.c.b16 %v1712, %v1708
        %v2589 = vpack.c.b16 %v1717, %v1713
        %v2590 = vpack.c.b16 %v1718, %v1714
        %v2591 = vpack.c.b16 %v1719, %v1715
        %v2592 = vpack.c.b16 %v1720, %v1716
        %v2593 = vpack.c.b16 %v1725, %v1721
        %v2594 = vpack.c.b16 %v1726, %v1722
        %v2595 = vpack.c.b16 %v1727, %v1723
        %v2596 = vpack.c.b16 %v1728, %v1724
        %v2597 = vpack.c.b16 %v1733, %v1729
        %v2598 = vpack.c.b16 %v1734, %v1730
        %v2599 = vpack.c.b16 %v1735, %v1731
        %v2600 = vpack.c.b16 %v1736, %v1732
        %v2601 = vpack.c.b16 %v1741, %v1737
        %v2602 = vpack.c.b16 %v1742, %v1738
        %v2603 = vpack.c.b16 %v1743, %v1739
        %v2604 = vpack.c.b16 %v1744, %v1740
        %v2605 = vpack.c.b16 %v1749, %v1745
        %v2606 = vpack.c.b16 %v1750, %v1746
        %v2607 = vpack.c.b16 %v1751, %v1747
        %v2608 = vpack.c.b16 %v1752, %v1748
        %v2609 = vpack.c.b16 %v1757, %v1753
        %v2610 = vpack.c.b16 %v1758, %v1754
        %v2611 = vpack.c.b16 %v1759, %v1755
        %v2612 = vpack.c.b16 %v1760, %v1756
        %v2613 = vpack.c.b16 %v1765, %v1761
        %v2614 = vpack.c.b16 %v1766, %v1762
        %v2615 = vpack.c.b16 %v1767, %v1763
        %v2616 = vpack.c.b16 %v1768, %v1764
        %v2617 = vpack.c.b16 %v1773, %v1769
        %v2618 = vpack.c.b16 %v1774, %v1770
        %v2619 = vpack.c.b16 %v1775, %v1771
        %v2620 = vpack.c.b16 %v1776, %v1772
        %v2621 = vpack.c.b16 %v1781, %v1777
        %v2622 = vpack.c.b16 %v1782, %v1778
        %v2623 = vpack.c.b16 %v1783, %v1779
        %v2624 = vpack.c.b16 %v1784, %v1780
        %v2625 = vpack.c.b16 %v1789, %v1785
        %v2626 = vpack.c.b16 %v1790, %v1786
        %v2627 = vpack.c.b16 %v1791, %v1787
        %v2628 = vpack.c.b16 %v1792, %v1788
        %v2629 = vpack.c.b16 %v1797, %v1793
        %v2630 = vpack.c.b16 %v1798, %v1794
        %v2631 = vpack.c.b16 %v1799, %v1795
        %v2632 = vpack.c.b16 %v1800, %v1796
        %v2633 = vpack.c.b16 %v1805, %v1801
        %v2634 = vpack.c.b16 %v1806, %v1802
        %v2635 = vpack.c.b16 %v1807, %v1803
        %v2636 = vpack.c.b16 %v1808, %v1804
        %v2637 = vpack.c.b16 %v1813, %v1809
        %v2638 = vpack.c.b16 %v1814, %v1810
        %v2639 = vpack.c.b16 %v1815, %v1811
        %v2640 = vpack.c.b16 %v1816, %v1812
        %v2641 = vpack.c.b16 %v1821, %v1817
        %v2642 = vpack.c.b16 %v1822, %v1818
        %v2643 = vpack.c.b16 %v1823, %v1819
        %v2644 = vpack.c.b16 %v1824, %v1820
        %v2645 = vpack.c.b16 %v1829, %v1825
        %v2646 = vpack.c.b16 %v1830, %v1826
        %v2647 = vpack.c.b16 %v1831, %v1827
        %v2648 = vpack.c.b16 %v1832, %v1828
        %v2649 = vpack.c.b16 %v1837, %v1833
        %v2650 = vpack.c.b16 %v1838, %v1834
        %v2651 = vpack.c.b16 %v1839, %v1835
        %v2652 = vpack.c.b16 %v1840, %v1836
        %v2653 = vpack.c.b16 %v1845, %v1841
        %v2654 = vpack.c.b16 %v1846, %v1842
        %v2655 = vpack.c.b16 %v1847, %v1843
        %v2656 = vpack.c.b16 %v1848, %v1844
        %v2657 = vpack.c.b16 %v1853, %v1849
        %v2658 = vpack.c.b16 %v1854, %v1850
        %v2659 = vpack.c.b16 %v1855, %v1851
        %v2660 = vpack.c.b16 %v1856, %v1852
        %v2661 = vpack.c.b16 %v1861, %v1857
        %v2662 = vpack.c.b16 %v1862, %v1858
        %v2663 = vpack.c.b16 %v1863, %v1859
        %v2664 = vpack.c.b16 %v1864, %v1860
        %v2665 = vpack.c.b16 %v1869, %v1865
        %v2666 = vpack.c.b16 %v1870, %v1866
        %v2667 = vpack.c.b16 %v1871, %v1867
        %v2668 = vpack.c.b16 %v1872, %v1868
        %v2669 = vpack.c.b16 %v1877, %v1873
        %v2670 = vpack.c.b16 %v1878, %v1874
        %v2671 = vpack.c.b16 %v1879, %v1875
        %v2672 = vpack.c.b16 %v1880, %v1876
        %v2673 = vpack.c.b16 %v1885, %v1881
        %v2674 = vpack.c.b16 %v1886, %v1882
        %v2675 = vpack.c.b16 %v1887, %v1883
        %v2676 = vpack.c.b16 %v1888, %v1884
        %v2677 = vpack.c.b16 %v1893, %v1889
        %v2678 = vpack.c.b16 %v1894, %v1890
        %v2679 = vpack.c.b16 %v1895, %v1891
        %v2680 = vpack.c.b16 %v1896, %v1892
        %v2681 = vpack.c.b16 %v1901, %v1897
        %v2682 = vpack.c.b16 %v1902, %v1898
        %v2683 = vpack.c.b16 %v1903, %v1899
        %v2684 = vpack.c.b16 %v1904, %v1900
        %v2685 = vpack.c.b16 %v1909, %v1905
        %v2686 = vpack.c.b16 %v1910, %v1906
        %v2687 = vpack.c.b16 %v1911, %v1907
        %v2688 = vpack.c.b16 %v1912, %v1908
        %v2689 = vpack.c.b16 %v1917, %v1913
        %v2690 = vpack.c.b16 %v1918, %v1914
        %v2691 = vpack.c.b16 %v1919, %v1915
        %v2692 = vpack.c.b16 %v1920, %v1916
        %v2693 = vpack.c.b16 %v1925, %v1921
        %v2694 = vpack.c.b16 %v1926, %v1922
        %v2695 = vpack.c.b16 %v1927, %v1923
        %v2696 = vpack.c.b16 %v1928, %v1924
        %v2697 = vpack.c.b16 %v1933, %v1929
        %v2698 = vpack.c.b16 %v1934, %v1930
        %v2699 = vpack.c.b16 %v1935, %v1931
        %v2700 = vpack.c.b16 %v1936, %v1932
        %v2701 = vpack.c.b16 %v1941, %v1937
        %v2702 = vpack.c.b16 %v1942, %v1938
        %v2703 = vpack.c.b16 %v1943, %v1939
        %v2704 = vpack.c.b16 %v1944, %v1940
        %v2705 = vpack.c.b16 %v1949, %v1945
        %v2706 = vpack.c.b16 %v1950, %v1946
        %v2707 = vpack.c.b16 %v1951, %v1947
        %v2708 = vpack.c.b16 %v1952, %v1948
        %v2709 = vpack.c.b16 %v1957, %v1953
        %v2710 = vpack.c.b16 %v1958, %v1954
        %v2711 = vpack.c.b16 %v1959, %v1955
        %v2712 = vpack.c.b16 %v1960, %v1956
        %v2713 = vpack.c.b16 %v1965, %v1961
        %v2714 = vpack.c.b16 %v1966, %v1962
        %v2715 = vpack.c.b16 %v1967, %v1963
        %v2716 = vpack.c.b16 %v1968, %v1964
        %v2717 = vpack.c.b16 %v1973, %v1969
        %v2718 = vpack.c.b16 %v1974, %v1970
        %v2719 = vpack.c.b16 %v1975, %v1971
        %v2720 = vpack.c.b16 %v1976, %v1972
        %v2721 = vpack.c.b16 %v1981, %v1977
        %v2722 = vpack.c.b16 %v1982, %v1978
        %v2723 = vpack.c.b16 %v1983, %v1979
        %v2724 = vpack.c.b16 %v1984, %v1980
        %v2725 = vpack.c.b16 %v1989, %v1985
        %v2726 = vpack.c.b16 %v1990, %v1986
        %v2727 = vpack.c.b16 %v1991, %v1987
        %v2728 = vpack.c.b16 %v1992, %v1988
        %v2729 = vpack.c.b16 %v1997, %v1993
        %v2730 = vpack.c.b16 %v1998, %v1994
        %v2731 = vpack.c.b16 %v1999, %v1995
        %v2732 = vpack.c.b16 %v2000, %v1996
        %v2733 = vpack.c.b16 %v2005, %v2001
        %v2734 = vpack.c.b16 %v2006, %v2002
        %v2735 = vpack.c.b16 %v2007, %v2003
        %v2736 = vpack.c.b16 %v2008, %v2004
        %v2737 = vpack.c.b16 %v2013, %v2009
        %v2738 = vpack.c.b16 %v2014, %v2010
        %v2739 = vpack.c.b16 %v2015, %v2011
        %v2740 = vpack.c.b16 %v2016, %v2012
        %v2741 = vpack.c.b16 %v2021, %v2017
        %v2742 = vpack.c.b16 %v2022, %v2018
        %v2743 = vpack.c.b16 %v2023, %v2019
        %v2744 = vpack.c.b16 %v2024, %v2020
        %v2745 = vpack.c.b16 %v2029, %v2025
        %v2746 = vpack.c.b16 %v2030, %v2026
        %v2747 = vpack.c.b16 %v2031, %v2027
        %v2748 = vpack.c.b16 %v2032, %v2028
        %v2749 = vpack.c.b16 %v2037, %v2033
        %v2750 = vpack.c.b16 %v2038, %v2034
        %v2751 = vpack.c.b16 %v2039, %v2035
        %v2752 = vpack.c.b16 %v2040, %v2036
        %v2753 = vpack.c.b16 %v2045, %v2041
        %v2754 = vpack.c.b16 %v2046, %v2042
        %v2755 = vpack.c.b16 %v2047, %v2043
        %v2756 = vpack.c.b16 %v2048, %v2044
        %v2757 = vpack.c.b16 %v2053, %v2049
        %v2758 = vpack.c.b16 %v2054, %v2050
        %v2759 = vpack.c.b16 %v2055, %v2051
        %v2760 = vpack.c.b16 %v2056, %v2052
        %v2761 = vpack.c.b16 %v2061, %v2057
        %v2762 = vpack.c.b16 %v2062, %v2058
        %v2763 = vpack.c.b16 %v2063, %v2059
        %v2764 = vpack.c.b16 %v2064, %v2060
        %v2765 = vpack.c.b16 %v2069, %v2065
        %v2766 = vpack.c.b16 %v2070, %v2066
        %v2767 = vpack.c.b16 %v2071, %v2067
        %v2768 = vpack.c.b16 %v2072, %v2068
        %v2769 = vpack.c.b16 %v2077, %v2073
        %v2770 = vpack.c.b16 %v2078, %v2074
        %v2771 = vpack.c.b16 %v2079, %v2075
        %v2772 = vpack.c.b16 %v2080, %v2076
        %v2773 = vpack.c.b16 %v2085, %v2081
        %v2774 = vpack.c.b16 %v2086, %v2082
        %v2775 = vpack.c.b16 %v2087, %v2083
        %v2776 = vpack.c.b16 %v2088, %v2084
        %v2777 = vpack.c.b16 %v2093, %v2089
        %v2778 = vpack.c.b16 %v2094, %v2090
        %v2779 = vpack.c.b16 %v2095, %v2091
        %v2780 = vpack.c.b16 %v2096, %v2092
        %v2781 = vpack.c.b16 %v2101, %v2097
        %v2782 = vpack.c.b16 %v2102, %v2098
        %v2783 = vpack.c.b16 %v2103, %v2099
        %v2784 = vpack.c.b16 %v2104, %v2100
        %v2785 = vpack.c.b16 %v2109, %v2105
        %v2786 = vpack.c.b16 %v2110, %v2106
        %v2787 = vpack.c.b16 %v2111, %v2107
        %v2788 = vpack.c.b16 %v2112, %v2108
        %v2789 = vpack.c.b16 %v2117, %v2113
        %v2790 = vpack.c.b16 %v2118, %v2114
        %v2791 = vpack.c.b16 %v2119, %v2115
        %v2792 = vpack.c.b16 %v2120, %v2116
        %v2793 = vpack.c.b16 %v2125, %v2121
        %v2794 = vpack.c.b16 %v2126, %v2122
        %v2795 = vpack.c.b16 %v2127, %v2123
        %v2796 = vpack.c.b16 %v2128, %v2124
        %v2797 = vpack.c.b16 %v2133, %v2129
        %v2798 = vpack.c.b16 %v2134, %v2130
        %v2799 = vpack.c.b16 %v2135, %v2131
        %v2800 = vpack.c.b16 %v2136, %v2132
        %v2801 = vpack.c.b16 %v2141, %v2137
        %v2802 = vpack.c.b16 %v2142, %v2138
        %v2803 = vpack.c.b16 %v2143, %v2139
        %v2804 = vpack.c.b16 %v2144, %v2140
        %v2805 = vpack.c.b16 %v2149, %v2145
        %v2806 = vpack.c.b16 %v2150, %v2146
        %v2807 = vpack.c.b16 %v2151, %v2147
        %v2808 = vpack.c.b16 %v2152, %v2148
        %v2809 = vpack.c.b16 %v2157, %v2153
        %v2810 = vpack.c.b16 %v2158, %v2154
        %v2811 = vpack.c.b16 %v2159, %v2155
        %v2812 = vpack.c.b16 %v2160, %v2156
        %v2813 = vpack.c.b16 %v2165, %v2161
        %v2814 = vpack.c.b16 %v2166, %v2162
        %v2815 = vpack.c.b16 %v2167, %v2163
        %v2816 = vpack.c.b16 %v2168, %v2164
        %v2817 = vpack.c.b16 %v2173, %v2169
        %v2818 = vpack.c.b16 %v2174, %v2170
        %v2819 = vpack.c.b16 %v2175, %v2171
        %v2820 = vpack.c.b16 %v2176, %v2172
        %v2821 = vpack.c.b16 %v2181, %v2177
        %v2822 = vpack.c.b16 %v2182, %v2178
        %v2823 = vpack.c.b16 %v2183, %v2179
        %v2824 = vpack.c.b16 %v2184, %v2180
        %v2825 = vpack.c.b16 %v2189, %v2185
        %v2826 = vpack.c.b16 %v2190, %v2186
        %v2827 = vpack.c.b16 %v2191, %v2187
        %v2828 = vpack.c.b16 %v2192, %v2188
        %v2829 = vpack.c.b16 %v2197, %v2193
        %v2830 = vpack.c.b16 %v2198, %v2194
        %v2831 = vpack.c.b16 %v2199, %v2195
        %v2832 = vpack.c.b16 %v2200, %v2196
        %v2833 = vpack.c.b16 %v2205, %v2201
        %v2834 = vpack.c.b16 %v2206, %v2202
        %v2835 = vpack.c.b16 %v2207, %v2203
        %v2836 = vpack.c.b16 %v2208, %v2204
        %v2837 = vpack.c.b16 %v2213, %v2209
        %v2838 = vpack.c.b16 %v2214, %v2210
        %v2839 = vpack.c.b16 %v2215, %v2211
        %v2840 = vpack.c.b16 %v2216, %v2212
        %v2841 = vpack.c.b16 %v2221, %v2217
        %v2842 = vpack.c.b16 %v2222, %v2218
        %v2843 = vpack.c.b16 %v2223, %v2219
        %v2844 = vpack.c.b16 %v2224, %v2220
        %v2845 = vpack.c.b16 %v2229, %v2225
        %v2846 = vpack.c.b16 %v2230, %v2226
        %v2847 = vpack.c.b16 %v2231, %v2227
        %v2848 = vpack.c.b16 %v2232, %v2228
        %v2849 = vpack.c.b16 %v2237, %v2233
        %v2850 = vpack.c.b16 %v2238, %v2234
        %v2851 = vpack.c.b16 %v2239, %v2235
        %v2852 = vpack.c.b16 %v2240, %v2236
        %v2853 = vpack.c.b16 %v2245, %v2241
        %v2854 = vpack.c.b16 %v2246, %v2242
        %v2855 = vpack.c.b16 %v2247, %v2243
        %v2856 = vpack.c.b16 %v2248, %v2244
        %v2857 = vpack.c.b16 %v2253, %v2249
        %v2858 = vpack.c.b16 %v2254, %v2250
        %v2859 = vpack.c.b16 %v2255, %v2251
        %v2860 = vpack.c.b16 %v2256, %v2252
        %v2861 = vpack.c.b16 %v2261, %v2257
        %v2862 = vpack.c.b16 %v2262, %v2258
        %v2863 = vpack.c.b16 %v2263, %v2259
        %v2864 = vpack.c.b16 %v2264, %v2260
        %v2865 = vpack.c.b16 %v2269, %v2265
        %v2866 = vpack.c.b16 %v2270, %v2266
        %v2867 = vpack.c.b16 %v2271, %v2267
        %v2868 = vpack.c.b16 %v2272, %v2268
        %v2869 = vpack.c.b16 %v2277, %v2273
        %v2870 = vpack.c.b16 %v2278, %v2274
        %v2871 = vpack.c.b16 %v2279, %v2275
        %v2872 = vpack.c.b16 %v2280, %v2276
        %v2873 = vpack.c.b16 %v2285, %v2281
        %v2874 = vpack.c.b16 %v2286, %v2282
        %v2875 = vpack.c.b16 %v2287, %v2283
        %v2876 = vpack.c.b16 %v2288, %v2284
        %v2877 = vpack.c.b16 %v2293, %v2289
        %v2878 = vpack.c.b16 %v2294, %v2290
        %v2879 = vpack.c.b16 %v2295, %v2291
        %v2880 = vpack.c.b16 %v2296, %v2292
        %v2881 = vpack.c.b16 %v2301, %v2297
        %v2882 = vpack.c.b16 %v2302, %v2298
        %v2883 = vpack.c.b16 %v2303, %v2299
        %v2884 = vpack.c.b16 %v2304, %v2300
        %v2885 = vpack.c.b16 %v2309, %v2305
        %v2886 = vpack.c.b16 %v2310, %v2306
        %v2887 = vpack.c.b16 %v2311, %v2307
        %v2888 = vpack.c.b16 %v2312, %v2308
        %v2889 = vpack.c.b16 %v2317, %v2313
        %v2890 = vpack.c.b16 %v2318, %v2314
        %v2891 = vpack.c.b16 %v2319, %v2315
        %v2892 = vpack.c.b16 %v2320, %v2316
        %v2893 = vpack.c.b16 %v2325, %v2321
        %v2894 = vpack.c.b16 %v2326, %v2322
        %v2895 = vpack.c.b16 %v2327, %v2323
        %v2896 = vpack.c.b16 %v2328, %v2324
        %v2897 = vpack.c.b16 %v2333, %v2329
        %v2898 = vpack.c.b16 %v2334, %v2330
        %v2899 = vpack.c.b16 %v2335, %v2331
        %v2900 = vpack.c.b16 %v2336, %v2332
        %v2901 = vpack.c.b16 %v2341, %v2337
        %v2902 = vpack.c.b16 %v2342, %v2338
        %v2903 = vpack.c.b16 %v2343, %v2339
        %v2904 = vpack.c.b16 %v2344, %v2340
        %v2905 = vpack.c.b16 %v2349, %v2345
        %v2906 = vpack.c.b16 %v2350, %v2346
        %v2907 = vpack.c.b16 %v2351, %v2347
        %v2908 = vpack.c.b16 %v2352, %v2348
        %v2909 = vpack.c.b16 %v2357, %v2353
        %v2910 = vpack.c.b16 %v2358, %v2354
        %v2911 = vpack.c.b16 %v2359, %v2355
        %v2912 = vpack.c.b16 %v2360, %v2356
        %v2913 = vpack.c.b16 %v2365, %v2361
        %v2914 = vpack.c.b16 %v2366, %v2362
        %v2915 = vpack.c.b16 %v2367, %v2363
        %v2916 = vpack.c.b16 %v2368, %v2364
        %v2917 = vpack.c.b16 %v2373, %v2369
        %v2918 = vpack.c.b16 %v2374, %v2370
        %v2919 = vpack.c.b16 %v2375, %v2371
        %v2920 = vpack.c.b16 %v2376, %v2372
        %v2921 = vpack.c.b16 %v2381, %v2377
        %v2922 = vpack.c.b16 %v2382, %v2378
        %v2923 = vpack.c.b16 %v2383, %v2379
        %v2924 = vpack.c.b16 %v2384, %v2380
        %v2925 = vpack.c.b16 %v2389, %v2385
        %v2926 = vpack.c.b16 %v2390, %v2386
        %v2927 = vpack.c.b16 %v2391, %v2387
        %v2928 = vpack.c.b16 %v2392, %v2388
        %v2929 = vpack.c.b16 %v2397, %v2393
        %v2930 = vpack.c.b16 %v2398, %v2394
        %v2931 = vpack.c.b16 %v2399, %v2395
        %v2932 = vpack.c.b16 %v2400, %v2396
        %v2933 = vpack.c.b16 %v2405, %v2401
        %v2934 = vpack.c.b16 %v2406, %v2402
        %v2935 = vpack.c.b16 %v2407, %v2403
        %v2936 = vpack.c.b16 %v2408, %v2404
        %v2937 = vpack.c.b16 %v2413, %v2409
        %v2938 = vpack.c.b16 %v2414, %v2410
        %v2939 = vpack.c.b16 %v2415, %v2411
        %v2940 = vpack.c.b16 %v2416, %v2412
        %v2941 = vpack.c.b16 %v2421, %v2417
        %v2942 = vpack.c.b16 %v2422, %v2418
        %v2943 = vpack.c.b16 %v2423, %v2419
        %v2944 = vpack.c.b16 %v2424, %v2420
        %v2945 = vpack.c.b16 %v2429, %v2425
        %v2946 = vpack.c.b16 %v2430, %v2426
        %v2947 = vpack.c.b16 %v2431, %v2427
        %v2948 = vpack.c.b16 %v2432, %v2428
        %v2949 = vpack.c.b16 %v2437, %v2433
        %v2950 = vpack.c.b16 %v2438, %v2434
        %v2951 = vpack.c.b16 %v2439, %v2435
        %v2952 = vpack.c.b16 %v2440, %v2436
        %3465 = vmatpush.bf16.msra.mxu0 %v2469
        %3466 = vmatpush.bf16.msra.mxu0 %v2465
        %3467 = vmatpush.bf16.msra.mxu0 %v2461
        %3468 = vmatpush.bf16.msra.mxu0 %v2457
        %3469 = vmatpush.bf16.msra.mxu0 %v2453
        %3470 = vmatpush.bf16.msra.mxu0 %v2449
        %3471 = vmatpush.bf16.msra.mxu0 %v2445
        %3472 = vmatpush.bf16.msra.mxu0 %v2441
        %3473 = vmatmul.bf16.gmra.mxu0 %v871
        %v3474 = vpop.f32.mrf.mxu0
        %v3475 = vadd.f32 0.0, %v3474
        %v3476 = vpop.f32.mrf.mxu0
        %3477 = vdwg.mxu0
        %3478 = vmatpush.bf16.msra.mxu0 %v2501
        %3479 = vmatpush.bf16.msra.mxu0 %v2497
        %3480 = vmatpush.bf16.msra.mxu0 %v2493
        %3481 = vmatpush.bf16.msra.mxu0 %v2489
        %3482 = vmatpush.bf16.msra.mxu0 %v2485
        %3483 = vmatpush.bf16.msra.mxu0 %v2481
        %3484 = vmatpush.bf16.msra.mxu0 %v2477
        %3485 = vmatpush.bf16.msra.mxu0 %v2473
        %3486 = vmatmul.bf16.gmra.mxu0 %v872
        %v3487 = vpop.f32.mrf.mxu0
        %v3488 = vadd.f32 %v3475, %v3487
        %v3489 = vpop.f32.mrf.mxu0
        %3490 = vdwg.mxu0
        %3491 = vmatpush.bf16.msra.mxu0 %v2533
        %3492 = vmatpush.bf16.msra.mxu0 %v2529
        %3493 = vmatpush.bf16.msra.mxu0 %v2525
        %3494 = vmatpush.bf16.msra.mxu0 %v2521
        %3495 = vmatpush.bf16.msra.mxu0 %v2517
        %3496 = vmatpush.bf16.msra.mxu0 %v2513
        %3497 = vmatpush.bf16.msra.mxu0 %v2509
        %3498 = vmatpush.bf16.msra.mxu0 %v2505
        %3499 = vmatmul.bf16.gmra.mxu0 %v873
        %v3500 = vpop.f32.mrf.mxu0
        %v3501 = vadd.f32 %v3488, %v3500
        %v3502 = vpop.f32.mrf.mxu0
        %3503 = vdwg.mxu0
        %3504 = vmatpush.bf16.msra.mxu0 %v2565
        %3505 = vmatpush.bf16.msra.mxu0 %v2561
        %3506 = vmatpush.bf16.msra.mxu0 %v2557
        %3507 = vmatpush.bf16.msra.mxu0 %v2553
        %3508 = vmatpush.bf16.msra.mxu0 %v2549
        %3509 = vmatpush.bf16.msra.mxu0 %v2545
        %3510 = vmatpush.bf16.msra.mxu0 %v2541
        %3511 = vmatpush.bf16.msra.mxu0 %v2537
        %3512 = vmatmul.bf16.gmra.mxu0 %v874
        %v3513 = vpop.f32.mrf.mxu0
        %v3514 = vadd.f32 %v3501, %v3513
        %v3515 = vpop.f32.mrf.mxu0
        %3516 = vdwg.mxu0
        %3517 = vmatpush.bf16.msra.mxu0 %v2597
        %3518 = vmatpush.bf16.msra.mxu0 %v2593
        %3519 = vmatpush.bf16.msra.mxu0 %v2589
        %3520 = vmatpush.bf16.msra.mxu0 %v2585
        %3521 = vmatpush.bf16.msra.mxu0 %v2581
        %3522 = vmatpush.bf16.msra.mxu0 %v2577
        %3523 = vmatpush.bf16.msra.mxu0 %v2573
        %3524 = vmatpush.bf16.msra.mxu0 %v2569
        %3525 = vmatmul.bf16.gmra.mxu0 %v875
        %v3526 = vpop.f32.mrf.mxu0
        %v3527 = vadd.f32 %v3514, %v3526
        %v3528 = vpop.f32.mrf.mxu0
        %3529 = vdwg.mxu0
        %3530 = vmatpush.bf16.msra.mxu0 %v2629
        %3531 = vmatpush.bf16.msra.mxu0 %v2625
        %3532 = vmatpush.bf16.msra.mxu0 %v2621
        %3533 = vmatpush.bf16.msra.mxu0 %v2617
        %3534 = vmatpush.bf16.msra.mxu0 %v2613
        %3535 = vmatpush.bf16.msra.mxu0 %v2609
        %3536 = vmatpush.bf16.msra.mxu0 %v2605
        %3537 = vmatpush.bf16.msra.mxu0 %v2601
        %3538 = vmatmul.bf16.gmra.mxu0 %v876
        %v3539 = vpop.f32.mrf.mxu0
        %v3540 = vadd.f32 %v3527, %v3539
        %v3541 = vpop.f32.mrf.mxu0
        %3542 = vdwg.mxu0
        %3543 = vmatpush.bf16.msra.mxu0 %v2661
        %3544 = vmatpush.bf16.msra.mxu0 %v2657
        %3545 = vmatpush.bf16.msra.mxu0 %v2653
        %3546 = vmatpush.bf16.msra.mxu0 %v2649
        %3547 = vmatpush.bf16.msra.mxu0 %v2645
        %3548 = vmatpush.bf16.msra.mxu0 %v2641
        %3549 = vmatpush.bf16.msra.mxu0 %v2637
        %3550 = vmatpush.bf16.msra.mxu0 %v2633
        %3551 = vmatmul.bf16.gmra.mxu0 %v877
        %v3552 = vpop.f32.mrf.mxu0
        %v3553 = vadd.f32 %v3540, %v3552
        %v3554 = vpop.f32.mrf.mxu0
        %3555 = vdwg.mxu0
        %3556 = vmatpush.bf16.msra.mxu0 %v2693
        %3557 = vmatpush.bf16.msra.mxu0 %v2689
        %3558 = vmatpush.bf16.msra.mxu0 %v2685
        %3559 = vmatpush.bf16.msra.mxu0 %v2681
        %3560 = vmatpush.bf16.msra.mxu0 %v2677
        %3561 = vmatpush.bf16.msra.mxu0 %v2673
        %3562 = vmatpush.bf16.msra.mxu0 %v2669
        %3563 = vmatpush.bf16.msra.mxu0 %v2665
        %3564 = vmatmul.bf16.gmra.mxu0 %v878
        %v3565 = vpop.f32.mrf.mxu0
        %v3566 = vadd.f32 %v3553, %v3565
        %v3567 = vpop.f32.mrf.mxu0
        %3568 = vdwg.mxu0
        %3569 = vmatpush.bf16.msra.mxu0 %v2725
        %3570 = vmatpush.bf16.msra.mxu0 %v2721
        %3571 = vmatpush.bf16.msra.mxu0 %v2717
        %3572 = vmatpush.bf16.msra.mxu0 %v2713
        %3573 = vmatpush.bf16.msra.mxu0 %v2709
        %3574 = vmatpush.bf16.msra.mxu0 %v2705
        %3575 = vmatpush.bf16.msra.mxu0 %v2701
        %3576 = vmatpush.bf16.msra.mxu0 %v2697
        %3577 = vmatmul.bf16.gmra.mxu0 %v881
        %v3578 = vpop.f32.mrf.mxu0
        %v3579 = vadd.f32 %v3566, %v3578
        %v3580 = vpop.f32.mrf.mxu0
        %3581 = vdwg.mxu0
        %3582 = vmatpush.bf16.msra.mxu0 %v2757
        %3583 = vmatpush.bf16.msra.mxu0 %v2753
        %3584 = vmatpush.bf16.msra.mxu0 %v2749
        %3585 = vmatpush.bf16.msra.mxu0 %v2745
        %3586 = vmatpush.bf16.msra.mxu0 %v2741
        %3587 = vmatpush.bf16.msra.mxu0 %v2737
        %3588 = vmatpush.bf16.msra.mxu0 %v2733
        %3589 = vmatpush.bf16.msra.mxu0 %v2729
        %3590 = vmatmul.bf16.gmra.mxu0 %v882
        %v3591 = vpop.f32.mrf.mxu0
        %v3592 = vadd.f32 %v3579, %v3591
        %v3593 = vpop.f32.mrf.mxu0
        %3594 = vdwg.mxu0
        %3595 = vmatpush.bf16.msra.mxu0 %v2789
        %3596 = vmatpush.bf16.msra.mxu0 %v2785
        %3597 = vmatpush.bf16.msra.mxu0 %v2781
        %3598 = vmatpush.bf16.msra.mxu0 %v2777
        %3599 = vmatpush.bf16.msra.mxu0 %v2773
        %3600 = vmatpush.bf16.msra.mxu0 %v2769
        %3601 = vmatpush.bf16.msra.mxu0 %v2765
        %3602 = vmatpush.bf16.msra.mxu0 %v2761
        %3603 = vmatmul.bf16.gmra.mxu0 %v883
        %v3604 = vpop.f32.mrf.mxu0
        %v3605 = vadd.f32 %v3592, %v3604
        %v3606 = vpop.f32.mrf.mxu0
        %3607 = vdwg.mxu0
        %3608 = vmatpush.bf16.msra.mxu0 %v2821
        %3609 = vmatpush.bf16.msra.mxu0 %v2817
        %3610 = vmatpush.bf16.msra.mxu0 %v2813
        %3611 = vmatpush.bf16.msra.mxu0 %v2809
        %3612 = vmatpush.bf16.msra.mxu0 %v2805
        %3613 = vmatpush.bf16.msra.mxu0 %v2801
        %3614 = vmatpush.bf16.msra.mxu0 %v2797
        %3615 = vmatpush.bf16.msra.mxu0 %v2793
        %3616 = vmatmul.bf16.gmra.mxu0 %v884
        %v3617 = vpop.f32.mrf.mxu0
        %v3618 = vadd.f32 %v3605, %v3617
        %v3619 = vpop.f32.mrf.mxu0
        %3620 = vdwg.mxu0
        %3621 = vmatpush.bf16.msra.mxu0 %v2853
        %3622 = vmatpush.bf16.msra.mxu0 %v2849
        %3623 = vmatpush.bf16.msra.mxu0 %v2845
        %3624 = vmatpush.bf16.msra.mxu0 %v2841
        %3625 = vmatpush.bf16.msra.mxu0 %v2837
        %3626 = vmatpush.bf16.msra.mxu0 %v2833
        %3627 = vmatpush.bf16.msra.mxu0 %v2829
        %3628 = vmatpush.bf16.msra.mxu0 %v2825
        %3629 = vmatmul.bf16.gmra.mxu0 %v885
        %v3630 = vpop.f32.mrf.mxu0
        %v3631 = vadd.f32 %v3618, %v3630
        %v3632 = vpop.f32.mrf.mxu0
        %3633 = vdwg.mxu0
        %3634 = vmatpush.bf16.msra.mxu0 %v2885
        %3635 = vmatpush.bf16.msra.mxu0 %v2881
        %3636 = vmatpush.bf16.msra.mxu0 %v2877
        %3637 = vmatpush.bf16.msra.mxu0 %v2873
        %3638 = vmatpush.bf16.msra.mxu0 %v2869
        %3639 = vmatpush.bf16.msra.mxu0 %v2865
        %3640 = vmatpush.bf16.msra.mxu0 %v2861
        %3641 = vmatpush.bf16.msra.mxu0 %v2857
        %3642 = vmatmul.bf16.gmra.mxu0 %v886
        %v3643 = vpop.f32.mrf.mxu0
        %v3644 = vadd.f32 %v3631, %v3643
        %v3645 = vpop.f32.mrf.mxu0
        %3646 = vdwg.mxu0
        %3647 = vmatpush.bf16.msra.mxu0 %v2917
        %3648 = vmatpush.bf16.msra.mxu0 %v2913
        %3649 = vmatpush.bf16.msra.mxu0 %v2909
        %3650 = vmatpush.bf16.msra.mxu0 %v2905
        %3651 = vmatpush.bf16.msra.mxu0 %v2901
        %3652 = vmatpush.bf16.msra.mxu0 %v2897
        %3653 = vmatpush.bf16.msra.mxu0 %v2893
        %3654 = vmatpush.bf16.msra.mxu0 %v2889
        %3655 = vmatmul.bf16.gmra.mxu0 %v887
        %v3656 = vpop.f32.mrf.mxu0
        %v3657 = vadd.f32 %v3644, %v3656
        %v3658 = vpop.f32.mrf.mxu0
        %3659 = vdwg.mxu0
        %3660 = vmatpush.bf16.msra.mxu0 %v2949
        %3661 = vmatpush.bf16.msra.mxu0 %v2945
        %3662 = vmatpush.bf16.msra.mxu0 %v2941
        %3663 = vmatpush.bf16.msra.mxu0 %v2937
        %3664 = vmatpush.bf16.msra.mxu0 %v2933
        %3665 = vmatpush.bf16.msra.mxu0 %v2929
        %3666 = vmatpush.bf16.msra.mxu0 %v2925
        %3667 = vmatpush.bf16.msra.mxu0 %v2921
        %3668 = vmatmul.bf16.gmra.mxu0 %v888
        %v3669 = vpop.f32.mrf.mxu0
        %v3670 = vadd.f32 %v3657, %v3669
        %v3671 = vpop.f32.mrf.mxu0
        %3672 = vdwg.mxu0
        %3673 = vmatpush.bf16.msra.mxu0 %v2470
        %3674 = vmatpush.bf16.msra.mxu0 %v2466
        %3675 = vmatpush.bf16.msra.mxu0 %v2462
        %3676 = vmatpush.bf16.msra.mxu0 %v2458
        %3677 = vmatpush.bf16.msra.mxu0 %v2454
        %3678 = vmatpush.bf16.msra.mxu0 %v2450
        %3679 = vmatpush.bf16.msra.mxu0 %v2446
        %3680 = vmatpush.bf16.msra.mxu0 %v2442
        %3681 = vmatmul.bf16.gmra.mxu0 %v871
        %v3682 = vpop.f32.mrf.mxu0
        %v3683 = vadd.f32 0.0, %v3682
        %v3684 = vpop.f32.mrf.mxu0
        %3685 = vdwg.mxu0
        %3686 = vmatpush.bf16.msra.mxu0 %v2502
        %3687 = vmatpush.bf16.msra.mxu0 %v2498
        %3688 = vmatpush.bf16.msra.mxu0 %v2494
        %3689 = vmatpush.bf16.msra.mxu0 %v2490
        %3690 = vmatpush.bf16.msra.mxu0 %v2486
        %3691 = vmatpush.bf16.msra.mxu0 %v2482
        %3692 = vmatpush.bf16.msra.mxu0 %v2478
        %3693 = vmatpush.bf16.msra.mxu0 %v2474
        %3694 = vmatmul.bf16.gmra.mxu0 %v872
        %v3695 = vpop.f32.mrf.mxu0
        %v3696 = vadd.f32 %v3683, %v3695
        %v3697 = vpop.f32.mrf.mxu0
        %3698 = vdwg.mxu0
        %3699 = vmatpush.bf16.msra.mxu0 %v2534
        %3700 = vmatpush.bf16.msra.mxu0 %v2530
        %3701 = vmatpush.bf16.msra.mxu0 %v2526
        %3702 = vmatpush.bf16.msra.mxu0 %v2522
        %3703 = vmatpush.bf16.msra.mxu0 %v2518
        %3704 = vmatpush.bf16.msra.mxu0 %v2514
        %3705 = vmatpush.bf16.msra.mxu0 %v2510
        %3706 = vmatpush.bf16.msra.mxu0 %v2506
        %3707 = vmatmul.bf16.gmra.mxu0 %v873
        %v3708 = vpop.f32.mrf.mxu0
        %v3709 = vadd.f32 %v3696, %v3708
        %v3710 = vpop.f32.mrf.mxu0
        %3711 = vdwg.mxu0
        %3712 = vmatpush.bf16.msra.mxu0 %v2566
        %3713 = vmatpush.bf16.msra.mxu0 %v2562
        %3714 = vmatpush.bf16.msra.mxu0 %v2558
        %3715 = vmatpush.bf16.msra.mxu0 %v2554
        %3716 = vmatpush.bf16.msra.mxu0 %v2550
        %3717 = vmatpush.bf16.msra.mxu0 %v2546
        %3718 = vmatpush.bf16.msra.mxu0 %v2542
        %3719 = vmatpush.bf16.msra.mxu0 %v2538
        %3720 = vmatmul.bf16.gmra.mxu0 %v874
        %v3721 = vpop.f32.mrf.mxu0
        %v3722 = vadd.f32 %v3709, %v3721
        %v3723 = vpop.f32.mrf.mxu0
        %3724 = vdwg.mxu0
        %3725 = vmatpush.bf16.msra.mxu0 %v2598
        %3726 = vmatpush.bf16.msra.mxu0 %v2594
        %3727 = vmatpush.bf16.msra.mxu0 %v2590
        %3728 = vmatpush.bf16.msra.mxu0 %v2586
        %3729 = vmatpush.bf16.msra.mxu0 %v2582
        %3730 = vmatpush.bf16.msra.mxu0 %v2578
        %3731 = vmatpush.bf16.msra.mxu0 %v2574
        %3732 = vmatpush.bf16.msra.mxu0 %v2570
        %3733 = vmatmul.bf16.gmra.mxu0 %v875
        %v3734 = vpop.f32.mrf.mxu0
        %v3735 = vadd.f32 %v3722, %v3734
        %v3736 = vpop.f32.mrf.mxu0
        %3737 = vdwg.mxu0
        %3738 = vmatpush.bf16.msra.mxu0 %v2630
        %3739 = vmatpush.bf16.msra.mxu0 %v2626
        %3740 = vmatpush.bf16.msra.mxu0 %v2622
        %3741 = vmatpush.bf16.msra.mxu0 %v2618
        %3742 = vmatpush.bf16.msra.mxu0 %v2614
        %3743 = vmatpush.bf16.msra.mxu0 %v2610
        %3744 = vmatpush.bf16.msra.mxu0 %v2606
        %3745 = vmatpush.bf16.msra.mxu0 %v2602
        %3746 = vmatmul.bf16.gmra.mxu0 %v876
        %v3747 = vpop.f32.mrf.mxu0
        %v3748 = vadd.f32 %v3735, %v3747
        %v3749 = vpop.f32.mrf.mxu0
        %3750 = vdwg.mxu0
        %3751 = vmatpush.bf16.msra.mxu0 %v2662
        %3752 = vmatpush.bf16.msra.mxu0 %v2658
        %3753 = vmatpush.bf16.msra.mxu0 %v2654
        %3754 = vmatpush.bf16.msra.mxu0 %v2650
        %3755 = vmatpush.bf16.msra.mxu0 %v2646
        %3756 = vmatpush.bf16.msra.mxu0 %v2642
        %3757 = vmatpush.bf16.msra.mxu0 %v2638
        %3758 = vmatpush.bf16.msra.mxu0 %v2634
        %3759 = vmatmul.bf16.gmra.mxu0 %v877
        %v3760 = vpop.f32.mrf.mxu0
        %v3761 = vadd.f32 %v3748, %v3760
        %v3762 = vpop.f32.mrf.mxu0
        %3763 = vdwg.mxu0
        %3764 = vmatpush.bf16.msra.mxu0 %v2694
        %3765 = vmatpush.bf16.msra.mxu0 %v2690
        %3766 = vmatpush.bf16.msra.mxu0 %v2686
        %3767 = vmatpush.bf16.msra.mxu0 %v2682
        %3768 = vmatpush.bf16.msra.mxu0 %v2678
        %3769 = vmatpush.bf16.msra.mxu0 %v2674
        %3770 = vmatpush.bf16.msra.mxu0 %v2670
        %3771 = vmatpush.bf16.msra.mxu0 %v2666
        %3772 = vmatmul.bf16.gmra.mxu0 %v878
        %v3773 = vpop.f32.mrf.mxu0
        %v3774 = vadd.f32 %v3761, %v3773
        %v3775 = vpop.f32.mrf.mxu0
        %3776 = vdwg.mxu0
        %3777 = vmatpush.bf16.msra.mxu0 %v2726
        %3778 = vmatpush.bf16.msra.mxu0 %v2722
        %3779 = vmatpush.bf16.msra.mxu0 %v2718
        %3780 = vmatpush.bf16.msra.mxu0 %v2714
        %3781 = vmatpush.bf16.msra.mxu0 %v2710
        %3782 = vmatpush.bf16.msra.mxu0 %v2706
        %3783 = vmatpush.bf16.msra.mxu0 %v2702
        %3784 = vmatpush.bf16.msra.mxu0 %v2698
        %3785 = vmatmul.bf16.gmra.mxu0 %v881
        %v3786 = vpop.f32.mrf.mxu0
        %v3787 = vadd.f32 %v3774, %v3786
        %v3788 = vpop.f32.mrf.mxu0
        %3789 = vdwg.mxu0
        %3790 = vmatpush.bf16.msra.mxu0 %v2758
        %3791 = vmatpush.bf16.msra.mxu0 %v2754
        %3792 = vmatpush.bf16.msra.mxu0 %v2750
        %3793 = vmatpush.bf16.msra.mxu0 %v2746
        %3794 = vmatpush.bf16.msra.mxu0 %v2742
        %3795 = vmatpush.bf16.msra.mxu0 %v2738
        %3796 = vmatpush.bf16.msra.mxu0 %v2734
        %3797 = vmatpush.bf16.msra.mxu0 %v2730
        %3798 = vmatmul.bf16.gmra.mxu0 %v882
        %v3799 = vpop.f32.mrf.mxu0
        %v3800 = vadd.f32 %v3787, %v3799
        %v3801 = vpop.f32.mrf.mxu0
        %3802 = vdwg.mxu0
        %3803 = vmatpush.bf16.msra.mxu0 %v2790
        %3804 = vmatpush.bf16.msra.mxu0 %v2786
        %3805 = vmatpush.bf16.msra.mxu0 %v2782
        %3806 = vmatpush.bf16.msra.mxu0 %v2778
        %3807 = vmatpush.bf16.msra.mxu0 %v2774
        %3808 = vmatpush.bf16.msra.mxu0 %v2770
        %3809 = vmatpush.bf16.msra.mxu0 %v2766
        %3810 = vmatpush.bf16.msra.mxu0 %v2762
        %3811 = vmatmul.bf16.gmra.mxu0 %v883
        %v3812 = vpop.f32.mrf.mxu0
        %v3813 = vadd.f32 %v3800, %v3812
        %v3814 = vpop.f32.mrf.mxu0
        %3815 = vdwg.mxu0
        %3816 = vmatpush.bf16.msra.mxu0 %v2822
        %3817 = vmatpush.bf16.msra.mxu0 %v2818
        %3818 = vmatpush.bf16.msra.mxu0 %v2814
        %3819 = vmatpush.bf16.msra.mxu0 %v2810
        %3820 = vmatpush.bf16.msra.mxu0 %v2806
        %3821 = vmatpush.bf16.msra.mxu0 %v2802
        %3822 = vmatpush.bf16.msra.mxu0 %v2798
        %3823 = vmatpush.bf16.msra.mxu0 %v2794
        %3824 = vmatmul.bf16.gmra.mxu0 %v884
        %v3825 = vpop.f32.mrf.mxu0
        %v3826 = vadd.f32 %v3813, %v3825
        %v3827 = vpop.f32.mrf.mxu0
        %3828 = vdwg.mxu0
        %3829 = vmatpush.bf16.msra.mxu0 %v2854
        %3830 = vmatpush.bf16.msra.mxu0 %v2850
        %3831 = vmatpush.bf16.msra.mxu0 %v2846
        %3832 = vmatpush.bf16.msra.mxu0 %v2842
        %3833 = vmatpush.bf16.msra.mxu0 %v2838
        %3834 = vmatpush.bf16.msra.mxu0 %v2834
        %3835 = vmatpush.bf16.msra.mxu0 %v2830
        %3836 = vmatpush.bf16.msra.mxu0 %v2826
        %3837 = vmatmul.bf16.gmra.mxu0 %v885
        %v3838 = vpop.f32.mrf.mxu0
        %v3839 = vadd.f32 %v3826, %v3838
        %v3840 = vpop.f32.mrf.mxu0
        %3841 = vdwg.mxu0
        %3842 = vmatpush.bf16.msra.mxu0 %v2886
        %3843 = vmatpush.bf16.msra.mxu0 %v2882
        %3844 = vmatpush.bf16.msra.mxu0 %v2878
        %3845 = vmatpush.bf16.msra.mxu0 %v2874
        %3846 = vmatpush.bf16.msra.mxu0 %v2870
        %3847 = vmatpush.bf16.msra.mxu0 %v2866
        %3848 = vmatpush.bf16.msra.mxu0 %v2862
        %3849 = vmatpush.bf16.msra.mxu0 %v2858
        %3850 = vmatmul.bf16.gmra.mxu0 %v886
        %v3851 = vpop.f32.mrf.mxu0
        %v3852 = vadd.f32 %v3839, %v3851
        %v3853 = vpop.f32.mrf.mxu0
        %3854 = vdwg.mxu0
        %3855 = vmatpush.bf16.msra.mxu0 %v2918
        %3856 = vmatpush.bf16.msra.mxu0 %v2914
        %3857 = vmatpush.bf16.msra.mxu0 %v2910
        %3858 = vmatpush.bf16.msra.mxu0 %v2906
        %3859 = vmatpush.bf16.msra.mxu0 %v2902
        %3860 = vmatpush.bf16.msra.mxu0 %v2898
        %3861 = vmatpush.bf16.msra.mxu0 %v2894
        %3862 = vmatpush.bf16.msra.mxu0 %v2890
        %3863 = vmatmul.bf16.gmra.mxu0 %v887
        %v3864 = vpop.f32.mrf.mxu0
        %v3865 = vadd.f32 %v3852, %v3864
        %v3866 = vpop.f32.mrf.mxu0
        %3867 = vdwg.mxu0
        %3868 = vmatpush.bf16.msra.mxu0 %v2950
        %3869 = vmatpush.bf16.msra.mxu0 %v2946
        %3870 = vmatpush.bf16.msra.mxu0 %v2942
        %3871 = vmatpush.bf16.msra.mxu0 %v2938
        %3872 = vmatpush.bf16.msra.mxu0 %v2934
        %3873 = vmatpush.bf16.msra.mxu0 %v2930
        %3874 = vmatpush.bf16.msra.mxu0 %v2926
        %3875 = vmatpush.bf16.msra.mxu0 %v2922
        %3876 = vmatmul.bf16.gmra.mxu0 %v888
        %v3877 = vpop.f32.mrf.mxu0
        %v3878 = vadd.f32 %v3865, %v3877
        %v3879 = vpop.f32.mrf.mxu0
        %3880 = vdwg.mxu0
        %3881 = vmatpush.bf16.msra.mxu0 %v2471
        %3882 = vmatpush.bf16.msra.mxu0 %v2467
        %3883 = vmatpush.bf16.msra.mxu0 %v2463
        %3884 = vmatpush.bf16.msra.mxu0 %v2459
        %3885 = vmatpush.bf16.msra.mxu0 %v2455
        %3886 = vmatpush.bf16.msra.mxu0 %v2451
        %3887 = vmatpush.bf16.msra.mxu0 %v2447
        %3888 = vmatpush.bf16.msra.mxu0 %v2443
        %3889 = vmatmul.bf16.gmra.mxu0 %v871
        %v3890 = vpop.f32.mrf.mxu0
        %v3891 = vadd.f32 0.0, %v3890
        %v3892 = vpop.f32.mrf.mxu0
        %3893 = vdwg.mxu0
        %3894 = vmatpush.bf16.msra.mxu0 %v2503
        %3895 = vmatpush.bf16.msra.mxu0 %v2499
        %3896 = vmatpush.bf16.msra.mxu0 %v2495
        %3897 = vmatpush.bf16.msra.mxu0 %v2491
        %3898 = vmatpush.bf16.msra.mxu0 %v2487
        %3899 = vmatpush.bf16.msra.mxu0 %v2483
        %3900 = vmatpush.bf16.msra.mxu0 %v2479
        %3901 = vmatpush.bf16.msra.mxu0 %v2475
        %3902 = vmatmul.bf16.gmra.mxu0 %v872
        %v3903 = vpop.f32.mrf.mxu0
        %v3904 = vadd.f32 %v3891, %v3903
        %v3905 = vpop.f32.mrf.mxu0
        %3906 = vdwg.mxu0
        %3907 = vmatpush.bf16.msra.mxu0 %v2535
        %3908 = vmatpush.bf16.msra.mxu0 %v2531
        %3909 = vmatpush.bf16.msra.mxu0 %v2527
        %3910 = vmatpush.bf16.msra.mxu0 %v2523
        %3911 = vmatpush.bf16.msra.mxu0 %v2519
        %3912 = vmatpush.bf16.msra.mxu0 %v2515
        %3913 = vmatpush.bf16.msra.mxu0 %v2511
        %3914 = vmatpush.bf16.msra.mxu0 %v2507
        %3915 = vmatmul.bf16.gmra.mxu0 %v873
        %v3916 = vpop.f32.mrf.mxu0
        %v3917 = vadd.f32 %v3904, %v3916
        %v3918 = vpop.f32.mrf.mxu0
        %3919 = vdwg.mxu0
        %3920 = vmatpush.bf16.msra.mxu0 %v2567
        %3921 = vmatpush.bf16.msra.mxu0 %v2563
        %3922 = vmatpush.bf16.msra.mxu0 %v2559
        %3923 = vmatpush.bf16.msra.mxu0 %v2555
        %3924 = vmatpush.bf16.msra.mxu0 %v2551
        %3925 = vmatpush.bf16.msra.mxu0 %v2547
        %3926 = vmatpush.bf16.msra.mxu0 %v2543
        %3927 = vmatpush.bf16.msra.mxu0 %v2539
        %3928 = vmatmul.bf16.gmra.mxu0 %v874
        %v3929 = vpop.f32.mrf.mxu0
        %v3930 = vadd.f32 %v3917, %v3929
        %v3931 = vpop.f32.mrf.mxu0
        %3932 = vdwg.mxu0
        %3933 = vmatpush.bf16.msra.mxu0 %v2599
        %3934 = vmatpush.bf16.msra.mxu0 %v2595
        %3935 = vmatpush.bf16.msra.mxu0 %v2591
        %3936 = vmatpush.bf16.msra.mxu0 %v2587
        %3937 = vmatpush.bf16.msra.mxu0 %v2583
        %3938 = vmatpush.bf16.msra.mxu0 %v2579
        %3939 = vmatpush.bf16.msra.mxu0 %v2575
        %3940 = vmatpush.bf16.msra.mxu0 %v2571
        %3941 = vmatmul.bf16.gmra.mxu0 %v875
        %v3942 = vpop.f32.mrf.mxu0
        %v3943 = vadd.f32 %v3930, %v3942
        %v3944 = vpop.f32.mrf.mxu0
        %3945 = vdwg.mxu0
        %3946 = vmatpush.bf16.msra.mxu0 %v2631
        %3947 = vmatpush.bf16.msra.mxu0 %v2627
        %3948 = vmatpush.bf16.msra.mxu0 %v2623
        %3949 = vmatpush.bf16.msra.mxu0 %v2619
        %3950 = vmatpush.bf16.msra.mxu0 %v2615
        %3951 = vmatpush.bf16.msra.mxu0 %v2611
        %3952 = vmatpush.bf16.msra.mxu0 %v2607
        %3953 = vmatpush.bf16.msra.mxu0 %v2603
        %3954 = vmatmul.bf16.gmra.mxu0 %v876
        %v3955 = vpop.f32.mrf.mxu0
        %v3956 = vadd.f32 %v3943, %v3955
        %v3957 = vpop.f32.mrf.mxu0
        %3958 = vdwg.mxu0
        %3959 = vmatpush.bf16.msra.mxu0 %v2663
        %3960 = vmatpush.bf16.msra.mxu0 %v2659
        %3961 = vmatpush.bf16.msra.mxu0 %v2655
        %3962 = vmatpush.bf16.msra.mxu0 %v2651
        %3963 = vmatpush.bf16.msra.mxu0 %v2647
        %3964 = vmatpush.bf16.msra.mxu0 %v2643
        %3965 = vmatpush.bf16.msra.mxu0 %v2639
        %3966 = vmatpush.bf16.msra.mxu0 %v2635
        %3967 = vmatmul.bf16.gmra.mxu0 %v877
        %v3968 = vpop.f32.mrf.mxu0
        %v3969 = vadd.f32 %v3956, %v3968
        %v3970 = vpop.f32.mrf.mxu0
        %3971 = vdwg.mxu0
        %3972 = vmatpush.bf16.msra.mxu0 %v2695
        %3973 = vmatpush.bf16.msra.mxu0 %v2691
        %3974 = vmatpush.bf16.msra.mxu0 %v2687
        %3975 = vmatpush.bf16.msra.mxu0 %v2683
        %3976 = vmatpush.bf16.msra.mxu0 %v2679
        %3977 = vmatpush.bf16.msra.mxu0 %v2675
        %3978 = vmatpush.bf16.msra.mxu0 %v2671
        %3979 = vmatpush.bf16.msra.mxu0 %v2667
        %3980 = vmatmul.bf16.gmra.mxu0 %v878
        %v3981 = vpop.f32.mrf.mxu0
        %v3982 = vadd.f32 %v3969, %v3981
        %v3983 = vpop.f32.mrf.mxu0
        %3984 = vdwg.mxu0
        %3985 = vmatpush.bf16.msra.mxu0 %v2727
        %3986 = vmatpush.bf16.msra.mxu0 %v2723
        %3987 = vmatpush.bf16.msra.mxu0 %v2719
        %3988 = vmatpush.bf16.msra.mxu0 %v2715
        %3989 = vmatpush.bf16.msra.mxu0 %v2711
        %3990 = vmatpush.bf16.msra.mxu0 %v2707
        %3991 = vmatpush.bf16.msra.mxu0 %v2703
        %3992 = vmatpush.bf16.msra.mxu0 %v2699
        %3993 = vmatmul.bf16.gmra.mxu0 %v881
        %v3994 = vpop.f32.mrf.mxu0
        %v3995 = vadd.f32 %v3982, %v3994
        %v3996 = vpop.f32.mrf.mxu0
        %3997 = vdwg.mxu0
        %3998 = vmatpush.bf16.msra.mxu0 %v2759
        %3999 = vmatpush.bf16.msra.mxu0 %v2755
        %4000 = vmatpush.bf16.msra.mxu0 %v2751
        %4001 = vmatpush.bf16.msra.mxu0 %v2747
        %4002 = vmatpush.bf16.msra.mxu0 %v2743
        %4003 = vmatpush.bf16.msra.mxu0 %v2739
        %4004 = vmatpush.bf16.msra.mxu0 %v2735
        %4005 = vmatpush.bf16.msra.mxu0 %v2731
        %4006 = vmatmul.bf16.gmra.mxu0 %v882
        %v4007 = vpop.f32.mrf.mxu0
        %v4008 = vadd.f32 %v3995, %v4007
        %v4009 = vpop.f32.mrf.mxu0
        %4010 = vdwg.mxu0
        %4011 = vmatpush.bf16.msra.mxu0 %v2791
        %4012 = vmatpush.bf16.msra.mxu0 %v2787
        %4013 = vmatpush.bf16.msra.mxu0 %v2783
        %4014 = vmatpush.bf16.msra.mxu0 %v2779
        %4015 = vmatpush.bf16.msra.mxu0 %v2775
        %4016 = vmatpush.bf16.msra.mxu0 %v2771
        %4017 = vmatpush.bf16.msra.mxu0 %v2767
        %4018 = vmatpush.bf16.msra.mxu0 %v2763
        %4019 = vmatmul.bf16.gmra.mxu0 %v883
        %v4020 = vpop.f32.mrf.mxu0
        %v4021 = vadd.f32 %v4008, %v4020
        %v4022 = vpop.f32.mrf.mxu0
        %4023 = vdwg.mxu0
        %4024 = vmatpush.bf16.msra.mxu0 %v2823
        %4025 = vmatpush.bf16.msra.mxu0 %v2819
        %4026 = vmatpush.bf16.msra.mxu0 %v2815
        %4027 = vmatpush.bf16.msra.mxu0 %v2811
        %4028 = vmatpush.bf16.msra.mxu0 %v2807
        %4029 = vmatpush.bf16.msra.mxu0 %v2803
        %4030 = vmatpush.bf16.msra.mxu0 %v2799
        %4031 = vmatpush.bf16.msra.mxu0 %v2795
        %4032 = vmatmul.bf16.gmra.mxu0 %v884
        %v4033 = vpop.f32.mrf.mxu0
        %v4034 = vadd.f32 %v4021, %v4033
        %v4035 = vpop.f32.mrf.mxu0
        %4036 = vdwg.mxu0
        %4037 = vmatpush.bf16.msra.mxu0 %v2855
        %4038 = vmatpush.bf16.msra.mxu0 %v2851
        %4039 = vmatpush.bf16.msra.mxu0 %v2847
        %4040 = vmatpush.bf16.msra.mxu0 %v2843
        %4041 = vmatpush.bf16.msra.mxu0 %v2839
        %4042 = vmatpush.bf16.msra.mxu0 %v2835
        %4043 = vmatpush.bf16.msra.mxu0 %v2831
        %4044 = vmatpush.bf16.msra.mxu0 %v2827
        %4045 = vmatmul.bf16.gmra.mxu0 %v885
        %v4046 = vpop.f32.mrf.mxu0
        %v4047 = vadd.f32 %v4034, %v4046
        %v4048 = vpop.f32.mrf.mxu0
        %4049 = vdwg.mxu0
        %4050 = vmatpush.bf16.msra.mxu0 %v2887
        %4051 = vmatpush.bf16.msra.mxu0 %v2883
        %4052 = vmatpush.bf16.msra.mxu0 %v2879
        %4053 = vmatpush.bf16.msra.mxu0 %v2875
        %4054 = vmatpush.bf16.msra.mxu0 %v2871
        %4055 = vmatpush.bf16.msra.mxu0 %v2867
        %4056 = vmatpush.bf16.msra.mxu0 %v2863
        %4057 = vmatpush.bf16.msra.mxu0 %v2859
        %4058 = vmatmul.bf16.gmra.mxu0 %v886
        %v4059 = vpop.f32.mrf.mxu0
        %v4060 = vadd.f32 %v4047, %v4059
        %v4061 = vpop.f32.mrf.mxu0
        %4062 = vdwg.mxu0
        %4063 = vmatpush.bf16.msra.mxu0 %v2919
        %4064 = vmatpush.bf16.msra.mxu0 %v2915
        %4065 = vmatpush.bf16.msra.mxu0 %v2911
        %4066 = vmatpush.bf16.msra.mxu0 %v2907
        %4067 = vmatpush.bf16.msra.mxu0 %v2903
        %4068 = vmatpush.bf16.msra.mxu0 %v2899
        %4069 = vmatpush.bf16.msra.mxu0 %v2895
        %4070 = vmatpush.bf16.msra.mxu0 %v2891
        %4071 = vmatmul.bf16.gmra.mxu0 %v887
        %v4072 = vpop.f32.mrf.mxu0
        %v4073 = vadd.f32 %v4060, %v4072
        %v4074 = vpop.f32.mrf.mxu0
        %4075 = vdwg.mxu0
        %4076 = vmatpush.bf16.msra.mxu0 %v2951
        %4077 = vmatpush.bf16.msra.mxu0 %v2947
        %4078 = vmatpush.bf16.msra.mxu0 %v2943
        %4079 = vmatpush.bf16.msra.mxu0 %v2939
        %4080 = vmatpush.bf16.msra.mxu0 %v2935
        %4081 = vmatpush.bf16.msra.mxu0 %v2931
        %4082 = vmatpush.bf16.msra.mxu0 %v2927
        %4083 = vmatpush.bf16.msra.mxu0 %v2923
        %4084 = vmatmul.bf16.gmra.mxu0 %v888
        %v4085 = vpop.f32.mrf.mxu0
        %v4086 = vadd.f32 %v4073, %v4085
        %v4087 = vpop.f32.mrf.mxu0
        %4088 = vdwg.mxu0
        %4089 = vmatpush.bf16.msra.mxu0 %v2472
        %4090 = vmatpush.bf16.msra.mxu0 %v2468
        %4091 = vmatpush.bf16.msra.mxu0 %v2464
        %4092 = vmatpush.bf16.msra.mxu0 %v2460
        %4093 = vmatpush.bf16.msra.mxu0 %v2456
        %4094 = vmatpush.bf16.msra.mxu0 %v2452
        %4095 = vmatpush.bf16.msra.mxu0 %v2448
        %4096 = vmatpush.bf16.msra.mxu0 %v2444
        %4097 = vmatmul.bf16.gmra.mxu0 %v871
        %v4098 = vpop.f32.mrf.mxu0
        %v4099 = vadd.f32 0.0, %v4098
        %v4100 = vpop.f32.mrf.mxu0
        %4101 = vdwg.mxu0
        %4102 = vmatpush.bf16.msra.mxu0 %v2504
        %4103 = vmatpush.bf16.msra.mxu0 %v2500
        %4104 = vmatpush.bf16.msra.mxu0 %v2496
        %4105 = vmatpush.bf16.msra.mxu0 %v2492
        %4106 = vmatpush.bf16.msra.mxu0 %v2488
        %4107 = vmatpush.bf16.msra.mxu0 %v2484
        %4108 = vmatpush.bf16.msra.mxu0 %v2480
        %4109 = vmatpush.bf16.msra.mxu0 %v2476
        %4110 = vmatmul.bf16.gmra.mxu0 %v872
        %v4111 = vpop.f32.mrf.mxu0
        %v4112 = vadd.f32 %v4099, %v4111
        %v4113 = vpop.f32.mrf.mxu0
        %4114 = vdwg.mxu0
        %4115 = vmatpush.bf16.msra.mxu0 %v2536
        %4116 = vmatpush.bf16.msra.mxu0 %v2532
        %4117 = vmatpush.bf16.msra.mxu0 %v2528
        %4118 = vmatpush.bf16.msra.mxu0 %v2524
        %4119 = vmatpush.bf16.msra.mxu0 %v2520
        %4120 = vmatpush.bf16.msra.mxu0 %v2516
        %4121 = vmatpush.bf16.msra.mxu0 %v2512
        %4122 = vmatpush.bf16.msra.mxu0 %v2508
        %4123 = vmatmul.bf16.gmra.mxu0 %v873
        %v4124 = vpop.f32.mrf.mxu0
        %v4125 = vadd.f32 %v4112, %v4124
        %v4126 = vpop.f32.mrf.mxu0
        %4127 = vdwg.mxu0
        %4128 = vmatpush.bf16.msra.mxu0 %v2568
        %4129 = vmatpush.bf16.msra.mxu0 %v2564
        %4130 = vmatpush.bf16.msra.mxu0 %v2560
        %4131 = vmatpush.bf16.msra.mxu0 %v2556
        %4132 = vmatpush.bf16.msra.mxu0 %v2552
        %4133 = vmatpush.bf16.msra.mxu0 %v2548
        %4134 = vmatpush.bf16.msra.mxu0 %v2544
        %4135 = vmatpush.bf16.msra.mxu0 %v2540
        %4136 = vmatmul.bf16.gmra.mxu0 %v874
        %v4137 = vpop.f32.mrf.mxu0
        %v4138 = vadd.f32 %v4125, %v4137
        %v4139 = vpop.f32.mrf.mxu0
        %4140 = vdwg.mxu0
        %4141 = vmatpush.bf16.msra.mxu0 %v2600
        %4142 = vmatpush.bf16.msra.mxu0 %v2596
        %4143 = vmatpush.bf16.msra.mxu0 %v2592
        %4144 = vmatpush.bf16.msra.mxu0 %v2588
        %4145 = vmatpush.bf16.msra.mxu0 %v2584
        %4146 = vmatpush.bf16.msra.mxu0 %v2580
        %4147 = vmatpush.bf16.msra.mxu0 %v2576
        %4148 = vmatpush.bf16.msra.mxu0 %v2572
        %4149 = vmatmul.bf16.gmra.mxu0 %v875
        %v4150 = vpop.f32.mrf.mxu0
        %v4151 = vadd.f32 %v4138, %v4150
        %v4152 = vpop.f32.mrf.mxu0
        %4153 = vdwg.mxu0
        %4154 = vmatpush.bf16.msra.mxu0 %v2632
        %4155 = vmatpush.bf16.msra.mxu0 %v2628
        %4156 = vmatpush.bf16.msra.mxu0 %v2624
        %4157 = vmatpush.bf16.msra.mxu0 %v2620
        %4158 = vmatpush.bf16.msra.mxu0 %v2616
        %4159 = vmatpush.bf16.msra.mxu0 %v2612
        %4160 = vmatpush.bf16.msra.mxu0 %v2608
        %4161 = vmatpush.bf16.msra.mxu0 %v2604
        %4162 = vmatmul.bf16.gmra.mxu0 %v876
        %v4163 = vpop.f32.mrf.mxu0
        %v4164 = vadd.f32 %v4151, %v4163
        %v4165 = vpop.f32.mrf.mxu0
        %4166 = vdwg.mxu0
        %4167 = vmatpush.bf16.msra.mxu0 %v2664
        %4168 = vmatpush.bf16.msra.mxu0 %v2660
        %4169 = vmatpush.bf16.msra.mxu0 %v2656
        %4170 = vmatpush.bf16.msra.mxu0 %v2652
        %4171 = vmatpush.bf16.msra.mxu0 %v2648
        %4172 = vmatpush.bf16.msra.mxu0 %v2644
        %4173 = vmatpush.bf16.msra.mxu0 %v2640
        %4174 = vmatpush.bf16.msra.mxu0 %v2636
        %4175 = vmatmul.bf16.gmra.mxu0 %v877
        %v4176 = vpop.f32.mrf.mxu0
        %v4177 = vadd.f32 %v4164, %v4176
        %v4178 = vpop.f32.mrf.mxu0
        %4179 = vdwg.mxu0
        %4180 = vmatpush.bf16.msra.mxu0 %v2696
        %4181 = vmatpush.bf16.msra.mxu0 %v2692
        %4182 = vmatpush.bf16.msra.mxu0 %v2688
        %4183 = vmatpush.bf16.msra.mxu0 %v2684
        %4184 = vmatpush.bf16.msra.mxu0 %v2680
        %4185 = vmatpush.bf16.msra.mxu0 %v2676
        %4186 = vmatpush.bf16.msra.mxu0 %v2672
        %4187 = vmatpush.bf16.msra.mxu0 %v2668
        %4188 = vmatmul.bf16.gmra.mxu0 %v878
        %v4189 = vpop.f32.mrf.mxu0
        %v4190 = vadd.f32 %v4177, %v4189
        %v4191 = vpop.f32.mrf.mxu0
        %4192 = vdwg.mxu0
        %4193 = vmatpush.bf16.msra.mxu0 %v2728
        %4194 = vmatpush.bf16.msra.mxu0 %v2724
        %4195 = vmatpush.bf16.msra.mxu0 %v2720
        %4196 = vmatpush.bf16.msra.mxu0 %v2716
        %4197 = vmatpush.bf16.msra.mxu0 %v2712
        %4198 = vmatpush.bf16.msra.mxu0 %v2708
        %4199 = vmatpush.bf16.msra.mxu0 %v2704
        %4200 = vmatpush.bf16.msra.mxu0 %v2700
        %4201 = vmatmul.bf16.gmra.mxu0 %v881
        %v4202 = vpop.f32.mrf.mxu0
        %v4203 = vadd.f32 %v4190, %v4202
        %v4204 = vpop.f32.mrf.mxu0
        %4205 = vdwg.mxu0
        %4206 = vmatpush.bf16.msra.mxu0 %v2760
        %4207 = vmatpush.bf16.msra.mxu0 %v2756
        %4208 = vmatpush.bf16.msra.mxu0 %v2752
        %4209 = vmatpush.bf16.msra.mxu0 %v2748
        %4210 = vmatpush.bf16.msra.mxu0 %v2744
        %4211 = vmatpush.bf16.msra.mxu0 %v2740
        %4212 = vmatpush.bf16.msra.mxu0 %v2736
        %4213 = vmatpush.bf16.msra.mxu0 %v2732
        %4214 = vmatmul.bf16.gmra.mxu0 %v882
        %v4215 = vpop.f32.mrf.mxu0
        %v4216 = vadd.f32 %v4203, %v4215
        %v4217 = vpop.f32.mrf.mxu0
        %4218 = vdwg.mxu0
        %4219 = vmatpush.bf16.msra.mxu0 %v2792
        %4220 = vmatpush.bf16.msra.mxu0 %v2788
        %4221 = vmatpush.bf16.msra.mxu0 %v2784
        %4222 = vmatpush.bf16.msra.mxu0 %v2780
        %4223 = vmatpush.bf16.msra.mxu0 %v2776
        %4224 = vmatpush.bf16.msra.mxu0 %v2772
        %4225 = vmatpush.bf16.msra.mxu0 %v2768
        %4226 = vmatpush.bf16.msra.mxu0 %v2764
        %4227 = vmatmul.bf16.gmra.mxu0 %v883
        %v4228 = vpop.f32.mrf.mxu0
        %v4229 = vadd.f32 %v4216, %v4228
        %v4230 = vpop.f32.mrf.mxu0
        %4231 = vdwg.mxu0
        %4232 = vmatpush.bf16.msra.mxu0 %v2824
        %4233 = vmatpush.bf16.msra.mxu0 %v2820
        %4234 = vmatpush.bf16.msra.mxu0 %v2816
        %4235 = vmatpush.bf16.msra.mxu0 %v2812
        %4236 = vmatpush.bf16.msra.mxu0 %v2808
        %4237 = vmatpush.bf16.msra.mxu0 %v2804
        %4238 = vmatpush.bf16.msra.mxu0 %v2800
        %4239 = vmatpush.bf16.msra.mxu0 %v2796
        %4240 = vmatmul.bf16.gmra.mxu0 %v884
        %v4241 = vpop.f32.mrf.mxu0
        %v4242 = vadd.f32 %v4229, %v4241
        %v4243 = vpop.f32.mrf.mxu0
        %4244 = vdwg.mxu0
        %4245 = vmatpush.bf16.msra.mxu0 %v2856
        %4246 = vmatpush.bf16.msra.mxu0 %v2852
        %4247 = vmatpush.bf16.msra.mxu0 %v2848
        %4248 = vmatpush.bf16.msra.mxu0 %v2844
        %4249 = vmatpush.bf16.msra.mxu0 %v2840
        %4250 = vmatpush.bf16.msra.mxu0 %v2836
        %4251 = vmatpush.bf16.msra.mxu0 %v2832
        %4252 = vmatpush.bf16.msra.mxu0 %v2828
        %4253 = vmatmul.bf16.gmra.mxu0 %v885
        %v4254 = vpop.f32.mrf.mxu0
        %v4255 = vadd.f32 %v4242, %v4254
        %v4256 = vpop.f32.mrf.mxu0
        %4257 = vdwg.mxu0
        %4258 = vmatpush.bf16.msra.mxu0 %v2888
        %4259 = vmatpush.bf16.msra.mxu0 %v2884
        %4260 = vmatpush.bf16.msra.mxu0 %v2880
        %4261 = vmatpush.bf16.msra.mxu0 %v2876
        %4262 = vmatpush.bf16.msra.mxu0 %v2872
        %4263 = vmatpush.bf16.msra.mxu0 %v2868
        %4264 = vmatpush.bf16.msra.mxu0 %v2864
        %4265 = vmatpush.bf16.msra.mxu0 %v2860
        %4266 = vmatmul.bf16.gmra.mxu0 %v886
        %v4267 = vpop.f32.mrf.mxu0
        %v4268 = vadd.f32 %v4255, %v4267
        %v4269 = vpop.f32.mrf.mxu0
        %4270 = vdwg.mxu0
        %4271 = vmatpush.bf16.msra.mxu0 %v2920
        %4272 = vmatpush.bf16.msra.mxu0 %v2916
        %4273 = vmatpush.bf16.msra.mxu0 %v2912
        %4274 = vmatpush.bf16.msra.mxu0 %v2908
        %4275 = vmatpush.bf16.msra.mxu0 %v2904
        %4276 = vmatpush.bf16.msra.mxu0 %v2900
        %4277 = vmatpush.bf16.msra.mxu0 %v2896
        %4278 = vmatpush.bf16.msra.mxu0 %v2892
        %4279 = vmatmul.bf16.gmra.mxu0 %v887
        %v4280 = vpop.f32.mrf.mxu0
        %v4281 = vadd.f32 %v4268, %v4280
        %v4282 = vpop.f32.mrf.mxu0
        %4283 = vdwg.mxu0
        %4284 = vmatpush.bf16.msra.mxu0 %v2952
        %4285 = vmatpush.bf16.msra.mxu0 %v2948
        %4286 = vmatpush.bf16.msra.mxu0 %v2944
        %4287 = vmatpush.bf16.msra.mxu0 %v2940
        %4288 = vmatpush.bf16.msra.mxu0 %v2936
        %4289 = vmatpush.bf16.msra.mxu0 %v2932
        %4290 = vmatpush.bf16.msra.mxu0 %v2928
        %4291 = vmatpush.bf16.msra.mxu0 %v2924
        %4292 = vmatmul.bf16.gmra.mxu0 %v888
        %v4293 = vpop.f32.mrf.mxu0
        %v4294 = vadd.f32 %v4281, %v4293
        %v4295 = vpop.f32.mrf.mxu0
        %4296 = vdwg.mxu0
        %vm4297 = vcmask 1041408
        %v4298 = vsel %vm4297, %v3670, 0.0
        %v4299 = vrot.slane %v4298, 4
        %v4300 = vadd.f32 %v4298, %v4299
        %v4301 = vrot.slane %v4300, 2
        %v4302 = vadd.f32 %v4300, %v4301
        %v4303 = vrot.slane %v4302, 1
        %v4304 = vadd.f32 %v4302, %v4303
        %v4305 = vsel %vm4297, %v3878, 0.0
        %v4306 = vrot.slane %v4305, 4
        %v4307 = vadd.f32 %v4305, %v4306
        %v4308 = vrot.slane %v4307, 2
        %v4309 = vadd.f32 %v4307, %v4308
        %v4310 = vrot.slane %v4309, 1
        %v4311 = vadd.f32 %v4309, %v4310
        %v4312 = vsel %vm4297, %v4086, 0.0
        %v4313 = vrot.slane %v4312, 4
        %v4314 = vadd.f32 %v4312, %v4313
        %v4315 = vrot.slane %v4314, 2
        %v4316 = vadd.f32 %v4314, %v4315
        %v4317 = vrot.slane %v4316, 1
        %v4318 = vadd.f32 %v4316, %v4317
        %v4319 = vsel %vm4297, %v4294, 0.0
        %v4320 = vrot.slane %v4319, 4
        %v4321 = vadd.f32 %v4319, %v4320
        %v4322 = vrot.slane %v4321, 2
        %v4323 = vadd.f32 %v4321, %v4322
        %v4324 = vrot.slane %v4323, 1
        %v4325 = vadd.f32 %v4323, %v4324
        %v4326 = vmul.f32 %v4304, 0.5
        %v4327 = vmul.f32 %v4311, 0.5
        %v4328 = vmul.f32 %v4318, 0.5
        %v4329 = vmul.f32 %v4325, 0.5
        %v4330 = vmul.f32 %v3670, %v3670
        %v4331 = vmul.f32 %v3878, %v3878
        %v4332 = vmul.f32 %v4086, %v4086
        %v4333 = vmul.f32 %v4294, %v4294
        %v4334 = vsel %vm4297, %v4330, 0.0
        %v4335 = vrot.slane %v4334, 4
        %v4336 = vadd.f32 %v4334, %v4335
        %v4337 = vrot.slane %v4336, 2
        %v4338 = vadd.f32 %v4336, %v4337
        %v4339 = vrot.slane %v4338, 1
        %v4340 = vadd.f32 %v4338, %v4339
        %v4341 = vsel %vm4297, %v4331, 0.0
        %v4342 = vrot.slane %v4341, 4
        %v4343 = vadd.f32 %v4341, %v4342
        %v4344 = vrot.slane %v4343, 2
        %v4345 = vadd.f32 %v4343, %v4344
        %v4346 = vrot.slane %v4345, 1
        %v4347 = vadd.f32 %v4345, %v4346
        %v4348 = vsel %vm4297, %v4332, 0.0
        %v4349 = vrot.slane %v4348, 4
        %v4350 = vadd.f32 %v4348, %v4349
        %v4351 = vrot.slane %v4350, 2
        %v4352 = vadd.f32 %v4350, %v4351
        %v4353 = vrot.slane %v4352, 1
        %v4354 = vadd.f32 %v4352, %v4353
        %v4355 = vsel %vm4297, %v4333, 0.0
        %v4356 = vrot.slane %v4355, 4
        %v4357 = vadd.f32 %v4355, %v4356
        %v4358 = vrot.slane %v4357, 2
        %v4359 = vadd.f32 %v4357, %v4358
        %v4360 = vrot.slane %v4359, 1
        %v4361 = vadd.f32 %v4359, %v4360
        %v4362 = vmul.f32 %v4340, 0.5
        %v4363 = vmul.f32 %v4347, 0.5
        %v4364 = vmul.f32 %v4354, 0.5
        %v4365 = vmul.f32 %v4361, 0.5
        %v4366 = vmul.f32 %v4326, %v4326
        %v4367 = vmul.f32 %v4327, %v4327
        %v4368 = vmul.f32 %v4328, %v4328
        %v4369 = vmul.f32 %v4329, %v4329
        %v4370 = vsub.f32 %v4362, %v4366
        %v4371 = vsub.f32 %v4363, %v4367
        %v4372 = vsub.f32 %v4364, %v4368
        %v4373 = vsub.f32 %v4365, %v4369
        %v4374 = vmax.f32 %v4370, 0.0
        %v4375 = vmax.f32 %v4371, 0.0
        %v4376 = vmax.f32 %v4372, 0.0
        %v4377 = vmax.f32 %v4373, 0.0
        %s4378 = smul.u32 %s349, 512
        %s4379 = sshra.s32 %s4378, 7
        %s4380 = sand.u32 %s4378, 127
        %s4381 = scalar_lea.vmem [#allocation4], %s4379
        %v4382 = vld [vmem:[%s4381] sm:$0xf]
        %s4383 = scalar_lea.vmem [#allocation6], %s4379
        %v4384 = vld [vmem:[%s4383] sm:$0xf]
        %v4385 = vadd.f32 %v4374, 1e-05
        %v4386 = vadd.f32 %v4375, 1e-05
        %v4387 = vadd.f32 %v4376, 1e-05
        %v4388 = vadd.f32 %v4377, 1e-05
        %v4389 = vrsqrt.pop %v4385
        %v4390 = vmul.f32 %v4389, %v4385
        %v4391 = vmul.f32 %v4390, %v4389
        %v4392 = vmul.f32 0.5, %v4391
        %v4393 = vsub.f32 1.5, %v4392
        %v4394 = vmul.f32 %v4389, %v4393
        %vm4395 = vweird.f32 %v4385
        %vm4396 = vweird.f32 %v4389
        %vm4397 = vmor %vm4395, %vm4396
        %v4398 = vsel %vm4397, %v4389, %v4394
        %v4399 = vrsqrt.pop %v4386
        %v4400 = vmul.f32 %v4399, %v4386
        %v4401 = vmul.f32 %v4400, %v4399
        %v4402 = vmul.f32 0.5, %v4401
        %v4403 = vsub.f32 1.5, %v4402
        %v4404 = vmul.f32 %v4399, %v4403
        %vm4405 = vweird.f32 %v4386
        %vm4406 = vweird.f32 %v4399
        %vm4407 = vmor %vm4405, %vm4406
        %v4408 = vsel %vm4407, %v4399, %v4404
        %v4409 = vrsqrt.pop %v4387
        %v4410 = vmul.f32 %v4409, %v4387
        %v4411 = vmul.f32 %v4410, %v4409
        %v4412 = vmul.f32 0.5, %v4411
        %v4413 = vsub.f32 1.5, %v4412
        %v4414 = vmul.f32 %v4409, %v4413
        %vm4415 = vweird.f32 %v4387
        %vm4416 = vweird.f32 %v4409
        %vm4417 = vmor %vm4415, %vm4416
        %v4418 = vsel %vm4417, %v4409, %v4414
        %v4419 = vrsqrt.pop %v4388
        %v4420 = vmul.f32 %v4419, %v4388
        %v4421 = vmul.f32 %v4420, %v4419
        %v4422 = vmul.f32 0.5, %v4421
        %v4423 = vsub.f32 1.5, %v4422
        %v4424 = vmul.f32 %v4419, %v4423
        %vm4425 = vweird.f32 %v4388
        %vm4426 = vweird.f32 %v4419
        %vm4427 = vmor %vm4425, %vm4426
        %v4428 = vsel %vm4427, %v4419, %v4424
        %v4433 = vrot.slane %v4408, 7
        %v4434 = vrot.slane %v4418, 6
        %v4435 = vrot.slane %v4428, 5
        %vm4436 = vcmask 1040384
        %v4437 = vsel %vm4436, %v4398, %v4433
        %vm4438 = vcmask 1042434
        %v4439 = vsel %vm4438, %v4434, %v4435
        %v4440 = vsel %vm4297, %v4437, %v4439
        %v4442 = vmul.f32 %v4382, %v4440
        %v4444 = vperm.slane %v4442, 0
        %v4445 = vperm.slane %v4442, 1
        %v4446 = vperm.slane %v4442, 2
        %v4447 = vperm.slane %v4442, 3
        %v4452 = vmul.f32 %v4326, %v4444
        %v4453 = vmul.f32 %v4327, %v4445
        %v4454 = vmul.f32 %v4328, %v4446
        %v4455 = vmul.f32 %v4329, %v4447
        %v4460 = vrot.slane %v4453, 7
        %v4461 = vrot.slane %v4454, 6
        %v4462 = vrot.slane %v4455, 5
        %v4463 = vsel %vm4436, %v4452, %v4460
        %v4464 = vsel %vm4438, %v4461, %v4462
        %v4465 = vsel %vm4297, %v4463, %v4464
        %v4467 = vsub.f32 %v4384, %v4465
        %v4468 = vmul.f32 %v3670, %v4444
        %v4469 = vmul.f32 %v3878, %v4445
        %v4470 = vmul.f32 %v4086, %v4446
        %v4471 = vmul.f32 %v4294, %v4447
        %v4473 = vperm.slane %v4467, 0
        %v4474 = vperm.slane %v4467, 1
        %v4475 = vperm.slane %v4467, 2
        %v4476 = vperm.slane %v4467, 3
        %v4481 = vadd.f32 %v4468, %v4473
        %v4482 = vadd.f32 %v4469, %v4474
        %v4483 = vadd.f32 %v4470, %v4475
        %v4484 = vadd.f32 %v4471, %v4476
        %v4485 = vmax.f32 %v4481, 0.0
        %v4486 = vmax.f32 %v4482, 0.0
        %v4487 = vmax.f32 %v4483, 0.0
        %v4488 = vmax.f32 %v4484, 0.0
        %v4489 = vld [vmem:[%s347] sm:$0xf]
        %v4490 = vpack.c.bf16 %v4485, %v4485
        %v4491 = vpack.c.bf16 %v4486, %v4486
        %v4492 = vpack.c.bf16 %v4487, %v4487
        %v4493 = vpack.c.bf16 %v4488, %v4488
        %v4494 = vld [vmem:[%s305] sm:$0xff]
        %v4495 = vld [vmem:[%s305 + $0x8] sm:$0xff]
        %v4496 = vld [vmem:[%s305 + $0x10] sm:$0xff]
        %v4497 = vld [vmem:[%s305 + $0x18] sm:$0xff]
        %v4498 = vld [vmem:[%s305 + $0x20] sm:$0xff]
        %v4499 = vld [vmem:[%s305 + $0x28] sm:$0xff]
        %v4500 = vld [vmem:[%s305 + $0x30] sm:$0xff]
        %v4501 = vld [vmem:[%s305 + $0x38] sm:$0xff]
        %v4502 = vld [vmem:[%s305 + $0x40] sm:$0xff]
        %v4503 = vld [vmem:[%s305 + $0x48] sm:$0xff]
        %v4504 = vld [vmem:[%s305 + $0x50] sm:$0xff]
        %v4505 = vld [vmem:[%s305 + $0x58] sm:$0xff]
        %v4506 = vld [vmem:[%s305 + $0x60] sm:$0xff]
        %v4507 = vld [vmem:[%s305 + $0x68] sm:$0xff]
        %v4508 = vld [vmem:[%s305 + $0x70] sm:$0xff]
        %v4509 = vld [vmem:[%s305 + $0x78] sm:$0xff]
        %v4510 = vld [vmem:[%s305 + $0x80] sm:$0xff]
        %v4511 = vld [vmem:[%s305 + $0x88] sm:$0xff]
        %v4512 = vld [vmem:[%s305 + $0x90] sm:$0xff]
        %v4513 = vld [vmem:[%s305 + $0x98] sm:$0xff]
        %v4514 = vld [vmem:[%s305 + $0xa0] sm:$0xff]
        %v4515 = vld [vmem:[%s305 + $0xa8] sm:$0xff]
        %v4516 = vld [vmem:[%s305 + $0xb0] sm:$0xff]
        %v4517 = vld [vmem:[%s305 + $0xb8] sm:$0xff]
        %v4518 = vld [vmem:[%s305 + $0xc0] sm:$0xff]
        %v4519 = vld [vmem:[%s305 + $0xc8] sm:$0xff]
        %v4520 = vld [vmem:[%s305 + $0xd0] sm:$0xff]
        %v4521 = vld [vmem:[%s305 + $0xd8] sm:$0xff]
        %v4522 = vld [vmem:[%s305 + $0xe0] sm:$0xff]
        %v4523 = vld [vmem:[%s305 + $0xe8] sm:$0xff]
        %v4524 = vld [vmem:[%s305 + $0xf0] sm:$0xff]
        %v4525 = vld [vmem:[%s305 + $0xf8] sm:$0xff]
        %v4526 = vld [vmem:[%s305 + $0x100] sm:$0xff]
        %v4527 = vld [vmem:[%s305 + $0x108] sm:$0xff]
        %v4528 = vld [vmem:[%s305 + $0x110] sm:$0xff]
        %v4529 = vld [vmem:[%s305 + $0x118] sm:$0xff]
        %v4530 = vld [vmem:[%s305 + $0x120] sm:$0xff]
        %v4531 = vld [vmem:[%s305 + $0x128] sm:$0xff]
        %v4532 = vld [vmem:[%s305 + $0x130] sm:$0xff]
        %v4533 = vld [vmem:[%s305 + $0x138] sm:$0xff]
        %v4534 = vld [vmem:[%s305 + $0x140] sm:$0xff]
        %v4535 = vld [vmem:[%s305 + $0x148] sm:$0xff]
        %v4536 = vld [vmem:[%s305 + $0x150] sm:$0xff]
        %v4537 = vld [vmem:[%s305 + $0x158] sm:$0xff]
        %v4538 = vld [vmem:[%s305 + $0x160] sm:$0xff]
        %v4539 = vld [vmem:[%s305 + $0x168] sm:$0xff]
        %v4540 = vld [vmem:[%s305 + $0x170] sm:$0xff]
        %v4541 = vld [vmem:[%s305 + $0x178] sm:$0xff]
        %v4542 = vld [vmem:[%s305 + $0x180] sm:$0xff]
        %v4543 = vld [vmem:[%s305 + $0x188] sm:$0xff]
        %v4544 = vld [vmem:[%s305 + $0x190] sm:$0xff]
        %v4545 = vld [vmem:[%s305 + $0x198] sm:$0xff]
        %v4546 = vld [vmem:[%s305 + $0x1a0] sm:$0xff]
        %v4547 = vld [vmem:[%s305 + $0x1a8] sm:$0xff]
        %v4548 = vld [vmem:[%s305 + $0x1b0] sm:$0xff]
        %v4549 = vld [vmem:[%s305 + $0x1b8] sm:$0xff]
        %v4550 = vld [vmem:[%s305 + $0x1c0] sm:$0xff]
        %v4551 = vld [vmem:[%s305 + $0x1c8] sm:$0xff]
        %v4552 = vld [vmem:[%s305 + $0x1d0] sm:$0xff]
        %v4553 = vld [vmem:[%s305 + $0x1d8] sm:$0xff]
        %v4554 = vld [vmem:[%s305 + $0x1e0] sm:$0xff]
        %v4555 = vld [vmem:[%s305 + $0x1e8] sm:$0xff]
        %v4556 = vld [vmem:[%s305 + $0x1f0] sm:$0xff]
        %v4557 = vld [vmem:[%s305 + $0x1f8] sm:$0xff]
        %v4622 = vunpack.c.l.b16 %v4494
        %v4623 = vunpack.c.h.b16 %v4494
        %v4624 = vunpack.c.l.b16 %v4495
        %v4625 = vunpack.c.h.b16 %v4495
        %v4626 = vunpack.c.l.b16 %v4496
        %v4627 = vunpack.c.h.b16 %v4496
        %v4628 = vunpack.c.l.b16 %v4497
        %v4629 = vunpack.c.h.b16 %v4497
        %v4630 = vunpack.c.l.b16 %v4498
        %v4631 = vunpack.c.h.b16 %v4498
        %v4632 = vunpack.c.l.b16 %v4499
        %v4633 = vunpack.c.h.b16 %v4499
        %v4634 = vunpack.c.l.b16 %v4500
        %v4635 = vunpack.c.h.b16 %v4500
        %v4636 = vunpack.c.l.b16 %v4501
        %v4637 = vunpack.c.h.b16 %v4501
        %v4638 = vunpack.c.l.b16 %v4502
        %v4639 = vunpack.c.h.b16 %v4502
        %v4640 = vunpack.c.l.b16 %v4503
        %v4641 = vunpack.c.h.b16 %v4503
        %v4642 = vunpack.c.l.b16 %v4504
        %v4643 = vunpack.c.h.b16 %v4504
        %v4644 = vunpack.c.l.b16 %v4505
        %v4645 = vunpack.c.h.b16 %v4505
        %v4646 = vunpack.c.l.b16 %v4506
        %v4647 = vunpack.c.h.b16 %v4506
        %v4648 = vunpack.c.l.b16 %v4507
        %v4649 = vunpack.c.h.b16 %v4507
        %v4650 = vunpack.c.l.b16 %v4508
        %v4651 = vunpack.c.h.b16 %v4508
        %v4652 = vunpack.c.l.b16 %v4509
        %v4653 = vunpack.c.h.b16 %v4509
        %v4654 = vunpack.c.l.b16 %v4510
        %v4655 = vunpack.c.h.b16 %v4510
        %v4656 = vunpack.c.l.b16 %v4511
        %v4657 = vunpack.c.h.b16 %v4511
        %v4658 = vunpack.c.l.b16 %v4512
        %v4659 = vunpack.c.h.b16 %v4512
        %v4660 = vunpack.c.l.b16 %v4513
        %v4661 = vunpack.c.h.b16 %v4513
        %v4662 = vunpack.c.l.b16 %v4514
        %v4663 = vunpack.c.h.b16 %v4514
        %v4664 = vunpack.c.l.b16 %v4515
        %v4665 = vunpack.c.h.b16 %v4515
        %v4666 = vunpack.c.l.b16 %v4516
        %v4667 = vunpack.c.h.b16 %v4516
        %v4668 = vunpack.c.l.b16 %v4517
        %v4669 = vunpack.c.h.b16 %v4517
        %v4670 = vunpack.c.l.b16 %v4518
        %v4671 = vunpack.c.h.b16 %v4518
        %v4672 = vunpack.c.l.b16 %v4519
        %v4673 = vunpack.c.h.b16 %v4519
        %v4674 = vunpack.c.l.b16 %v4520
        %v4675 = vunpack.c.h.b16 %v4520
        %v4676 = vunpack.c.l.b16 %v4521
        %v4677 = vunpack.c.h.b16 %v4521
        %v4678 = vunpack.c.l.b16 %v4522
        %v4679 = vunpack.c.h.b16 %v4522
        %v4680 = vunpack.c.l.b16 %v4523
        %v4681 = vunpack.c.h.b16 %v4523
        %v4682 = vunpack.c.l.b16 %v4524
        %v4683 = vunpack.c.h.b16 %v4524
        %v4684 = vunpack.c.l.b16 %v4525
        %v4685 = vunpack.c.h.b16 %v4525
        %v4686 = vunpack.c.l.b16 %v4526
        %v4687 = vunpack.c.h.b16 %v4526
        %v4688 = vunpack.c.l.b16 %v4527
        %v4689 = vunpack.c.h.b16 %v4527
        %v4690 = vunpack.c.l.b16 %v4528
        %v4691 = vunpack.c.h.b16 %v4528
        %v4692 = vunpack.c.l.b16 %v4529
        %v4693 = vunpack.c.h.b16 %v4529
        %v4694 = vunpack.c.l.b16 %v4530
        %v4695 = vunpack.c.h.b16 %v4530
        %v4696 = vunpack.c.l.b16 %v4531
        %v4697 = vunpack.c.h.b16 %v4531
        %v4698 = vunpack.c.l.b16 %v4532
        %v4699 = vunpack.c.h.b16 %v4532
        %v4700 = vunpack.c.l.b16 %v4533
        %v4701 = vunpack.c.h.b16 %v4533
        %v4702 = vunpack.c.l.b16 %v4534
        %v4703 = vunpack.c.h.b16 %v4534
        %v4704 = vunpack.c.l.b16 %v4535
        %v4705 = vunpack.c.h.b16 %v4535
        %v4706 = vunpack.c.l.b16 %v4536
        %v4707 = vunpack.c.h.b16 %v4536
        %v4708 = vunpack.c.l.b16 %v4537
        %v4709 = vunpack.c.h.b16 %v4537
        %v4710 = vunpack.c.l.b16 %v4538
        %v4711 = vunpack.c.h.b16 %v4538
        %v4712 = vunpack.c.l.b16 %v4539
        %v4713 = vunpack.c.h.b16 %v4539
        %v4714 = vunpack.c.l.b16 %v4540
        %v4715 = vunpack.c.h.b16 %v4540
        %v4716 = vunpack.c.l.b16 %v4541
        %v4717 = vunpack.c.h.b16 %v4541
        %v4718 = vunpack.c.l.b16 %v4542
        %v4719 = vunpack.c.h.b16 %v4542
        %v4720 = vunpack.c.l.b16 %v4543
        %v4721 = vunpack.c.h.b16 %v4543
        %v4722 = vunpack.c.l.b16 %v4544
        %v4723 = vunpack.c.h.b16 %v4544
        %v4724 = vunpack.c.l.b16 %v4545
        %v4725 = vunpack.c.h.b16 %v4545
        %v4726 = vunpack.c.l.b16 %v4546
        %v4727 = vunpack.c.h.b16 %v4546
        %v4728 = vunpack.c.l.b16 %v4547
        %v4729 = vunpack.c.h.b16 %v4547
        %v4730 = vunpack.c.l.b16 %v4548
        %v4731 = vunpack.c.h.b16 %v4548
        %v4732 = vunpack.c.l.b16 %v4549
        %v4733 = vunpack.c.h.b16 %v4549
        %v4734 = vunpack.c.l.b16 %v4550
        %v4735 = vunpack.c.h.b16 %v4550
        %v4736 = vunpack.c.l.b16 %v4551
        %v4737 = vunpack.c.h.b16 %v4551
        %v4738 = vunpack.c.l.b16 %v4552
        %v4739 = vunpack.c.h.b16 %v4552
        %v4740 = vunpack.c.l.b16 %v4553
        %v4741 = vunpack.c.h.b16 %v4553
        %v4742 = vunpack.c.l.b16 %v4554
        %v4743 = vunpack.c.h.b16 %v4554
        %v4744 = vunpack.c.l.b16 %v4555
        %v4745 = vunpack.c.h.b16 %v4555
        %v4746 = vunpack.c.l.b16 %v4556
        %v4747 = vunpack.c.h.b16 %v4556
        %v4748 = vunpack.c.l.b16 %v4557
        %v4749 = vunpack.c.h.b16 %v4557
        %v4750 = vpack.c.b16 %v4624, %v4622
        %v4751 = vpack.c.b16 %v4625, %v4623
        %v4752 = vpack.c.b16 %v4628, %v4626
        %v4753 = vpack.c.b16 %v4629, %v4627
        %v4754 = vpack.c.b16 %v4632, %v4630
        %v4755 = vpack.c.b16 %v4633, %v4631
        %v4756 = vpack.c.b16 %v4636, %v4634
        %v4757 = vpack.c.b16 %v4637, %v4635
        %v4758 = vpack.c.b16 %v4640, %v4638
        %v4759 = vpack.c.b16 %v4641, %v4639
        %v4760 = vpack.c.b16 %v4644, %v4642
        %v4761 = vpack.c.b16 %v4645, %v4643
        %v4762 = vpack.c.b16 %v4648, %v4646
        %v4763 = vpack.c.b16 %v4649, %v4647
        %v4764 = vpack.c.b16 %v4652, %v4650
        %v4765 = vpack.c.b16 %v4653, %v4651
        %v4766 = vpack.c.b16 %v4656, %v4654
        %v4767 = vpack.c.b16 %v4657, %v4655
        %v4768 = vpack.c.b16 %v4660, %v4658
        %v4769 = vpack.c.b16 %v4661, %v4659
        %v4770 = vpack.c.b16 %v4664, %v4662
        %v4771 = vpack.c.b16 %v4665, %v4663
        %v4772 = vpack.c.b16 %v4668, %v4666
        %v4773 = vpack.c.b16 %v4669, %v4667
        %v4774 = vpack.c.b16 %v4672, %v4670
        %v4775 = vpack.c.b16 %v4673, %v4671
        %v4776 = vpack.c.b16 %v4676, %v4674
        %v4777 = vpack.c.b16 %v4677, %v4675
        %v4778 = vpack.c.b16 %v4680, %v4678
        %v4779 = vpack.c.b16 %v4681, %v4679
        %v4780 = vpack.c.b16 %v4684, %v4682
        %v4781 = vpack.c.b16 %v4685, %v4683
        %v4782 = vpack.c.b16 %v4688, %v4686
        %v4783 = vpack.c.b16 %v4689, %v4687
        %v4784 = vpack.c.b16 %v4692, %v4690
        %v4785 = vpack.c.b16 %v4693, %v4691
        %v4786 = vpack.c.b16 %v4696, %v4694
        %v4787 = vpack.c.b16 %v4697, %v4695
        %v4788 = vpack.c.b16 %v4700, %v4698
        %v4789 = vpack.c.b16 %v4701, %v4699
        %v4790 = vpack.c.b16 %v4704, %v4702
        %v4791 = vpack.c.b16 %v4705, %v4703
        %v4792 = vpack.c.b16 %v4708, %v4706
        %v4793 = vpack.c.b16 %v4709, %v4707
        %v4794 = vpack.c.b16 %v4712, %v4710
        %v4795 = vpack.c.b16 %v4713, %v4711
        %v4796 = vpack.c.b16 %v4716, %v4714
        %v4797 = vpack.c.b16 %v4717, %v4715
        %v4798 = vpack.c.b16 %v4720, %v4718
        %v4799 = vpack.c.b16 %v4721, %v4719
        %v4800 = vpack.c.b16 %v4724, %v4722
        %v4801 = vpack.c.b16 %v4725, %v4723
        %v4802 = vpack.c.b16 %v4728, %v4726
        %v4803 = vpack.c.b16 %v4729, %v4727
        %v4804 = vpack.c.b16 %v4732, %v4730
        %v4805 = vpack.c.b16 %v4733, %v4731
        %v4806 = vpack.c.b16 %v4736, %v4734
        %v4807 = vpack.c.b16 %v4737, %v4735
        %v4808 = vpack.c.b16 %v4740, %v4738
        %v4809 = vpack.c.b16 %v4741, %v4739
        %v4810 = vpack.c.b16 %v4744, %v4742
        %v4811 = vpack.c.b16 %v4745, %v4743
        %v4812 = vpack.c.b16 %v4748, %v4746
        %v4813 = vpack.c.b16 %v4749, %v4747
        %4878 = vmatpush.bf16.msra.mxu0 %v4764
        %4879 = vmatpush.bf16.msra.mxu0 %v4762
        %4880 = vmatpush.bf16.msra.mxu0 %v4760
        %4881 = vmatpush.bf16.msra.mxu0 %v4758
        %4882 = vmatpush.bf16.msra.mxu0 %v4756
        %4883 = vmatpush.bf16.msra.mxu0 %v4754
        %4884 = vmatpush.bf16.msra.mxu0 %v4752
        %4885 = vmatpush.bf16.msra.mxu0 %v4750
        %4886 = vmatmul.bf16.gmra.mxu0 %v4490
        %v4887 = vpop.f32.mrf.mxu0
        %v4888 = vadd.f32 0.0, %v4887
        %v4889 = vpop.f32.mrf.mxu0
        %4890 = vdwg.mxu0
        %4891 = vmatpush.bf16.msra.mxu0 %v4780
        %4892 = vmatpush.bf16.msra.mxu0 %v4778
        %4893 = vmatpush.bf16.msra.mxu0 %v4776
        %4894 = vmatpush.bf16.msra.mxu0 %v4774
        %4895 = vmatpush.bf16.msra.mxu0 %v4772
        %4896 = vmatpush.bf16.msra.mxu0 %v4770
        %4897 = vmatpush.bf16.msra.mxu0 %v4768
        %4898 = vmatpush.bf16.msra.mxu0 %v4766
        %4899 = vmatmul.bf16.gmra.mxu0 %v4491
        %v4900 = vpop.f32.mrf.mxu0
        %v4901 = vadd.f32 %v4888, %v4900
        %v4902 = vpop.f32.mrf.mxu0
        %4903 = vdwg.mxu0
        %4904 = vmatpush.bf16.msra.mxu0 %v4796
        %4905 = vmatpush.bf16.msra.mxu0 %v4794
        %4906 = vmatpush.bf16.msra.mxu0 %v4792
        %4907 = vmatpush.bf16.msra.mxu0 %v4790
        %4908 = vmatpush.bf16.msra.mxu0 %v4788
        %4909 = vmatpush.bf16.msra.mxu0 %v4786
        %4910 = vmatpush.bf16.msra.mxu0 %v4784
        %4911 = vmatpush.bf16.msra.mxu0 %v4782
        %4912 = vmatmul.bf16.gmra.mxu0 %v4492
        %v4913 = vpop.f32.mrf.mxu0
        %v4914 = vadd.f32 %v4901, %v4913
        %v4915 = vpop.f32.mrf.mxu0
        %4916 = vdwg.mxu0
        %4917 = vmatpush.bf16.msra.mxu0 %v4812
        %4918 = vmatpush.bf16.msra.mxu0 %v4810
        %4919 = vmatpush.bf16.msra.mxu0 %v4808
        %4920 = vmatpush.bf16.msra.mxu0 %v4806
        %4921 = vmatpush.bf16.msra.mxu0 %v4804
        %4922 = vmatpush.bf16.msra.mxu0 %v4802
        %4923 = vmatpush.bf16.msra.mxu0 %v4800
        %4924 = vmatpush.bf16.msra.mxu0 %v4798
        %4925 = vmatmul.bf16.gmra.mxu0 %v4493
        %v4926 = vpop.f32.mrf.mxu0
        %v4927 = vadd.f32 %v4914, %v4926
        %v4928 = vpop.f32.mrf.mxu0
        %4929 = vdwg.mxu0
        %4930 = vmatpush.bf16.msra.mxu0 %v4765
        %4931 = vmatpush.bf16.msra.mxu0 %v4763
        %4932 = vmatpush.bf16.msra.mxu0 %v4761
        %4933 = vmatpush.bf16.msra.mxu0 %v4759
        %4934 = vmatpush.bf16.msra.mxu0 %v4757
        %4935 = vmatpush.bf16.msra.mxu0 %v4755
        %4936 = vmatpush.bf16.msra.mxu0 %v4753
        %4937 = vmatpush.bf16.msra.mxu0 %v4751
        %4938 = vmatmul.bf16.gmra.mxu0 %v4490
        %v4939 = vpop.f32.mrf.mxu0
        %v4940 = vadd.f32 0.0, %v4939
        %v4941 = vpop.f32.mrf.mxu0
        %4942 = vdwg.mxu0
        %4943 = vmatpush.bf16.msra.mxu0 %v4781
        %4944 = vmatpush.bf16.msra.mxu0 %v4779
        %4945 = vmatpush.bf16.msra.mxu0 %v4777
        %4946 = vmatpush.bf16.msra.mxu0 %v4775
        %4947 = vmatpush.bf16.msra.mxu0 %v4773
        %4948 = vmatpush.bf16.msra.mxu0 %v4771
        %4949 = vmatpush.bf16.msra.mxu0 %v4769
        %4950 = vmatpush.bf16.msra.mxu0 %v4767
        %4951 = vmatmul.bf16.gmra.mxu0 %v4491
        %v4952 = vpop.f32.mrf.mxu0
        %v4953 = vadd.f32 %v4940, %v4952
        %v4954 = vpop.f32.mrf.mxu0
        %4955 = vdwg.mxu0
        %4956 = vmatpush.bf16.msra.mxu0 %v4797
        %4957 = vmatpush.bf16.msra.mxu0 %v4795
        %4958 = vmatpush.bf16.msra.mxu0 %v4793
        %4959 = vmatpush.bf16.msra.mxu0 %v4791
        %4960 = vmatpush.bf16.msra.mxu0 %v4789
        %4961 = vmatpush.bf16.msra.mxu0 %v4787
        %4962 = vmatpush.bf16.msra.mxu0 %v4785
        %4963 = vmatpush.bf16.msra.mxu0 %v4783
        %4964 = vmatmul.bf16.gmra.mxu0 %v4492
        %v4965 = vpop.f32.mrf.mxu0
        %v4966 = vadd.f32 %v4953, %v4965
        %v4967 = vpop.f32.mrf.mxu0
        %4968 = vdwg.mxu0
        %4969 = vmatpush.bf16.msra.mxu0 %v4813
        %4970 = vmatpush.bf16.msra.mxu0 %v4811
        %4971 = vmatpush.bf16.msra.mxu0 %v4809
        %4972 = vmatpush.bf16.msra.mxu0 %v4807
        %4973 = vmatpush.bf16.msra.mxu0 %v4805
        %4974 = vmatpush.bf16.msra.mxu0 %v4803
        %4975 = vmatpush.bf16.msra.mxu0 %v4801
        %4976 = vmatpush.bf16.msra.mxu0 %v4799
        %4977 = vmatmul.bf16.gmra.mxu0 %v4493
        %v4978 = vpop.f32.mrf.mxu0
        %v4979 = vadd.f32 %v4966, %v4978
        %v4980 = vpop.f32.mrf.mxu0
        %4981 = vdwg.mxu0
        %v4984 = vrot.slane %v4979, 6
        %v4985 = vsel %vm4297, %v4927, %v4984
        %v4987 = vadd.f32 %v4489, %v4985
        %4988 = vst [vmem:[%s347] sm:$0xf] %v4987
        %p4989 = scmp.lt.s32.totalorder %s27, 0
        %s4990 = scalar_select %p4989, %s27, 0
        %s4991 = smul.addr %s4990, 2
        %s4992 = smul.addr %s4991, 2
        %s4993 = scalar_lea.vmem %s5, %s4992
        // Predicated region
        $region61: #{byol_forward.1} parent=39 // pred_check
          %p4994 = pneg %p176
        $region62: #{byol_forward.1} parent=39 // pred_check_branch
          %4996 = sbr.rel (%p4994) target = $region64
        $region63: #{byol_forward.1} parent=39 // pred_region
          _
        $region64: #{byol_forward.1} parent=39 // pred_fallthru
          _
        // Predicated region
        $region65: #{byol_forward.1} parent=39 // pred_check
          %p4997 = pneg %p176
        $region66: #{byol_forward.1} parent=39 // pred_check_branch
          %4999 = sbr.rel (%p4997) target = $region68
        $region67: #{byol_forward.1} parent=39 // pred_region
          %p5000 = scmp.lt.s32.totalorder %s27, 0
          %s5001 = scalar_select %p5000, %s27, 0
          %s5002 = smul.addr %s5001, 2
          %s5003 = smul.addr %s5002, 2
          %s5004 = scalar_lea.vmem %s5, %s5003
        $region68: #{byol_forward.1} parent=39 // pred_fallthru
          _
      $region40: #{byol_forward.1} parent=5 // pred_fallthru
        _
      %p5005 = scmp.le.s32.totalorder 2, %s18
      // Predicated region
      $region69: #{byol_forward.1} parent=5 // pred_check
        %p5006 = pneg %p5005
      $region70: #{byol_forward.1} parent=5 // pred_check_branch
        %5008 = sbr.rel (%p5006) target = $region72
      $region71: #{byol_forward.1} parent=5 // pred_region
        %s5009 = ssub.s32 %s18, 2
      $region72: #{byol_forward.1} parent=5 // pred_fallthru
        _
    $region6: #{byol_forward.1} parent=1 // loop_footer
      %s22 = sadd.s32 1, %s18
    $region7: #{byol_forward.1} parent=1 // loop_footer_branch
      %17 = sbr.rel target = $region3
    $region8: #{byol_forward.1} parent=1 // loop_exit
      _
    %5010 = vsyncpa [#allocation3], 1
    %s5011 = scalar_lea.sflag [#allocation3], 1
    %5012 = vsyncpa %s5011, 1
    %5013 = vsyncpa [#allocation5], 1
    %5014 = vsyncpa [#allocation8], 1
    %s5015 = scalar_lea.sflag [#allocation8], 1
    %5016 = vsyncpa %s5015, 1

</llo_original>
